<compile_context>
chip_gen: v6e
topology: v6e:2x2x1
jax: 0.10.0
libtpu: 0.0.40
codegen_flags: <defaults>
</compile_context>

<pallas_src>
from functools import partial

import jax
import jax.numpy as jnp
from jax.experimental import pallas as pl
from jax.experimental.pallas import tpu as pltpu


def _reorg_kernel(x_ref, sel_ref, o_ref, *, n_quadrants, precision):
    """x_ref: (Ct, H*W); sel_ref: (s*s, H*W, Ho*Wo); o_ref: (s*s, Ct, Ho*Wo)."""
    for q in range(n_quadrants):  # static, tiny loop (s*s == 4 for stride 2)
        # Each column of sel_ref[q] holds exactly one 1.0, so the matmul is an
        # exact gather (x*1 + zeros).  Accumulate in f32 and cast at the store
        # (a no-op for f32 outputs); writing directly to o_ref[q] avoids any
        # unaligned lane slicing of an intermediate before the store.
        o_ref[q] = jnp.dot(
            x_ref[...],
            sel_ref[q],
            preferred_element_type=jnp.float32,
            precision=precision,
        ).astype(o_ref.dtype)


def _selection_matrices(H, W, stride, dtype):
    """(s*s, H*W, Ho*Wo) 0/1 stack: sel[q, p, ho*Wo+wo] = 1 iff
    p == (ho*s + i)*W + (wo*s + j) with q = i*s + j."""
    s = stride
    Ho, Wo = H // s, W // s
    q = jnp.arange(s * s)[:, None]              # (s*s, 1)
    i, j = q // s, q % s
    r = jnp.arange(Ho * Wo)[None, :]            # (1, HWo)
    ho, wo = r // Wo, r % Wo
    src = (ho * s + i) * W + (wo * s + j)       # (s*s, HWo)
    rows = jnp.arange(H * W)[None, :, None]     # (1, HW, 1)
    return (rows == src[:, None, :]).astype(dtype)


def _live_bytes(ct, HW, HWo, itemsize, sel_bytes):
    # Double-buffered input and output blocks (same size, since s*s*HWo == HW),
    # double-buffered constant sel (auto-pipeline keeps two copies even though
    # its block index never changes), plus the per-quadrant f32 dot accumulator
    # and its cast temp.
    blocks = 4 * ct * HW * itemsize
    acc = ct * HWo * (4 + itemsize)
    return blocks + acc + 2 * sel_bytes


def _pick_channel_tile(B, C, HW, HWo, itemsize, sel_bytes, budget_bytes):
    # Ct sits in the second-minor position of both blocks, so it must be a
    # multiple of the dtype's sublane count (f32: 8, bf16: 16) or equal to C.
    sub = 8 * max(1, 4 // max(1, itemsize))
    cands = [d for d in range(1, C + 1) if C % d == 0 and (d % sub == 0 or d == C)]
    fitting = [d for d in cands
               if _live_bytes(d, HW, HWo, itemsize, sel_bytes) <= budget_bytes]
    if not fitting:
        return None  # caller falls back to the XLA path
    # Prefer enough TOTAL grid steps (batch axis included) to feed the
    # pipeline and, on v7x, both TensorCores; don't force channel splitting
    # when the batch axis already provides the steps.
    pref = fitting
    for min_steps in (4, 2, 1):
        p = [d for d in fitting if B * (C // d) >= min_steps]
        if p:
            pref = p
            break
    # Then prefer MXU-row-filling tiles (256 rows fill the v6e/v7x systolic
    # array, 128 fills v5e's), then the largest tile.
    return max(pref, key=lambda d: (d % 256 == 0, d % 128 == 0, d))


def _vmem_capacity_bytes():
    try:
        return int(pltpu.get_tpu_info().vmem_capacity_bytes)
    except Exception:
        return 64 * 1024 * 1024  # conservative: v7x physical VMEM per core


def _reorg_xla(x, stride):
    """Pure-JAX reference / fallback: exact PyTorch view/transpose chain."""
    B, C, H, W = x.shape
    s = stride
    y = x.reshape(B, C, H // s, s, W // s, s)
    y = jnp.transpose(y, (0, 3, 5, 1, 2, 4))  # (B, i, j, C, H//s, W//s)
    return y.reshape(B, s * s * C, H // s, W // s)


def match_tensor(x, target_hw):
    # TODO(synk): exact darknet match_tensor is not provided in the spec;
    # approximate it as bottom/right crop + zero-pad to the requested spatial
    # size (wrapper-only, outside the kernel).
    B, C, H, W = x.shape
    th, tw = target_hw
    x = x[:, :, : min(H, th), : min(W, tw)]
    pad_h, pad_w = th - x.shape[2], tw - x.shape[3]
    if pad_h > 0 or pad_w > 0:
        x = jnp.pad(x, ((0, 0), (0, 0), (0, pad_h), (0, pad_w)))
    return x


def reorg(x, small_size, stride=2):
    x = match_tensor(x, (2 * small_size[0], 2 * small_size[1]))
    B, C, H, W = x.shape
    s = int(stride)
    assert H % s == 0 and W % s == 0
    Ho, Wo = H // s, W // s
    HW, HWo = H * W, Ho * Wo
    dtype = jnp.dtype(x.dtype)
    itemsize = dtype.itemsize

    # The exact MXU-selection path only covers f32 / bf16 (no integer MXU on
    # v7x); everything else takes the XLA fallback with identical semantics.
    if dtype not in (jnp.dtype(jnp.float32), jnp.dtype(jnp.bfloat16)):
        return _reorg_xla(x, s)

    sel = _selection_matrices(H, W, s, x.dtype)  # constant 0/1 gather matrices
    sel_bytes = sel.size * itemsize

    capacity = _vmem_capacity_bytes()
    usable = max(32 * 1024 * 1024, capacity - 16 * 1024 * 1024)  # compiler headroom
    Ct = _pick_channel_tile(B, C, HW, HWo, itemsize, sel_bytes, usable)
    if Ct is None:
        # sel grows as (H*W)^2; large feature maps do not fit VMEM -> fallback.
        return _reorg_xla(x, s)

    live = _live_bytes(Ct, HW, HWo, itemsize, sel_bytes)
    vmem_limit = int(min(usable, max(32 * 1024 * 1024, live + 8 * 1024 * 1024)))

    # Pin f32 dots to HIGHEST so the selection matmul is bit-exact (default
    # TPU precision routes f32 operands through single-pass bf16).
    precision = (jax.lax.Precision.HIGHEST
                 if dtype == jnp.dtype(jnp.float32) else None)

    x2d = x.reshape(B, C, HW)  # free reshape: merge trailing (H, W) dims

    out4 = pl.pallas_call(
        partial(_reorg_kernel, n_quadrants=s * s, precision=precision),
        out_shape=jax.ShapeDtypeStruct((B, s * s, C, HWo), x.dtype),
        grid=(B, C // Ct),
        in_specs=[
            pl.BlockSpec((None, Ct, HW), lambda b, c: (b, c, 0)),
            # Constant sel stack: block index never changes, so its DMA is not
            # re-issued across grid steps (both pipeline buffers are counted
            # in the VMEM budget above).
            pl.BlockSpec((s * s, HW, HWo), lambda b, c: (0, 0, 0)),
        ],
        out_specs=pl.BlockSpec((None, s * s, Ct, HWo), lambda b, c: (b, 0, c, 0)),
        compiler_params=pltpu.CompilerParams(
            dimension_semantics=("parallel", "parallel"),
            vmem_limit_bytes=vmem_limit,
        ),
        cost_estimate=pl.CostEstimate(
            flops=2 * B * C * HW * (s * s * HWo),
            transcendentals=0,
            bytes_accessed=int(2 * B * C * HW * itemsize + sel_bytes),
        ),
    )(x2d, sel)

    # Free layout reshape back to NCHW: (B, s*s, C, Ho*Wo) -> (B, s*s*C, Ho, Wo).
    return out4.reshape(B, s * s * C, Ho, Wo)


if __name__ == "__main__":
    k1, k2, k3 = jax.random.split(jax.random.PRNGKey(0), 3)

    # Test 1: module-consistent shapes (f32; batch axis provides grid steps).
    B, C, H, W = 2, 4, 16, 16
    small_size = (H // 2, W // 2)  # target spatial size == (H, W): no-op match
    x = jax.random.normal(k1, (B, C, H, W), dtype=jnp.float32)
    out = jax.block_until_ready(reorg(x, small_size, stride=2))
    ref = _reorg_xla(match_tensor(x, (2 * small_size[0], 2 * small_size[1])), 2)
    assert out.shape == (B, 4 * C, H // 2, W // 2), out.shape
    assert bool(jnp.array_equal(out, ref)), "mismatch vs reference (test 1, f32 exact)"

    # Test 2: exercises the channel-tiled grid (multiple channel steps, B == 1).
    B2, C2, H2, W2 = 1, 16, 8, 8
    x2 = jax.random.normal(k2, (B2, C2, H2, W2), dtype=jnp.float32)
    out2 = jax.block_until_ready(reorg(x2, (H2 // 2, W2 // 2), stride=2))
    ref2 = _reorg_xla(x2, 2)
    assert out2.shape == (B2, 4 * C2, H2 // 2, W2 // 2), out2.shape
    assert bool(jnp.array_equal(out2, ref2)), "mismatch vs reference (test 2, f32 exact)"

    # Test 3: bf16 path (f32 accumulate, cast fused into the store; still exact).
    B3, C3, H3, W3 = 1, 32, 16, 16
    x3 = jax.random.normal(k3, (B3, C3, H3, W3), dtype=jnp.float32).astype(jnp.bfloat16)
    out3 = jax.block_until_ready(reorg(x3, (H3 // 2, W3 // 2), stride=2))
    ref3 = _reorg_xla(x3, 2)
    assert out3.shape == (B3, 4 * C3, H3 // 2, W3 // 2), out3.shape
    assert bool(jnp.array_equal(out3, ref3)), "mismatch vs reference (test 3, bf16 exact)"

    print("KERNEL_OK")
</pallas_src>

<mosaic_0001>
module attributes {stable_mosaic.version = 11 : i64} {
  func.func @_reorg_kernel(%arg0: i32, %arg1: i32, %arg2: memref<1x4x256xf32, #tpu.memory_space<vmem>>, %arg3: memref<4x256x64xf32, #tpu.memory_space<vmem>>, %arg4: memref<1x4x4x64xf32, #tpu.memory_space<vmem>>) attributes {dimension_semantics = [#tpu.dimension_semantics<parallel>, #tpu.dimension_semantics<parallel>], iteration_bounds = array<i64: 2, 1>, scalar_prefetch = 0 : i64, scratch_operands = 0 : i64, tpu.core_type = #tpu.core_type<tc>, window_params = [{transform_indices = @transform_0, window_bounds = array<i64: 1, 4, 256>}, {pipeline_mode = #tpu.pipeline_mode<synchronous>, transform_indices = @transform_1, window_bounds = array<i64: 4, 256, 64>}, {transform_indices = @transform_2, window_bounds = array<i64: 1, 4, 4, 64>}]} {
    %c0 = arith.constant 0 : index
    %c0_0 = arith.constant 0 : index
    %c0_1 = arith.constant 0 : index
    %0 = vector.load %arg2[%c0, %c0_0, %c0_1] : memref<1x4x256xf32, #tpu.memory_space<vmem>>, vector<1x4x256xf32>
    %1 = vector.shape_cast %0 : vector<1x4x256xf32> to vector<4x256xf32>
    %c0_2 = arith.constant 0 : index
    %c0_3 = arith.constant 0 : index
    %c0_4 = arith.constant 0 : index
    %2 = vector.load %arg3[%c0_2, %c0_3, %c0_4] : memref<4x256x64xf32, #tpu.memory_space<vmem>>, vector<1x256x64xf32>
    %3 = vector.shape_cast %2 : vector<1x256x64xf32> to vector<256x64xf32>
    %cst = arith.constant dense<0.000000e+00> : vector<4x64xf32>
    %4 = tpu.matmul %1, %3, %cst {dimension_numbers = #tpu.dot_dimension_numbers<[1], [0], [0], [1], [0, 0, 1, 1], [], []>, precision = #tpu.contract_precision<fp32>} : vector<4x256xf32>, vector<256x64xf32>, vector<4x64xf32> -> vector<4x64xf32>
    %c0_5 = arith.constant 0 : index
    %c0_6 = arith.constant 0 : index
    %c0_7 = arith.constant 0 : index
    %c0_8 = arith.constant 0 : index
    %5 = vector.load %arg4[%c0_5, %c0_6, %c0_7, %c0_8] : memref<1x4x4x64xf32, #tpu.memory_space<vmem>>, vector<1x1x4x64xf32>
    %6 = vector.shape_cast %5 : vector<1x1x4x64xf32> to vector<4x64xf32>
    %7 = vector.shape_cast %4 : vector<4x64xf32> to vector<1x1x4x64xf32>
    tpu.vector_store %arg4[%c0_5, %c0_6, %c0_7, %c0_8], %7 {strides = array<i32>} : memref<1x4x4x64xf32, #tpu.memory_space<vmem>>, vector<1x1x4x64xf32>,
    %c0_9 = arith.constant 0 : index
    %c0_10 = arith.constant 0 : index
    %c0_11 = arith.constant 0 : index
    %8 = vector.load %arg2[%c0_9, %c0_10, %c0_11] : memref<1x4x256xf32, #tpu.memory_space<vmem>>, vector<1x4x256xf32>
    %9 = vector.shape_cast %8 : vector<1x4x256xf32> to vector<4x256xf32>
    %c1 = arith.constant 1 : index
    %c0_12 = arith.constant 0 : index
    %c0_13 = arith.constant 0 : index
    %10 = vector.load %arg3[%c1, %c0_12, %c0_13] : memref<4x256x64xf32, #tpu.memory_space<vmem>>, vector<1x256x64xf32>
    %11 = vector.shape_cast %10 : vector<1x256x64xf32> to vector<256x64xf32>
    %cst_14 = arith.constant dense<0.000000e+00> : vector<4x64xf32>
    %12 = tpu.matmul %9, %11, %cst_14 {dimension_numbers = #tpu.dot_dimension_numbers<[1], [0], [0], [1], [0, 0, 1, 1], [], []>, precision = #tpu.contract_precision<fp32>} : vector<4x256xf32>, vector<256x64xf32>, vector<4x64xf32> -> vector<4x64xf32>
    %c0_15 = arith.constant 0 : index
    %c1_16 = arith.constant 1 : index
    %c0_17 = arith.constant 0 : index
    %c0_18 = arith.constant 0 : index
    %13 = vector.load %arg4[%c0_15, %c1_16, %c0_17, %c0_18] : memref<1x4x4x64xf32, #tpu.memory_space<vmem>>, vector<1x1x4x64xf32>
    %14 = vector.shape_cast %13 : vector<1x1x4x64xf32> to vector<4x64xf32>
    %15 = vector.shape_cast %12 : vector<4x64xf32> to vector<1x1x4x64xf32>
    tpu.vector_store %arg4[%c0_15, %c1_16, %c0_17, %c0_18], %15 {strides = array<i32>} : memref<1x4x4x64xf32, #tpu.memory_space<vmem>>, vector<1x1x4x64xf32>,
    %c0_19 = arith.constant 0 : index
    %c0_20 = arith.constant 0 : index
    %c0_21 = arith.constant 0 : index
    %16 = vector.load %arg2[%c0_19, %c0_20, %c0_21] : memref<1x4x256xf32, #tpu.memory_space<vmem>>, vector<1x4x256xf32>
    %17 = vector.shape_cast %16 : vector<1x4x256xf32> to vector<4x256xf32>
    %c2 = arith.constant 2 : index
    %c0_22 = arith.constant 0 : index
    %c0_23 = arith.constant 0 : index
    %18 = vector.load %arg3[%c2, %c0_22, %c0_23] : memref<4x256x64xf32, #tpu.memory_space<vmem>>, vector<1x256x64xf32>
    %19 = vector.shape_cast %18 : vector<1x256x64xf32> to vector<256x64xf32>
    %cst_24 = arith.constant dense<0.000000e+00> : vector<4x64xf32>
    %20 = tpu.matmul %17, %19, %cst_24 {dimension_numbers = #tpu.dot_dimension_numbers<[1], [0], [0], [1], [0, 0, 1, 1], [], []>, precision = #tpu.contract_precision<fp32>} : vector<4x256xf32>, vector<256x64xf32>, vector<4x64xf32> -> vector<4x64xf32>
    %c0_25 = arith.constant 0 : index
    %c2_26 = arith.constant 2 : index
    %c0_27 = arith.constant 0 : index
    %c0_28 = arith.constant 0 : index
    %21 = vector.load %arg4[%c0_25, %c2_26, %c0_27, %c0_28] : memref<1x4x4x64xf32, #tpu.memory_space<vmem>>, vector<1x1x4x64xf32>
    %22 = vector.shape_cast %21 : vector<1x1x4x64xf32> to vector<4x64xf32>
    %23 = vector.shape_cast %20 : vector<4x64xf32> to vector<1x1x4x64xf32>
    tpu.vector_store %arg4[%c0_25, %c2_26, %c0_27, %c0_28], %23 {strides = array<i32>} : memref<1x4x4x64xf32, #tpu.memory_space<vmem>>, vector<1x1x4x64xf32>,
    %c0_29 = arith.constant 0 : index
    %c0_30 = arith.constant 0 : index
    %c0_31 = arith.constant 0 : index
    %24 = vector.load %arg2[%c0_29, %c0_30, %c0_31] : memref<1x4x256xf32, #tpu.memory_space<vmem>>, vector<1x4x256xf32>
    %25 = vector.shape_cast %24 : vector<1x4x256xf32> to vector<4x256xf32>
    %c3 = arith.constant 3 : index
    %c0_32 = arith.constant 0 : index
    %c0_33 = arith.constant 0 : index
    %26 = vector.load %arg3[%c3, %c0_32, %c0_33] : memref<4x256x64xf32, #tpu.memory_space<vmem>>, vector<1x256x64xf32>
    %27 = vector.shape_cast %26 : vector<1x256x64xf32> to vector<256x64xf32>
    %cst_34 = arith.constant dense<0.000000e+00> : vector<4x64xf32>
    %28 = tpu.matmul %25, %27, %cst_34 {dimension_numbers = #tpu.dot_dimension_numbers<[1], [0], [0], [1], [0, 0, 1, 1], [], []>, precision = #tpu.contract_precision<fp32>} : vector<4x256xf32>, vector<256x64xf32>, vector<4x64xf32> -> vector<4x64xf32>
    %c0_35 = arith.constant 0 : index
    %c3_36 = arith.constant 3 : index
    %c0_37 = arith.constant 0 : index
    %c0_38 = arith.constant 0 : index
    %29 = vector.load %arg4[%c0_35, %c3_36, %c0_37, %c0_38] : memref<1x4x4x64xf32, #tpu.memory_space<vmem>>, vector<1x1x4x64xf32>
    %30 = vector.shape_cast %29 : vector<1x1x4x64xf32> to vector<4x64xf32>
    %31 = vector.shape_cast %28 : vector<4x64xf32> to vector<1x1x4x64xf32>
    tpu.vector_store %arg4[%c0_35, %c3_36, %c0_37, %c0_38], %31 {strides = array<i32>} : memref<1x4x4x64xf32, #tpu.memory_space<vmem>>, vector<1x1x4x64xf32>,
    return
  }
  func.func @transform_0(%arg0: i32, %arg1: i32) -> (i32, i32, i32) {
    %c0_i32 = arith.constant 0 : i32
    %c0_i32_0 = arith.constant 0 : i32
    return %arg0, %arg1, %c0_i32 : i32, i32, i32
  }
  func.func @transform_1(%arg0: i32, %arg1: i32) -> (i32, i32, i32) {
    %c0_i32 = arith.constant 0 : i32
    %c0_i32_0 = arith.constant 0 : i32
    %c0_i32_1 = arith.constant 0 : i32
    %c0_i32_2 = arith.constant 0 : i32
    return %c0_i32, %c0_i32_0, %c0_i32_1 : i32, i32, i32
  }
  func.func @transform_2(%arg0: i32, %arg1: i32) -> (i32, i32, i32, i32) {
    %c0_i32 = arith.constant 0 : i32
    %c0_i32_0 = arith.constant 0 : i32
    %c0_i32_1 = arith.constant 0 : i32
    return %arg0, %c0_i32, %arg1, %c0_i32_0 : i32, i32, i32, i32
  }
}

</mosaic_0001>

<llo_original>
// kernel: tpu_custom_call.1
$region0: #{tpu_custom_call.1}
  #allocation0 [shape = 'u32[]', space=smem, size = 0x4, offset = 0x4, fixed_abs, tag = 'smem constant byte address 0x4 - core index']
  #allocation1 [shape = 'u32[144,128]{1,0:T(1,128)}', space=vmem, size = 0x12000, scoped, tag = 'internal scratch']
  %s0 = inlined_call_operand.vmem [shape: f32[2,4,256], index: 0, kind: input, shape index: {}]
  %s1 = inlined_call_operand.vmem [shape: f32[4,256,64], index: 1, kind: input, shape index: {}]
  %s2 = inlined_call_operand.hbm [shape: f32[2,4,4,64], index: 2, kind: output, shape index: {}]
  %s3 = sld [smem:[#allocation0]]
  $region41: #{tpu_custom_call.1} parent=0
    _
  %s5 = ssub.s32 1, %s3
  %s6 = scalar_select 0, %s5, %s3
  $region1: #{tpu_custom_call.1} parent=0
    #allocation2 [shape = 'u8[16384]{0}', space=vmem, size = 0x4000, scoped, tag = 'output window, operand 0']
    #allocation3 [shape = 's32[2]{0}', space=sflag, size = 0x8, scoped, tag = 'scoped memory for tpu_custom_call.1']
    %7 = vsyncpa [#allocation3], 0
    %s8 = scalar_lea.sflag [#allocation3], 1
    %9 = vsyncpa %s8, 0
    loop: start=0, step=1, limit=4
    $region2: #{tpu_custom_call.1} parent=1 // loop_pre_header
      _
    $region3: #{tpu_custom_call.1} parent=1 // loop_header
      %s11 = sphi 0, %s15
      %p12 = scmp.ge.s32.totalorder %s11, 4
      %s18 = sphi 0, %s30
      %s19 = sphi 0, %s26
      %s20 = sphi 0, %s18
      %s21 = sphi 0, %s19
      %s22 = sphi 0, %s20
      %s23 = sphi 0, %s21
      %s35 = sphi 0, %s37
      %s38 = sphi 0, %s35
      %s39 = sphi 0, %s38
      %s55 = sphi 0, %s39
      %s59 = sphi 0, %s59
      %s61 = sphi 0, %s59
      %s62 = sphi 0, %s61
      %s76 = sphi 0, %s62
      %s84 = sphi 0, %s86
      %s87 = sphi 0, %s84
      %s88 = sphi 0, %s87
      %s104 = sphi 0, %s88
    $region4: #{tpu_custom_call.1} parent=1 // loop_header_branch
      %14 = sbr.rel (%p12) target = $region8
    $region5: #{tpu_custom_call.1} parent=1 // loop_body
      %s16 = ssub.s32 %s11, 1
      %s17 = ssub.s32 %s11, 2
      %s24 = sadd.s32 1, %s19
      %p25 = scmp.ge.s32.totalorder %s24, 1
      %s26 = scalar_select %p25, 0, %s24
      %s27 = sadd.s32 1, %s18
      %s28 = scalar_select %p25, %s27, %s18
      %p29 = scmp.ge.s32.totalorder %s28, 2
      %s30 = scalar_select %p29, 0, %s28
      %s31 = ssub.s32 %s18, %s30
      %s32 = ssub.s32 %s19, %s26
      %s33 = sor.u32 %s31, %s32
      %p34 = scmp.eq.s32.totalorder %s33, 0
      %s36 = sadd.s32 %s35, 1
      %s37 = scalar_select %p34, %s35, %s36
      %p40 = pneg %p34
      %p41 = scmp.eq.s32.totalorder %s11, 1
      %p42 = por %p40, %p41
      %p43 = scmp.ne.s32.totalorder %s35, %s38
      %p44 = scmp.eq.s32.totalorder %s11, 0
      %p45 = por %p43, %p44
      %p46 = scmp.ne.s32.totalorder %s35, %s38
      %p47 = scmp.eq.s32.totalorder %s16, 1
      %p48 = por %p46, %p47
      %p49 = scmp.ne.s32.totalorder %s38, %s39
      %p50 = scmp.eq.s32.totalorder %s16, 0
      %p51 = por %p49, %p50
      %p52 = scmp.ne.s32.totalorder %s38, %s39
      %p53 = scmp.eq.s32.totalorder %s17, 1
      %p54 = por %p52, %p53
      %p56 = scmp.ne.s32.totalorder %s39, %s55
      %p57 = scmp.eq.s32.totalorder %s17, 0
      %p58 = por %p56, %p57
      %s60 = sadd.s32 %s59, 1
      %p63 = scmp.eq.s32.totalorder %s11, 1
      %p64 = scmp.ne.s32.totalorder %s59, %s61
      %p65 = scmp.eq.s32.totalorder %s11, 0
      %p66 = por %p64, %p65
      %p67 = scmp.ne.s32.totalorder %s59, %s61
      %p68 = scmp.eq.s32.totalorder %s16, 1
      %p69 = por %p67, %p68
      %p70 = scmp.ne.s32.totalorder %s61, %s62
      %p71 = scmp.eq.s32.totalorder %s16, 0
      %p72 = por %p70, %p71
      %p73 = scmp.ne.s32.totalorder %s61, %s62
      %p74 = scmp.eq.s32.totalorder %s17, 1
      %p75 = por %p73, %p74
      %p77 = scmp.ne.s32.totalorder %s62, %s76
      %p78 = scmp.eq.s32.totalorder %s17, 0
      %p79 = por %p77, %p78
      %s80 = ssub.s32 %s18, %s30
      %s81 = ssub.s32 %s19, %s26
      %s82 = sor.u32 %s80, %s81
      %p83 = scmp.eq.s32.totalorder %s82, 0
      %s85 = sadd.s32 %s84, 1
      %s86 = scalar_select %p83, %s84, %s85
      %p89 = pneg %p83
      %p90 = scmp.eq.s32.totalorder %s11, 1
      %p91 = por %p89, %p90
      %p92 = scmp.ne.s32.totalorder %s84, %s87
      %p93 = scmp.eq.s32.totalorder %s11, 0
      %p94 = por %p92, %p93
      %p95 = scmp.ne.s32.totalorder %s84, %s87
      %p96 = scmp.eq.s32.totalorder %s16, 1
      %p97 = por %p95, %p96
      %p98 = scmp.ne.s32.totalorder %s87, %s88
      %p99 = scmp.eq.s32.totalorder %s16, 0
      %p100 = por %p98, %p99
      %p101 = scmp.ne.s32.totalorder %s87, %s88
      %p102 = scmp.eq.s32.totalorder %s17, 1
      %p103 = por %p101, %p102
      %p105 = scmp.ne.s32.totalorder %s88, %s104
      %p106 = scmp.eq.s32.totalorder %s17, 0
      %p107 = por %p105, %p106
      %p108 = scmp.le.s32.totalorder 1, %s11
      %p109 = scmp.lt.s32.totalorder %s11, 3
      %p110 = pnand %p108, %p109
      %p111 = pneg %p110
      // Predicated region
      $region9: #{tpu_custom_call.1} parent=5 // pred_check
        _
      $region10: #{tpu_custom_call.1} parent=5 // pred_check_branch
        %113 = sbr.rel (%p110) target = $region12
      $region11: #{tpu_custom_call.1} parent=5 // pred_region
        %s114 = ssub.s32 %s11, 1
        // Predicated region
        $region13: #{tpu_custom_call.1} parent=11 // pred_check
          %p115 = pneg %p72
        $region14: #{tpu_custom_call.1} parent=11 // pred_check_branch
          %117 = sbr.rel (%p115) target = $region16
        $region15: #{tpu_custom_call.1} parent=11 // pred_region
          _
        $region16: #{tpu_custom_call.1} parent=11 // pred_fallthru
          _
      $region12: #{tpu_custom_call.1} parent=5 // pred_fallthru
        _
      %p118 = scmp.lt.s32.totalorder %s11, 2
      // Predicated region
      $region17: #{tpu_custom_call.1} parent=5 // pred_check
        %p119 = pneg %p118
      $region18: #{tpu_custom_call.1} parent=5 // pred_check_branch
        %121 = sbr.rel (%p119) target = $region20
      $region19: #{tpu_custom_call.1} parent=5 // pred_region
        // Predicated region
        $region21: #{tpu_custom_call.1} parent=19 // pred_check
          %p122 = pneg %p45
        $region22: #{tpu_custom_call.1} parent=19 // pred_check_branch
          %124 = sbr.rel (%p122) target = $region24
        $region23: #{tpu_custom_call.1} parent=19 // pred_region
          %p125 = scmp.lt.s32.totalorder %s18, 1
          %s126 = scalar_select %p125, %s18, 1
          %p127 = scmp.lt.s32.totalorder %s19, 0
          %s128 = scalar_select %p127, %s19, 0
          %s129 = smul.addr %s128, 2
          %s130 = smul.addr %s126, 2
          %s131 = sadd.s32 %s129, %s130
          %s132 = smul.addr %s131, 4
          %s133 = scalar_lea.vmem %s0, %s132
        $region24: #{tpu_custom_call.1} parent=19 // pred_fallthru
          _
      $region20: #{tpu_custom_call.1} parent=5 // pred_fallthru
        _
      %p134 = scmp.le.s32.totalorder 1, %s11
      %p135 = scmp.lt.s32.totalorder %s11, 3
      %p136 = pnand %p134, %p135
      %p137 = pneg %p136
      // Predicated region
      $region25: #{tpu_custom_call.1} parent=5 // pred_check
        _
      $region26: #{tpu_custom_call.1} parent=5 // pred_check_branch
        %139 = sbr.rel (%p136) target = $region28
      $region27: #{tpu_custom_call.1} parent=5 // pred_region
        %s140 = ssub.s32 %s11, 1
        %p141 = scmp.lt.s32.totalorder %s20, 1
        %s142 = scalar_select %p141, %s20, 1
        %p143 = scmp.lt.s32.totalorder %s21, 0
        %s144 = scalar_select %p143, %s21, 0
        %s145 = smul.addr %s144, 2
        %s146 = smul.addr %s142, 2
        %s147 = sadd.s32 %s145, %s146
        %s148 = smul.addr %s147, 4
        %s149 = scalar_lea.vmem %s0, %s148
        %p150 = pneg %p51
        %p151 = pneg %p48
        %p152 = pneg %p72
        %p153 = pneg %p69
        %p154 = pneg %p100
        %p155 = pneg %p97
        %s156 = sand.u32 %s87, 1
        %s157 = scalar_lea.sflag [#allocation3], %s156
        %s158 = sand.u32 %s87, 1
        %s159 = smul.addr %s158, 16
        %s160 = scalar_lea.vmem [#allocation2], %s159
        %p161 = scmp.lt.s32.totalorder %s20, 1
        %s162 = scalar_select %p161, %s20, 1
        %p163 = scmp.lt.s32.totalorder %s21, 0
        %s164 = scalar_select %p163, %s21, 0
        %s165 = smul.addr %s164, 2
        %s166 = smul.addr %s162, 2
        %s167 = sadd.s32 %s165, %s166
        %s168 = smul.addr %s167, 4
        %s169 = scalar_lea.vmem %s0, %s168
        %v170 = vld [vmem:[%s169] sm:$0xff]
        %v171 = vld [vmem:[%s1] sm:$0xff]
        %v172 = vld [vmem:[%s1 + $0x8] sm:$0xff]
        %v173 = vld [vmem:[%s1 + $0x10] sm:$0xff]
        %v174 = vld [vmem:[%s1 + $0x18] sm:$0xff]
        %v175 = vld [vmem:[%s1 + $0x20] sm:$0xff]
        %v176 = vld [vmem:[%s1 + $0x28] sm:$0xff]
        %v177 = vld [vmem:[%s1 + $0x30] sm:$0xff]
        %v178 = vld [vmem:[%s1 + $0x38] sm:$0xff]
        %v179 = vld [vmem:[%s1 + $0x40] sm:$0xff]
        %v180 = vld [vmem:[%s1 + $0x48] sm:$0xff]
        %v181 = vld [vmem:[%s1 + $0x50] sm:$0xff]
        %v182 = vld [vmem:[%s1 + $0x58] sm:$0xff]
        %v183 = vld [vmem:[%s1 + $0x60] sm:$0xff]
        %v184 = vld [vmem:[%s1 + $0x68] sm:$0xff]
        %v185 = vld [vmem:[%s1 + $0x70] sm:$0xff]
        %v186 = vld [vmem:[%s1 + $0x78] sm:$0xff]
        %v187 = vld [vmem:[%s1 + $0x80] sm:$0xff]
        %v188 = vld [vmem:[%s1 + $0x88] sm:$0xff]
        %v189 = vld [vmem:[%s1 + $0x90] sm:$0xff]
        %v190 = vld [vmem:[%s1 + $0x98] sm:$0xff]
        %v191 = vld [vmem:[%s1 + $0xa0] sm:$0xff]
        %v192 = vld [vmem:[%s1 + $0xa8] sm:$0xff]
        %v193 = vld [vmem:[%s1 + $0xb0] sm:$0xff]
        %v194 = vld [vmem:[%s1 + $0xb8] sm:$0xff]
        %v195 = vld [vmem:[%s1 + $0xc0] sm:$0xff]
        %v196 = vld [vmem:[%s1 + $0xc8] sm:$0xff]
        %v197 = vld [vmem:[%s1 + $0xd0] sm:$0xff]
        %v198 = vld [vmem:[%s1 + $0xd8] sm:$0xff]
        %v199 = vld [vmem:[%s1 + $0xe0] sm:$0xff]
        %v200 = vld [vmem:[%s1 + $0xe8] sm:$0xff]
        %v201 = vld [vmem:[%s1 + $0xf0] sm:$0xff]
        %v202 = vld [vmem:[%s1 + $0xf8] sm:$0xff]
        %v204 = vcombine.high %v170, %v170
        %206 = vmatprep.subr.mxu0 0.0
        %v207 = vand.u32 %v186, 4294901760
        %208 = vmatpush1.msra.mxu0 %v207
        %209 = vmatprep.subr.mxu0 0.0
        %v210 = vand.u32 %v185, 4294901760
        %211 = vmatpush1.msra.mxu0 %v210
        %212 = vmatprep.subr.mxu0 0.0
        %v213 = vand.u32 %v184, 4294901760
        %214 = vmatpush1.msra.mxu0 %v213
        %215 = vmatprep.subr.mxu0 0.0
        %v216 = vand.u32 %v183, 4294901760
        %217 = vmatpush1.msra.mxu0 %v216
        %218 = vmatprep.subr.mxu0 0.0
        %v219 = vand.u32 %v182, 4294901760
        %220 = vmatpush1.msra.mxu0 %v219
        %221 = vmatprep.subr.mxu0 0.0
        %v222 = vand.u32 %v181, 4294901760
        %223 = vmatpush1.msra.mxu0 %v222
        %224 = vmatprep.subr.mxu0 0.0
        %v225 = vand.u32 %v180, 4294901760
        %226 = vmatpush1.msra.mxu0 %v225
        %227 = vmatprep.subr.mxu0 0.0
        %v228 = vand.u32 %v179, 4294901760
        %229 = vmatpush1.msra.mxu0 %v228
        %230 = vmatprep.subr.mxu0 0.0
        %v231 = vand.u32 %v178, 4294901760
        %232 = vmatpush1.msra.mxu0 %v231
        %233 = vmatprep.subr.mxu0 0.0
        %v234 = vand.u32 %v177, 4294901760
        %235 = vmatpush1.msra.mxu0 %v234
        %236 = vmatprep.subr.mxu0 0.0
        %v237 = vand.u32 %v176, 4294901760
        %238 = vmatpush1.msra.mxu0 %v237
        %239 = vmatprep.subr.mxu0 0.0
        %v240 = vand.u32 %v175, 4294901760
        %241 = vmatpush1.msra.mxu0 %v240
        %242 = vmatprep.subr.mxu0 0.0
        %v243 = vand.u32 %v174, 4294901760
        %244 = vmatpush1.msra.mxu0 %v243
        %245 = vmatprep.subr.mxu0 0.0
        %v246 = vand.u32 %v173, 4294901760
        %247 = vmatpush1.msra.mxu0 %v246
        %248 = vmatprep.subr.mxu0 0.0
        %v249 = vand.u32 %v172, 4294901760
        %250 = vmatpush1.msra.mxu0 %v249
        %251 = vmatprep.subr.mxu0 0.0
        %v252 = vand.u32 %v171, 4294901760
        %253 = vmatpush1.msra.mxu0 %v252
        %254 = vmatprep.subr.mxu0 0.0
        %v255 = vand.u32 %v202, 4294901760
        %256 = vmatpush2.msra.mxu0 %v255
        %257 = vmatprep.subr.mxu0 0.0
        %v258 = vand.u32 %v201, 4294901760
        %259 = vmatpush2.msra.mxu0 %v258
        %260 = vmatprep.subr.mxu0 0.0
        %v261 = vand.u32 %v200, 4294901760
        %262 = vmatpush2.msra.mxu0 %v261
        %263 = vmatprep.subr.mxu0 0.0
        %v264 = vand.u32 %v199, 4294901760
        %265 = vmatpush2.msra.mxu0 %v264
        %266 = vmatprep.subr.mxu0 0.0
        %v267 = vand.u32 %v198, 4294901760
        %268 = vmatpush2.msra.mxu0 %v267
        %269 = vmatprep.subr.mxu0 0.0
        %v270 = vand.u32 %v197, 4294901760
        %271 = vmatpush2.msra.mxu0 %v270
        %272 = vmatprep.subr.mxu0 0.0
        %v273 = vand.u32 %v196, 4294901760
        %274 = vmatpush2.msra.mxu0 %v273
        %275 = vmatprep.subr.mxu0 0.0
        %v276 = vand.u32 %v195, 4294901760
        %277 = vmatpush2.msra.mxu0 %v276
        %278 = vmatprep.subr.mxu0 0.0
        %v279 = vand.u32 %v194, 4294901760
        %280 = vmatpush2.msra.mxu0 %v279
        %281 = vmatprep.subr.mxu0 0.0
        %v282 = vand.u32 %v193, 4294901760
        %283 = vmatpush2.msra.mxu0 %v282
        %284 = vmatprep.subr.mxu0 0.0
        %v285 = vand.u32 %v192, 4294901760
        %286 = vmatpush2.msra.mxu0 %v285
        %287 = vmatprep.subr.mxu0 0.0
        %v288 = vand.u32 %v191, 4294901760
        %289 = vmatpush2.msra.mxu0 %v288
        %290 = vmatprep.subr.mxu0 0.0
        %v291 = vand.u32 %v190, 4294901760
        %292 = vmatpush2.msra.mxu0 %v291
        %293 = vmatprep.subr.mxu0 0.0
        %v294 = vand.u32 %v189, 4294901760
        %295 = vmatpush2.msra.mxu0 %v294
        %296 = vmatprep.subr.mxu0 0.0
        %v297 = vand.u32 %v188, 4294901760
        %298 = vmatpush2.msra.mxu0 %v297
        %299 = vmatprep.subr.mxu0 0.0
        %v300 = vand.u32 %v187, 4294901760
        %301 = vmatpush2.msra.mxu0 %v300
        %v302 = vand.u32 %v204, 4294901760
        %v303 = vsub.f32 %v204, %v302
        %v304 = vand.u32 %v303, 4294901760
        %v305 = vsub.f32 %v303, %v304
        %v306 = vand.u32 %v305, 4294901760
        %307 = vmatprep.mubr.f32.mxu0 %v306
        %v308 = vand.u32 %v170, 4294901760
        %v309 = vsub.f32 %v170, %v308
        %v310 = vand.u32 %v309, 4294901760
        %v311 = vsub.f32 %v309, %v310
        %v312 = vand.u32 %v311, 4294901760
        %313 = vmatmul.mubr.f32.gmra.mxu0 %v312
        %v314 = vpop.f32.mrf.mxu0
        %v315 = vadd.f32 0.0, %v314
        %v316 = vpop.f32.mrf.mxu0
        %317 = vdwg.mxu0
        %318 = vmatprep.subr.mxu0 0.0
        %v319 = vand.u32 %v186, 4294901760
        %v320 = vsub.f32 %v186, %v319
        %v321 = vand.u32 %v320, 4294901760
        %v322 = vsub.f32 %v320, %v321
        %v323 = vand.u32 %v322, 4294901760
        %324 = vmatpush1.msra.mxu0 %v323
        %325 = vmatprep.subr.mxu0 0.0
        %v326 = vand.u32 %v185, 4294901760
        %v327 = vsub.f32 %v185, %v326
        %v328 = vand.u32 %v327, 4294901760
        %v329 = vsub.f32 %v327, %v328
        %v330 = vand.u32 %v329, 4294901760
        %331 = vmatpush1.msra.mxu0 %v330
        %332 = vmatprep.subr.mxu0 0.0
        %v333 = vand.u32 %v184, 4294901760
        %v334 = vsub.f32 %v184, %v333
        %v335 = vand.u32 %v334, 4294901760
        %v336 = vsub.f32 %v334, %v335
        %v337 = vand.u32 %v336, 4294901760
        %338 = vmatpush1.msra.mxu0 %v337
        %339 = vmatprep.subr.mxu0 0.0
        %v340 = vand.u32 %v183, 4294901760
        %v341 = vsub.f32 %v183, %v340
        %v342 = vand.u32 %v341, 4294901760
        %v343 = vsub.f32 %v341, %v342
        %v344 = vand.u32 %v343, 4294901760
        %345 = vmatpush1.msra.mxu0 %v344
        %346 = vmatprep.subr.mxu0 0.0
        %v347 = vand.u32 %v182, 4294901760
        %v348 = vsub.f32 %v182, %v347
        %v349 = vand.u32 %v348, 4294901760
        %v350 = vsub.f32 %v348, %v349
        %v351 = vand.u32 %v350, 4294901760
        %352 = vmatpush1.msra.mxu0 %v351
        %353 = vmatprep.subr.mxu0 0.0
        %v354 = vand.u32 %v181, 4294901760
        %v355 = vsub.f32 %v181, %v354
        %v356 = vand.u32 %v355, 4294901760
        %v357 = vsub.f32 %v355, %v356
        %v358 = vand.u32 %v357, 4294901760
        %359 = vmatpush1.msra.mxu0 %v358
        %360 = vmatprep.subr.mxu0 0.0
        %v361 = vand.u32 %v180, 4294901760
        %v362 = vsub.f32 %v180, %v361
        %v363 = vand.u32 %v362, 4294901760
        %v364 = vsub.f32 %v362, %v363
        %v365 = vand.u32 %v364, 4294901760
        %366 = vmatpush1.msra.mxu0 %v365
        %367 = vmatprep.subr.mxu0 0.0
        %v368 = vand.u32 %v179, 4294901760
        %v369 = vsub.f32 %v179, %v368
        %v370 = vand.u32 %v369, 4294901760
        %v371 = vsub.f32 %v369, %v370
        %v372 = vand.u32 %v371, 4294901760
        %373 = vmatpush1.msra.mxu0 %v372
        %374 = vmatprep.subr.mxu0 0.0
        %v375 = vand.u32 %v178, 4294901760
        %v376 = vsub.f32 %v178, %v375
        %v377 = vand.u32 %v376, 4294901760
        %v378 = vsub.f32 %v376, %v377
        %v379 = vand.u32 %v378, 4294901760
        %380 = vmatpush1.msra.mxu0 %v379
        %381 = vmatprep.subr.mxu0 0.0
        %v382 = vand.u32 %v177, 4294901760
        %v383 = vsub.f32 %v177, %v382
        %v384 = vand.u32 %v383, 4294901760
        %v385 = vsub.f32 %v383, %v384
        %v386 = vand.u32 %v385, 4294901760
        %387 = vmatpush1.msra.mxu0 %v386
        %388 = vmatprep.subr.mxu0 0.0
        %v389 = vand.u32 %v176, 4294901760
        %v390 = vsub.f32 %v176, %v389
        %v391 = vand.u32 %v390, 4294901760
        %v392 = vsub.f32 %v390, %v391
        %v393 = vand.u32 %v392, 4294901760
        %394 = vmatpush1.msra.mxu0 %v393
        %395 = vmatprep.subr.mxu0 0.0
        %v396 = vand.u32 %v175, 4294901760
        %v397 = vsub.f32 %v175, %v396
        %v398 = vand.u32 %v397, 4294901760
        %v399 = vsub.f32 %v397, %v398
        %v400 = vand.u32 %v399, 4294901760
        %401 = vmatpush1.msra.mxu0 %v400
        %402 = vmatprep.subr.mxu0 0.0
        %v403 = vand.u32 %v174, 4294901760
        %v404 = vsub.f32 %v174, %v403
        %v405 = vand.u32 %v404, 4294901760
        %v406 = vsub.f32 %v404, %v405
        %v407 = vand.u32 %v406, 4294901760
        %408 = vmatpush1.msra.mxu0 %v407
        %409 = vmatprep.subr.mxu0 0.0
        %v410 = vand.u32 %v173, 4294901760
        %v411 = vsub.f32 %v173, %v410
        %v412 = vand.u32 %v411, 4294901760
        %v413 = vsub.f32 %v411, %v412
        %v414 = vand.u32 %v413, 4294901760
        %415 = vmatpush1.msra.mxu0 %v414
        %416 = vmatprep.subr.mxu0 0.0
        %v417 = vand.u32 %v172, 4294901760
        %v418 = vsub.f32 %v172, %v417
        %v419 = vand.u32 %v418, 4294901760
        %v420 = vsub.f32 %v418, %v419
        %v421 = vand.u32 %v420, 4294901760
        %422 = vmatpush1.msra.mxu0 %v421
        %423 = vmatprep.subr.mxu0 0.0
        %v424 = vand.u32 %v171, 4294901760
        %v425 = vsub.f32 %v171, %v424
        %v426 = vand.u32 %v425, 4294901760
        %v427 = vsub.f32 %v425, %v426
        %v428 = vand.u32 %v427, 4294901760
        %429 = vmatpush1.msra.mxu0 %v428
        %430 = vmatprep.subr.mxu0 0.0
        %v431 = vand.u32 %v202, 4294901760
        %v432 = vsub.f32 %v202, %v431
        %v433 = vand.u32 %v432, 4294901760
        %v434 = vsub.f32 %v432, %v433
        %v435 = vand.u32 %v434, 4294901760
        %436 = vmatpush2.msra.mxu0 %v435
        %437 = vmatprep.subr.mxu0 0.0
        %v438 = vand.u32 %v201, 4294901760
        %v439 = vsub.f32 %v201, %v438
        %v440 = vand.u32 %v439, 4294901760
        %v441 = vsub.f32 %v439, %v440
        %v442 = vand.u32 %v441, 4294901760
        %443 = vmatpush2.msra.mxu0 %v442
        %444 = vmatprep.subr.mxu0 0.0
        %v445 = vand.u32 %v200, 4294901760
        %v446 = vsub.f32 %v200, %v445
        %v447 = vand.u32 %v446, 4294901760
        %v448 = vsub.f32 %v446, %v447
        %v449 = vand.u32 %v448, 4294901760
        %450 = vmatpush2.msra.mxu0 %v449
        %451 = vmatprep.subr.mxu0 0.0
        %v452 = vand.u32 %v199, 4294901760
        %v453 = vsub.f32 %v199, %v452
        %v454 = vand.u32 %v453, 4294901760
        %v455 = vsub.f32 %v453, %v454
        %v456 = vand.u32 %v455, 4294901760
        %457 = vmatpush2.msra.mxu0 %v456
        %458 = vmatprep.subr.mxu0 0.0
        %v459 = vand.u32 %v198, 4294901760
        %v460 = vsub.f32 %v198, %v459
        %v461 = vand.u32 %v460, 4294901760
        %v462 = vsub.f32 %v460, %v461
        %v463 = vand.u32 %v462, 4294901760
        %464 = vmatpush2.msra.mxu0 %v463
        %465 = vmatprep.subr.mxu0 0.0
        %v466 = vand.u32 %v197, 4294901760
        %v467 = vsub.f32 %v197, %v466
        %v468 = vand.u32 %v467, 4294901760
        %v469 = vsub.f32 %v467, %v468
        %v470 = vand.u32 %v469, 4294901760
        %471 = vmatpush2.msra.mxu0 %v470
        %472 = vmatprep.subr.mxu0 0.0
        %v473 = vand.u32 %v196, 4294901760
        %v474 = vsub.f32 %v196, %v473
        %v475 = vand.u32 %v474, 4294901760
        %v476 = vsub.f32 %v474, %v475
        %v477 = vand.u32 %v476, 4294901760
        %478 = vmatpush2.msra.mxu0 %v477
        %479 = vmatprep.subr.mxu0 0.0
        %v480 = vand.u32 %v195, 4294901760
        %v481 = vsub.f32 %v195, %v480
        %v482 = vand.u32 %v481, 4294901760
        %v483 = vsub.f32 %v481, %v482
        %v484 = vand.u32 %v483, 4294901760
        %485 = vmatpush2.msra.mxu0 %v484
        %486 = vmatprep.subr.mxu0 0.0
        %v487 = vand.u32 %v194, 4294901760
        %v488 = vsub.f32 %v194, %v487
        %v489 = vand.u32 %v488, 4294901760
        %v490 = vsub.f32 %v488, %v489
        %v491 = vand.u32 %v490, 4294901760
        %492 = vmatpush2.msra.mxu0 %v491
        %493 = vmatprep.subr.mxu0 0.0
        %v494 = vand.u32 %v193, 4294901760
        %v495 = vsub.f32 %v193, %v494
        %v496 = vand.u32 %v495, 4294901760
        %v497 = vsub.f32 %v495, %v496
        %v498 = vand.u32 %v497, 4294901760
        %499 = vmatpush2.msra.mxu0 %v498
        %500 = vmatprep.subr.mxu0 0.0
        %v501 = vand.u32 %v192, 4294901760
        %v502 = vsub.f32 %v192, %v501
        %v503 = vand.u32 %v502, 4294901760
        %v504 = vsub.f32 %v502, %v503
        %v505 = vand.u32 %v504, 4294901760
        %506 = vmatpush2.msra.mxu0 %v505
        %507 = vmatprep.subr.mxu0 0.0
        %v508 = vand.u32 %v191, 4294901760
        %v509 = vsub.f32 %v191, %v508
        %v510 = vand.u32 %v509, 4294901760
        %v511 = vsub.f32 %v509, %v510
        %v512 = vand.u32 %v511, 4294901760
        %513 = vmatpush2.msra.mxu0 %v512
        %514 = vmatprep.subr.mxu0 0.0
        %v515 = vand.u32 %v190, 4294901760
        %v516 = vsub.f32 %v190, %v515
        %v517 = vand.u32 %v516, 4294901760
        %v518 = vsub.f32 %v516, %v517
        %v519 = vand.u32 %v518, 4294901760
        %520 = vmatpush2.msra.mxu0 %v519
        %521 = vmatprep.subr.mxu0 0.0
        %v522 = vand.u32 %v189, 4294901760
        %v523 = vsub.f32 %v189, %v522
        %v524 = vand.u32 %v523, 4294901760
        %v525 = vsub.f32 %v523, %v524
        %v526 = vand.u32 %v525, 4294901760
        %527 = vmatpush2.msra.mxu0 %v526
        %528 = vmatprep.subr.mxu0 0.0
        %v529 = vand.u32 %v188, 4294901760
        %v530 = vsub.f32 %v188, %v529
        %v531 = vand.u32 %v530, 4294901760
        %v532 = vsub.f32 %v530, %v531
        %v533 = vand.u32 %v532, 4294901760
        %534 = vmatpush2.msra.mxu0 %v533
        %535 = vmatprep.subr.mxu0 0.0
        %v536 = vand.u32 %v187, 4294901760
        %v537 = vsub.f32 %v187, %v536
        %v538 = vand.u32 %v537, 4294901760
        %v539 = vsub.f32 %v537, %v538
        %v540 = vand.u32 %v539, 4294901760
        %541 = vmatpush2.msra.mxu0 %v540
        %v542 = vand.u32 %v204, 4294901760
        %543 = vmatprep.mubr.f32.mxu0 %v542
        %v544 = vand.u32 %v170, 4294901760
        %545 = vmatmul.mubr.f32.gmra.mxu0 %v544
        %v546 = vpop.f32.mrf.mxu0
        %v547 = vadd.f32 %v315, %v546
        %v548 = vpop.f32.mrf.mxu0
        %549 = vdwg.mxu0
        %550 = vmatprep.subr.mxu0 0.0
        %v551 = vand.u32 %v186, 4294901760
        %v552 = vsub.f32 %v186, %v551
        %553 = vmatpush1.msra.mxu0 %v552
        %554 = vmatprep.subr.mxu0 0.0
        %v555 = vand.u32 %v185, 4294901760
        %v556 = vsub.f32 %v185, %v555
        %557 = vmatpush1.msra.mxu0 %v556
        %558 = vmatprep.subr.mxu0 0.0
        %v559 = vand.u32 %v184, 4294901760
        %v560 = vsub.f32 %v184, %v559
        %561 = vmatpush1.msra.mxu0 %v560
        %562 = vmatprep.subr.mxu0 0.0
        %v563 = vand.u32 %v183, 4294901760
        %v564 = vsub.f32 %v183, %v563
        %565 = vmatpush1.msra.mxu0 %v564
        %566 = vmatprep.subr.mxu0 0.0
        %v567 = vand.u32 %v182, 4294901760
        %v568 = vsub.f32 %v182, %v567
        %569 = vmatpush1.msra.mxu0 %v568
        %570 = vmatprep.subr.mxu0 0.0
        %v571 = vand.u32 %v181, 4294901760
        %v572 = vsub.f32 %v181, %v571
        %573 = vmatpush1.msra.mxu0 %v572
        %574 = vmatprep.subr.mxu0 0.0
        %v575 = vand.u32 %v180, 4294901760
        %v576 = vsub.f32 %v180, %v575
        %577 = vmatpush1.msra.mxu0 %v576
        %578 = vmatprep.subr.mxu0 0.0
        %v579 = vand.u32 %v179, 4294901760
        %v580 = vsub.f32 %v179, %v579
        %581 = vmatpush1.msra.mxu0 %v580
        %582 = vmatprep.subr.mxu0 0.0
        %v583 = vand.u32 %v178, 4294901760
        %v584 = vsub.f32 %v178, %v583
        %585 = vmatpush1.msra.mxu0 %v584
        %586 = vmatprep.subr.mxu0 0.0
        %v587 = vand.u32 %v177, 4294901760
        %v588 = vsub.f32 %v177, %v587
        %589 = vmatpush1.msra.mxu0 %v588
        %590 = vmatprep.subr.mxu0 0.0
        %v591 = vand.u32 %v176, 4294901760
        %v592 = vsub.f32 %v176, %v591
        %593 = vmatpush1.msra.mxu0 %v592
        %594 = vmatprep.subr.mxu0 0.0
        %v595 = vand.u32 %v175, 4294901760
        %v596 = vsub.f32 %v175, %v595
        %597 = vmatpush1.msra.mxu0 %v596
        %598 = vmatprep.subr.mxu0 0.0
        %v599 = vand.u32 %v174, 4294901760
        %v600 = vsub.f32 %v174, %v599
        %601 = vmatpush1.msra.mxu0 %v600
        %602 = vmatprep.subr.mxu0 0.0
        %v603 = vand.u32 %v173, 4294901760
        %v604 = vsub.f32 %v173, %v603
        %605 = vmatpush1.msra.mxu0 %v604
        %606 = vmatprep.subr.mxu0 0.0
        %v607 = vand.u32 %v172, 4294901760
        %v608 = vsub.f32 %v172, %v607
        %609 = vmatpush1.msra.mxu0 %v608
        %610 = vmatprep.subr.mxu0 0.0
        %v611 = vand.u32 %v171, 4294901760
        %v612 = vsub.f32 %v171, %v611
        %613 = vmatpush1.msra.mxu0 %v612
        %614 = vmatprep.subr.mxu0 0.0
        %v615 = vand.u32 %v202, 4294901760
        %v616 = vsub.f32 %v202, %v615
        %617 = vmatpush2.msra.mxu0 %v616
        %618 = vmatprep.subr.mxu0 0.0
        %v619 = vand.u32 %v201, 4294901760
        %v620 = vsub.f32 %v201, %v619
        %621 = vmatpush2.msra.mxu0 %v620
        %622 = vmatprep.subr.mxu0 0.0
        %v623 = vand.u32 %v200, 4294901760
        %v624 = vsub.f32 %v200, %v623
        %625 = vmatpush2.msra.mxu0 %v624
        %626 = vmatprep.subr.mxu0 0.0
        %v627 = vand.u32 %v199, 4294901760
        %v628 = vsub.f32 %v199, %v627
        %629 = vmatpush2.msra.mxu0 %v628
        %630 = vmatprep.subr.mxu0 0.0
        %v631 = vand.u32 %v198, 4294901760
        %v632 = vsub.f32 %v198, %v631
        %633 = vmatpush2.msra.mxu0 %v632
        %634 = vmatprep.subr.mxu0 0.0
        %v635 = vand.u32 %v197, 4294901760
        %v636 = vsub.f32 %v197, %v635
        %637 = vmatpush2.msra.mxu0 %v636
        %638 = vmatprep.subr.mxu0 0.0
        %v639 = vand.u32 %v196, 4294901760
        %v640 = vsub.f32 %v196, %v639
        %641 = vmatpush2.msra.mxu0 %v640
        %642 = vmatprep.subr.mxu0 0.0
        %v643 = vand.u32 %v195, 4294901760
        %v644 = vsub.f32 %v195, %v643
        %645 = vmatpush2.msra.mxu0 %v644
        %646 = vmatprep.subr.mxu0 0.0
        %v647 = vand.u32 %v194, 4294901760
        %v648 = vsub.f32 %v194, %v647
        %649 = vmatpush2.msra.mxu0 %v648
        %650 = vmatprep.subr.mxu0 0.0
        %v651 = vand.u32 %v193, 4294901760
        %v652 = vsub.f32 %v193, %v651
        %653 = vmatpush2.msra.mxu0 %v652
        %654 = vmatprep.subr.mxu0 0.0
        %v655 = vand.u32 %v192, 4294901760
        %v656 = vsub.f32 %v192, %v655
        %657 = vmatpush2.msra.mxu0 %v656
        %658 = vmatprep.subr.mxu0 0.0
        %v659 = vand.u32 %v191, 4294901760
        %v660 = vsub.f32 %v191, %v659
        %661 = vmatpush2.msra.mxu0 %v660
        %662 = vmatprep.subr.mxu0 0.0
        %v663 = vand.u32 %v190, 4294901760
        %v664 = vsub.f32 %v190, %v663
        %665 = vmatpush2.msra.mxu0 %v664
        %666 = vmatprep.subr.mxu0 0.0
        %v667 = vand.u32 %v189, 4294901760
        %v668 = vsub.f32 %v189, %v667
        %669 = vmatpush2.msra.mxu0 %v668
        %670 = vmatprep.subr.mxu0 0.0
        %v671 = vand.u32 %v188, 4294901760
        %v672 = vsub.f32 %v188, %v671
        %673 = vmatpush2.msra.mxu0 %v672
        %674 = vmatprep.subr.mxu0 0.0
        %v675 = vand.u32 %v187, 4294901760
        %v676 = vsub.f32 %v187, %v675
        %677 = vmatpush2.msra.mxu0 %v676
        %v678 = vand.u32 %v204, 4294901760
        %v679 = vsub.f32 %v204, %v678
        %680 = vmatprep.mubr.f32.mxu0 %v679
        %v681 = vand.u32 %v170, 4294901760
        %v682 = vsub.f32 %v170, %v681
        %683 = vmatmul.mubr.f32.gmra.mxu0 %v682
        %v684 = vpop.f32.mrf.mxu0
        %v685 = vadd.f32 %v547, %v684
        %v686 = vpop.f32.mrf.mxu0
        %687 = vdwg.mxu0
        %688 = vmatprep.subr.mxu0 0.0
        %v689 = vand.u32 %v186, 4294901760
        %690 = vmatpush1.msra.mxu0 %v689
        %691 = vmatprep.subr.mxu0 0.0
        %v692 = vand.u32 %v185, 4294901760
        %693 = vmatpush1.msra.mxu0 %v692
        %694 = vmatprep.subr.mxu0 0.0
        %v695 = vand.u32 %v184, 4294901760
        %696 = vmatpush1.msra.mxu0 %v695
        %697 = vmatprep.subr.mxu0 0.0
        %v698 = vand.u32 %v183, 4294901760
        %699 = vmatpush1.msra.mxu0 %v698
        %700 = vmatprep.subr.mxu0 0.0
        %v701 = vand.u32 %v182, 4294901760
        %702 = vmatpush1.msra.mxu0 %v701
        %703 = vmatprep.subr.mxu0 0.0
        %v704 = vand.u32 %v181, 4294901760
        %705 = vmatpush1.msra.mxu0 %v704
        %706 = vmatprep.subr.mxu0 0.0
        %v707 = vand.u32 %v180, 4294901760
        %708 = vmatpush1.msra.mxu0 %v707
        %709 = vmatprep.subr.mxu0 0.0
        %v710 = vand.u32 %v179, 4294901760
        %711 = vmatpush1.msra.mxu0 %v710
        %712 = vmatprep.subr.mxu0 0.0
        %v713 = vand.u32 %v178, 4294901760
        %714 = vmatpush1.msra.mxu0 %v713
        %715 = vmatprep.subr.mxu0 0.0
        %v716 = vand.u32 %v177, 4294901760
        %717 = vmatpush1.msra.mxu0 %v716
        %718 = vmatprep.subr.mxu0 0.0
        %v719 = vand.u32 %v176, 4294901760
        %720 = vmatpush1.msra.mxu0 %v719
        %721 = vmatprep.subr.mxu0 0.0
        %v722 = vand.u32 %v175, 4294901760
        %723 = vmatpush1.msra.mxu0 %v722
        %724 = vmatprep.subr.mxu0 0.0
        %v725 = vand.u32 %v174, 4294901760
        %726 = vmatpush1.msra.mxu0 %v725
        %727 = vmatprep.subr.mxu0 0.0
        %v728 = vand.u32 %v173, 4294901760
        %729 = vmatpush1.msra.mxu0 %v728
        %730 = vmatprep.subr.mxu0 0.0
        %v731 = vand.u32 %v172, 4294901760
        %732 = vmatpush1.msra.mxu0 %v731
        %733 = vmatprep.subr.mxu0 0.0
        %v734 = vand.u32 %v171, 4294901760
        %735 = vmatpush1.msra.mxu0 %v734
        %736 = vmatprep.subr.mxu0 0.0
        %v737 = vand.u32 %v202, 4294901760
        %738 = vmatpush2.msra.mxu0 %v737
        %739 = vmatprep.subr.mxu0 0.0
        %v740 = vand.u32 %v201, 4294901760
        %741 = vmatpush2.msra.mxu0 %v740
        %742 = vmatprep.subr.mxu0 0.0
        %v743 = vand.u32 %v200, 4294901760
        %744 = vmatpush2.msra.mxu0 %v743
        %745 = vmatprep.subr.mxu0 0.0
        %v746 = vand.u32 %v199, 4294901760
        %747 = vmatpush2.msra.mxu0 %v746
        %748 = vmatprep.subr.mxu0 0.0
        %v749 = vand.u32 %v198, 4294901760
        %750 = vmatpush2.msra.mxu0 %v749
        %751 = vmatprep.subr.mxu0 0.0
        %v752 = vand.u32 %v197, 4294901760
        %753 = vmatpush2.msra.mxu0 %v752
        %754 = vmatprep.subr.mxu0 0.0
        %v755 = vand.u32 %v196, 4294901760
        %756 = vmatpush2.msra.mxu0 %v755
        %757 = vmatprep.subr.mxu0 0.0
        %v758 = vand.u32 %v195, 4294901760
        %759 = vmatpush2.msra.mxu0 %v758
        %760 = vmatprep.subr.mxu0 0.0
        %v761 = vand.u32 %v194, 4294901760
        %762 = vmatpush2.msra.mxu0 %v761
        %763 = vmatprep.subr.mxu0 0.0
        %v764 = vand.u32 %v193, 4294901760
        %765 = vmatpush2.msra.mxu0 %v764
        %766 = vmatprep.subr.mxu0 0.0
        %v767 = vand.u32 %v192, 4294901760
        %768 = vmatpush2.msra.mxu0 %v767
        %769 = vmatprep.subr.mxu0 0.0
        %v770 = vand.u32 %v191, 4294901760
        %771 = vmatpush2.msra.mxu0 %v770
        %772 = vmatprep.subr.mxu0 0.0
        %v773 = vand.u32 %v190, 4294901760
        %774 = vmatpush2.msra.mxu0 %v773
        %775 = vmatprep.subr.mxu0 0.0
        %v776 = vand.u32 %v189, 4294901760
        %777 = vmatpush2.msra.mxu0 %v776
        %778 = vmatprep.subr.mxu0 0.0
        %v779 = vand.u32 %v188, 4294901760
        %780 = vmatpush2.msra.mxu0 %v779
        %781 = vmatprep.subr.mxu0 0.0
        %v782 = vand.u32 %v187, 4294901760
        %783 = vmatpush2.msra.mxu0 %v782
        %v784 = vand.u32 %v204, 4294901760
        %v785 = vsub.f32 %v204, %v784
        %v786 = vand.u32 %v785, 4294901760
        %787 = vmatprep.mubr.f32.mxu0 %v786
        %v788 = vand.u32 %v170, 4294901760
        %v789 = vsub.f32 %v170, %v788
        %v790 = vand.u32 %v789, 4294901760
        %791 = vmatmul.mubr.f32.gmra.mxu0 %v790
        %v792 = vpop.f32.mrf.mxu0
        %v793 = vadd.f32 %v685, %v792
        %v794 = vpop.f32.mrf.mxu0
        %795 = vdwg.mxu0
        %796 = vmatprep.subr.mxu0 0.0
        %v797 = vand.u32 %v186, 4294901760
        %v798 = vsub.f32 %v186, %v797
        %v799 = vand.u32 %v798, 4294901760
        %800 = vmatpush1.msra.mxu0 %v799
        %801 = vmatprep.subr.mxu0 0.0
        %v802 = vand.u32 %v185, 4294901760
        %v803 = vsub.f32 %v185, %v802
        %v804 = vand.u32 %v803, 4294901760
        %805 = vmatpush1.msra.mxu0 %v804
        %806 = vmatprep.subr.mxu0 0.0
        %v807 = vand.u32 %v184, 4294901760
        %v808 = vsub.f32 %v184, %v807
        %v809 = vand.u32 %v808, 4294901760
        %810 = vmatpush1.msra.mxu0 %v809
        %811 = vmatprep.subr.mxu0 0.0
        %v812 = vand.u32 %v183, 4294901760
        %v813 = vsub.f32 %v183, %v812
        %v814 = vand.u32 %v813, 4294901760
        %815 = vmatpush1.msra.mxu0 %v814
        %816 = vmatprep.subr.mxu0 0.0
        %v817 = vand.u32 %v182, 4294901760
        %v818 = vsub.f32 %v182, %v817
        %v819 = vand.u32 %v818, 4294901760
        %820 = vmatpush1.msra.mxu0 %v819
        %821 = vmatprep.subr.mxu0 0.0
        %v822 = vand.u32 %v181, 4294901760
        %v823 = vsub.f32 %v181, %v822
        %v824 = vand.u32 %v823, 4294901760
        %825 = vmatpush1.msra.mxu0 %v824
        %826 = vmatprep.subr.mxu0 0.0
        %v827 = vand.u32 %v180, 4294901760
        %v828 = vsub.f32 %v180, %v827
        %v829 = vand.u32 %v828, 4294901760
        %830 = vmatpush1.msra.mxu0 %v829
        %831 = vmatprep.subr.mxu0 0.0
        %v832 = vand.u32 %v179, 4294901760
        %v833 = vsub.f32 %v179, %v832
        %v834 = vand.u32 %v833, 4294901760
        %835 = vmatpush1.msra.mxu0 %v834
        %836 = vmatprep.subr.mxu0 0.0
        %v837 = vand.u32 %v178, 4294901760
        %v838 = vsub.f32 %v178, %v837
        %v839 = vand.u32 %v838, 4294901760
        %840 = vmatpush1.msra.mxu0 %v839
        %841 = vmatprep.subr.mxu0 0.0
        %v842 = vand.u32 %v177, 4294901760
        %v843 = vsub.f32 %v177, %v842
        %v844 = vand.u32 %v843, 4294901760
        %845 = vmatpush1.msra.mxu0 %v844
        %846 = vmatprep.subr.mxu0 0.0
        %v847 = vand.u32 %v176, 4294901760
        %v848 = vsub.f32 %v176, %v847
        %v849 = vand.u32 %v848, 4294901760
        %850 = vmatpush1.msra.mxu0 %v849
        %851 = vmatprep.subr.mxu0 0.0
        %v852 = vand.u32 %v175, 4294901760
        %v853 = vsub.f32 %v175, %v852
        %v854 = vand.u32 %v853, 4294901760
        %855 = vmatpush1.msra.mxu0 %v854
        %856 = vmatprep.subr.mxu0 0.0
        %v857 = vand.u32 %v174, 4294901760
        %v858 = vsub.f32 %v174, %v857
        %v859 = vand.u32 %v858, 4294901760
        %860 = vmatpush1.msra.mxu0 %v859
        %861 = vmatprep.subr.mxu0 0.0
        %v862 = vand.u32 %v173, 4294901760
        %v863 = vsub.f32 %v173, %v862
        %v864 = vand.u32 %v863, 4294901760
        %865 = vmatpush1.msra.mxu0 %v864
        %866 = vmatprep.subr.mxu0 0.0
        %v867 = vand.u32 %v172, 4294901760
        %v868 = vsub.f32 %v172, %v867
        %v869 = vand.u32 %v868, 4294901760
        %870 = vmatpush1.msra.mxu0 %v869
        %871 = vmatprep.subr.mxu0 0.0
        %v872 = vand.u32 %v171, 4294901760
        %v873 = vsub.f32 %v171, %v872
        %v874 = vand.u32 %v873, 4294901760
        %875 = vmatpush1.msra.mxu0 %v874
        %876 = vmatprep.subr.mxu0 0.0
        %v877 = vand.u32 %v202, 4294901760
        %v878 = vsub.f32 %v202, %v877
        %v879 = vand.u32 %v878, 4294901760
        %880 = vmatpush2.msra.mxu0 %v879
        %881 = vmatprep.subr.mxu0 0.0
        %v882 = vand.u32 %v201, 4294901760
        %v883 = vsub.f32 %v201, %v882
        %v884 = vand.u32 %v883, 4294901760
        %885 = vmatpush2.msra.mxu0 %v884
        %886 = vmatprep.subr.mxu0 0.0
        %v887 = vand.u32 %v200, 4294901760
        %v888 = vsub.f32 %v200, %v887
        %v889 = vand.u32 %v888, 4294901760
        %890 = vmatpush2.msra.mxu0 %v889
        %891 = vmatprep.subr.mxu0 0.0
        %v892 = vand.u32 %v199, 4294901760
        %v893 = vsub.f32 %v199, %v892
        %v894 = vand.u32 %v893, 4294901760
        %895 = vmatpush2.msra.mxu0 %v894
        %896 = vmatprep.subr.mxu0 0.0
        %v897 = vand.u32 %v198, 4294901760
        %v898 = vsub.f32 %v198, %v897
        %v899 = vand.u32 %v898, 4294901760
        %900 = vmatpush2.msra.mxu0 %v899
        %901 = vmatprep.subr.mxu0 0.0
        %v902 = vand.u32 %v197, 4294901760
        %v903 = vsub.f32 %v197, %v902
        %v904 = vand.u32 %v903, 4294901760
        %905 = vmatpush2.msra.mxu0 %v904
        %906 = vmatprep.subr.mxu0 0.0
        %v907 = vand.u32 %v196, 4294901760
        %v908 = vsub.f32 %v196, %v907
        %v909 = vand.u32 %v908, 4294901760
        %910 = vmatpush2.msra.mxu0 %v909
        %911 = vmatprep.subr.mxu0 0.0
        %v912 = vand.u32 %v195, 4294901760
        %v913 = vsub.f32 %v195, %v912
        %v914 = vand.u32 %v913, 4294901760
        %915 = vmatpush2.msra.mxu0 %v914
        %916 = vmatprep.subr.mxu0 0.0
        %v917 = vand.u32 %v194, 4294901760
        %v918 = vsub.f32 %v194, %v917
        %v919 = vand.u32 %v918, 4294901760
        %920 = vmatpush2.msra.mxu0 %v919
        %921 = vmatprep.subr.mxu0 0.0
        %v922 = vand.u32 %v193, 4294901760
        %v923 = vsub.f32 %v193, %v922
        %v924 = vand.u32 %v923, 4294901760
        %925 = vmatpush2.msra.mxu0 %v924
        %926 = vmatprep.subr.mxu0 0.0
        %v927 = vand.u32 %v192, 4294901760
        %v928 = vsub.f32 %v192, %v927
        %v929 = vand.u32 %v928, 4294901760
        %930 = vmatpush2.msra.mxu0 %v929
        %931 = vmatprep.subr.mxu0 0.0
        %v932 = vand.u32 %v191, 4294901760
        %v933 = vsub.f32 %v191, %v932
        %v934 = vand.u32 %v933, 4294901760
        %935 = vmatpush2.msra.mxu0 %v934
        %936 = vmatprep.subr.mxu0 0.0
        %v937 = vand.u32 %v190, 4294901760
        %v938 = vsub.f32 %v190, %v937
        %v939 = vand.u32 %v938, 4294901760
        %940 = vmatpush2.msra.mxu0 %v939
        %941 = vmatprep.subr.mxu0 0.0
        %v942 = vand.u32 %v189, 4294901760
        %v943 = vsub.f32 %v189, %v942
        %v944 = vand.u32 %v943, 4294901760
        %945 = vmatpush2.msra.mxu0 %v944
        %946 = vmatprep.subr.mxu0 0.0
        %v947 = vand.u32 %v188, 4294901760
        %v948 = vsub.f32 %v188, %v947
        %v949 = vand.u32 %v948, 4294901760
        %950 = vmatpush2.msra.mxu0 %v949
        %951 = vmatprep.subr.mxu0 0.0
        %v952 = vand.u32 %v187, 4294901760
        %v953 = vsub.f32 %v187, %v952
        %v954 = vand.u32 %v953, 4294901760
        %955 = vmatpush2.msra.mxu0 %v954
        %v956 = vand.u32 %v204, 4294901760
        %957 = vmatprep.mubr.f32.mxu0 %v956
        %v958 = vand.u32 %v170, 4294901760
        %959 = vmatmul.mubr.f32.gmra.mxu0 %v958
        %v960 = vpop.f32.mrf.mxu0
        %v961 = vadd.f32 %v793, %v960
        %v962 = vpop.f32.mrf.mxu0
        %963 = vdwg.mxu0
        %964 = vmatprep.subr.mxu0 0.0
        %v965 = vand.u32 %v186, 4294901760
        %966 = vmatpush1.msra.mxu0 %v965
        %967 = vmatprep.subr.mxu0 0.0
        %v968 = vand.u32 %v185, 4294901760
        %969 = vmatpush1.msra.mxu0 %v968
        %970 = vmatprep.subr.mxu0 0.0
        %v971 = vand.u32 %v184, 4294901760
        %972 = vmatpush1.msra.mxu0 %v971
        %973 = vmatprep.subr.mxu0 0.0
        %v974 = vand.u32 %v183, 4294901760
        %975 = vmatpush1.msra.mxu0 %v974
        %976 = vmatprep.subr.mxu0 0.0
        %v977 = vand.u32 %v182, 4294901760
        %978 = vmatpush1.msra.mxu0 %v977
        %979 = vmatprep.subr.mxu0 0.0
        %v980 = vand.u32 %v181, 4294901760
        %981 = vmatpush1.msra.mxu0 %v980
        %982 = vmatprep.subr.mxu0 0.0
        %v983 = vand.u32 %v180, 4294901760
        %984 = vmatpush1.msra.mxu0 %v983
        %985 = vmatprep.subr.mxu0 0.0
        %v986 = vand.u32 %v179, 4294901760
        %987 = vmatpush1.msra.mxu0 %v986
        %988 = vmatprep.subr.mxu0 0.0
        %v989 = vand.u32 %v178, 4294901760
        %990 = vmatpush1.msra.mxu0 %v989
        %991 = vmatprep.subr.mxu0 0.0
        %v992 = vand.u32 %v177, 4294901760
        %993 = vmatpush1.msra.mxu0 %v992
        %994 = vmatprep.subr.mxu0 0.0
        %v995 = vand.u32 %v176, 4294901760
        %996 = vmatpush1.msra.mxu0 %v995
        %997 = vmatprep.subr.mxu0 0.0
        %v998 = vand.u32 %v175, 4294901760
        %999 = vmatpush1.msra.mxu0 %v998
        %1000 = vmatprep.subr.mxu0 0.0
        %v1001 = vand.u32 %v174, 4294901760
        %1002 = vmatpush1.msra.mxu0 %v1001
        %1003 = vmatprep.subr.mxu0 0.0
        %v1004 = vand.u32 %v173, 4294901760
        %1005 = vmatpush1.msra.mxu0 %v1004
        %1006 = vmatprep.subr.mxu0 0.0
        %v1007 = vand.u32 %v172, 4294901760
        %1008 = vmatpush1.msra.mxu0 %v1007
        %1009 = vmatprep.subr.mxu0 0.0
        %v1010 = vand.u32 %v171, 4294901760
        %1011 = vmatpush1.msra.mxu0 %v1010
        %1012 = vmatprep.subr.mxu0 0.0
        %v1013 = vand.u32 %v202, 4294901760
        %1014 = vmatpush2.msra.mxu0 %v1013
        %1015 = vmatprep.subr.mxu0 0.0
        %v1016 = vand.u32 %v201, 4294901760
        %1017 = vmatpush2.msra.mxu0 %v1016
        %1018 = vmatprep.subr.mxu0 0.0
        %v1019 = vand.u32 %v200, 4294901760
        %1020 = vmatpush2.msra.mxu0 %v1019
        %1021 = vmatprep.subr.mxu0 0.0
        %v1022 = vand.u32 %v199, 4294901760
        %1023 = vmatpush2.msra.mxu0 %v1022
        %1024 = vmatprep.subr.mxu0 0.0
        %v1025 = vand.u32 %v198, 4294901760
        %1026 = vmatpush2.msra.mxu0 %v1025
        %1027 = vmatprep.subr.mxu0 0.0
        %v1028 = vand.u32 %v197, 4294901760
        %1029 = vmatpush2.msra.mxu0 %v1028
        %1030 = vmatprep.subr.mxu0 0.0
        %v1031 = vand.u32 %v196, 4294901760
        %1032 = vmatpush2.msra.mxu0 %v1031
        %1033 = vmatprep.subr.mxu0 0.0
        %v1034 = vand.u32 %v195, 4294901760
        %1035 = vmatpush2.msra.mxu0 %v1034
        %1036 = vmatprep.subr.mxu0 0.0
        %v1037 = vand.u32 %v194, 4294901760
        %1038 = vmatpush2.msra.mxu0 %v1037
        %1039 = vmatprep.subr.mxu0 0.0
        %v1040 = vand.u32 %v193, 4294901760
        %1041 = vmatpush2.msra.mxu0 %v1040
        %1042 = vmatprep.subr.mxu0 0.0
        %v1043 = vand.u32 %v192, 4294901760
        %1044 = vmatpush2.msra.mxu0 %v1043
        %1045 = vmatprep.subr.mxu0 0.0
        %v1046 = vand.u32 %v191, 4294901760
        %1047 = vmatpush2.msra.mxu0 %v1046
        %1048 = vmatprep.subr.mxu0 0.0
        %v1049 = vand.u32 %v190, 4294901760
        %1050 = vmatpush2.msra.mxu0 %v1049
        %1051 = vmatprep.subr.mxu0 0.0
        %v1052 = vand.u32 %v189, 4294901760
        %1053 = vmatpush2.msra.mxu0 %v1052
        %1054 = vmatprep.subr.mxu0 0.0
        %v1055 = vand.u32 %v188, 4294901760
        %1056 = vmatpush2.msra.mxu0 %v1055
        %1057 = vmatprep.subr.mxu0 0.0
        %v1058 = vand.u32 %v187, 4294901760
        %1059 = vmatpush2.msra.mxu0 %v1058
        %v1060 = vand.u32 %v204, 4294901760
        %1061 = vmatprep.mubr.f32.mxu0 %v1060
        %v1062 = vand.u32 %v170, 4294901760
        %1063 = vmatmul.mubr.f32.gmra.mxu0 %v1062
        %v1064 = vpop.f32.mrf.mxu0
        %v1065 = vadd.f32 %v961, %v1064
        %v1066 = vpop.f32.mrf.mxu0
        %1067 = vdwg.mxu0
        %vm1068 = vcmask 519168
        %1069 = vst.msk [vmem:[%s160] sm:$0xf] %vm1068, %v1065
        %v1070 = vld [vmem:[%s169] sm:$0xff]
        %s1071 = scalar_lea.vmem %s1, 256
        %v1072 = vld [vmem:[%s1071] sm:$0xff]
        %v1073 = vld [vmem:[%s1071 + $0x8] sm:$0xff]
        %v1074 = vld [vmem:[%s1071 + $0x10] sm:$0xff]
        %v1075 = vld [vmem:[%s1071 + $0x18] sm:$0xff]
        %v1076 = vld [vmem:[%s1071 + $0x20] sm:$0xff]
        %v1077 = vld [vmem:[%s1071 + $0x28] sm:$0xff]
        %v1078 = vld [vmem:[%s1071 + $0x30] sm:$0xff]
        %v1079 = vld [vmem:[%s1071 + $0x38] sm:$0xff]
        %v1080 = vld [vmem:[%s1071 + $0x40] sm:$0xff]
        %v1081 = vld [vmem:[%s1071 + $0x48] sm:$0xff]
        %v1082 = vld [vmem:[%s1071 + $0x50] sm:$0xff]
        %v1083 = vld [vmem:[%s1071 + $0x58] sm:$0xff]
        %v1084 = vld [vmem:[%s1071 + $0x60] sm:$0xff]
        %v1085 = vld [vmem:[%s1071 + $0x68] sm:$0xff]
        %v1086 = vld [vmem:[%s1071 + $0x70] sm:$0xff]
        %v1087 = vld [vmem:[%s1071 + $0x78] sm:$0xff]
        %v1088 = vld [vmem:[%s1071 + $0x80] sm:$0xff]
        %v1089 = vld [vmem:[%s1071 + $0x88] sm:$0xff]
        %v1090 = vld [vmem:[%s1071 + $0x90] sm:$0xff]
        %v1091 = vld [vmem:[%s1071 + $0x98] sm:$0xff]
        %v1092 = vld [vmem:[%s1071 + $0xa0] sm:$0xff]
        %v1093 = vld [vmem:[%s1071 + $0xa8] sm:$0xff]
        %v1094 = vld [vmem:[%s1071 + $0xb0] sm:$0xff]
        %v1095 = vld [vmem:[%s1071 + $0xb8] sm:$0xff]
        %v1096 = vld [vmem:[%s1071 + $0xc0] sm:$0xff]
        %v1097 = vld [vmem:[%s1071 + $0xc8] sm:$0xff]
        %v1098 = vld [vmem:[%s1071 + $0xd0] sm:$0xff]
        %v1099 = vld [vmem:[%s1071 + $0xd8] sm:$0xff]
        %v1100 = vld [vmem:[%s1071 + $0xe0] sm:$0xff]
        %v1101 = vld [vmem:[%s1071 + $0xe8] sm:$0xff]
        %v1102 = vld [vmem:[%s1071 + $0xf0] sm:$0xff]
        %v1103 = vld [vmem:[%s1071 + $0xf8] sm:$0xff]
        %v1105 = vcombine.high %v1070, %v1070
        %1107 = vmatprep.subr.mxu0 0.0
        %v1108 = vand.u32 %v1087, 4294901760
        %1109 = vmatpush1.msra.mxu0 %v1108
        %1110 = vmatprep.subr.mxu0 0.0
        %v1111 = vand.u32 %v1086, 4294901760
        %1112 = vmatpush1.msra.mxu0 %v1111
        %1113 = vmatprep.subr.mxu0 0.0
        %v1114 = vand.u32 %v1085, 4294901760
        %1115 = vmatpush1.msra.mxu0 %v1114
        %1116 = vmatprep.subr.mxu0 0.0
        %v1117 = vand.u32 %v1084, 4294901760
        %1118 = vmatpush1.msra.mxu0 %v1117
        %1119 = vmatprep.subr.mxu0 0.0
        %v1120 = vand.u32 %v1083, 4294901760
        %1121 = vmatpush1.msra.mxu0 %v1120
        %1122 = vmatprep.subr.mxu0 0.0
        %v1123 = vand.u32 %v1082, 4294901760
        %1124 = vmatpush1.msra.mxu0 %v1123
        %1125 = vmatprep.subr.mxu0 0.0
        %v1126 = vand.u32 %v1081, 4294901760
        %1127 = vmatpush1.msra.mxu0 %v1126
        %1128 = vmatprep.subr.mxu0 0.0
        %v1129 = vand.u32 %v1080, 4294901760
        %1130 = vmatpush1.msra.mxu0 %v1129
        %1131 = vmatprep.subr.mxu0 0.0
        %v1132 = vand.u32 %v1079, 4294901760
        %1133 = vmatpush1.msra.mxu0 %v1132
        %1134 = vmatprep.subr.mxu0 0.0
        %v1135 = vand.u32 %v1078, 4294901760
        %1136 = vmatpush1.msra.mxu0 %v1135
        %1137 = vmatprep.subr.mxu0 0.0
        %v1138 = vand.u32 %v1077, 4294901760
        %1139 = vmatpush1.msra.mxu0 %v1138
        %1140 = vmatprep.subr.mxu0 0.0
        %v1141 = vand.u32 %v1076, 4294901760
        %1142 = vmatpush1.msra.mxu0 %v1141
        %1143 = vmatprep.subr.mxu0 0.0
        %v1144 = vand.u32 %v1075, 4294901760
        %1145 = vmatpush1.msra.mxu0 %v1144
        %1146 = vmatprep.subr.mxu0 0.0
        %v1147 = vand.u32 %v1074, 4294901760
        %1148 = vmatpush1.msra.mxu0 %v1147
        %1149 = vmatprep.subr.mxu0 0.0
        %v1150 = vand.u32 %v1073, 4294901760
        %1151 = vmatpush1.msra.mxu0 %v1150
        %1152 = vmatprep.subr.mxu0 0.0
        %v1153 = vand.u32 %v1072, 4294901760
        %1154 = vmatpush1.msra.mxu0 %v1153
        %1155 = vmatprep.subr.mxu0 0.0
        %v1156 = vand.u32 %v1103, 4294901760
        %1157 = vmatpush2.msra.mxu0 %v1156
        %1158 = vmatprep.subr.mxu0 0.0
        %v1159 = vand.u32 %v1102, 4294901760
        %1160 = vmatpush2.msra.mxu0 %v1159
        %1161 = vmatprep.subr.mxu0 0.0
        %v1162 = vand.u32 %v1101, 4294901760
        %1163 = vmatpush2.msra.mxu0 %v1162
        %1164 = vmatprep.subr.mxu0 0.0
        %v1165 = vand.u32 %v1100, 4294901760
        %1166 = vmatpush2.msra.mxu0 %v1165
        %1167 = vmatprep.subr.mxu0 0.0
        %v1168 = vand.u32 %v1099, 4294901760
        %1169 = vmatpush2.msra.mxu0 %v1168
        %1170 = vmatprep.subr.mxu0 0.0
        %v1171 = vand.u32 %v1098, 4294901760
        %1172 = vmatpush2.msra.mxu0 %v1171
        %1173 = vmatprep.subr.mxu0 0.0
        %v1174 = vand.u32 %v1097, 4294901760
        %1175 = vmatpush2.msra.mxu0 %v1174
        %1176 = vmatprep.subr.mxu0 0.0
        %v1177 = vand.u32 %v1096, 4294901760
        %1178 = vmatpush2.msra.mxu0 %v1177
        %1179 = vmatprep.subr.mxu0 0.0
        %v1180 = vand.u32 %v1095, 4294901760
        %1181 = vmatpush2.msra.mxu0 %v1180
        %1182 = vmatprep.subr.mxu0 0.0
        %v1183 = vand.u32 %v1094, 4294901760
        %1184 = vmatpush2.msra.mxu0 %v1183
        %1185 = vmatprep.subr.mxu0 0.0
        %v1186 = vand.u32 %v1093, 4294901760
        %1187 = vmatpush2.msra.mxu0 %v1186
        %1188 = vmatprep.subr.mxu0 0.0
        %v1189 = vand.u32 %v1092, 4294901760
        %1190 = vmatpush2.msra.mxu0 %v1189
        %1191 = vmatprep.subr.mxu0 0.0
        %v1192 = vand.u32 %v1091, 4294901760
        %1193 = vmatpush2.msra.mxu0 %v1192
        %1194 = vmatprep.subr.mxu0 0.0
        %v1195 = vand.u32 %v1090, 4294901760
        %1196 = vmatpush2.msra.mxu0 %v1195
        %1197 = vmatprep.subr.mxu0 0.0
        %v1198 = vand.u32 %v1089, 4294901760
        %1199 = vmatpush2.msra.mxu0 %v1198
        %1200 = vmatprep.subr.mxu0 0.0
        %v1201 = vand.u32 %v1088, 4294901760
        %1202 = vmatpush2.msra.mxu0 %v1201
        %v1203 = vand.u32 %v1105, 4294901760
        %v1204 = vsub.f32 %v1105, %v1203
        %v1205 = vand.u32 %v1204, 4294901760
        %v1206 = vsub.f32 %v1204, %v1205
        %v1207 = vand.u32 %v1206, 4294901760
        %1208 = vmatprep.mubr.f32.mxu0 %v1207
        %v1209 = vand.u32 %v1070, 4294901760
        %v1210 = vsub.f32 %v1070, %v1209
        %v1211 = vand.u32 %v1210, 4294901760
        %v1212 = vsub.f32 %v1210, %v1211
        %v1213 = vand.u32 %v1212, 4294901760
        %1214 = vmatmul.mubr.f32.gmra.mxu0 %v1213
        %v1215 = vpop.f32.mrf.mxu0
        %v1216 = vadd.f32 0.0, %v1215
        %v1217 = vpop.f32.mrf.mxu0
        %1218 = vdwg.mxu0
        %1219 = vmatprep.subr.mxu0 0.0
        %v1220 = vand.u32 %v1087, 4294901760
        %v1221 = vsub.f32 %v1087, %v1220
        %v1222 = vand.u32 %v1221, 4294901760
        %v1223 = vsub.f32 %v1221, %v1222
        %v1224 = vand.u32 %v1223, 4294901760
        %1225 = vmatpush1.msra.mxu0 %v1224
        %1226 = vmatprep.subr.mxu0 0.0
        %v1227 = vand.u32 %v1086, 4294901760
        %v1228 = vsub.f32 %v1086, %v1227
        %v1229 = vand.u32 %v1228, 4294901760
        %v1230 = vsub.f32 %v1228, %v1229
        %v1231 = vand.u32 %v1230, 4294901760
        %1232 = vmatpush1.msra.mxu0 %v1231
        %1233 = vmatprep.subr.mxu0 0.0
        %v1234 = vand.u32 %v1085, 4294901760
        %v1235 = vsub.f32 %v1085, %v1234
        %v1236 = vand.u32 %v1235, 4294901760
        %v1237 = vsub.f32 %v1235, %v1236
        %v1238 = vand.u32 %v1237, 4294901760
        %1239 = vmatpush1.msra.mxu0 %v1238
        %1240 = vmatprep.subr.mxu0 0.0
        %v1241 = vand.u32 %v1084, 4294901760
        %v1242 = vsub.f32 %v1084, %v1241
        %v1243 = vand.u32 %v1242, 4294901760
        %v1244 = vsub.f32 %v1242, %v1243
        %v1245 = vand.u32 %v1244, 4294901760
        %1246 = vmatpush1.msra.mxu0 %v1245
        %1247 = vmatprep.subr.mxu0 0.0
        %v1248 = vand.u32 %v1083, 4294901760
        %v1249 = vsub.f32 %v1083, %v1248
        %v1250 = vand.u32 %v1249, 4294901760
        %v1251 = vsub.f32 %v1249, %v1250
        %v1252 = vand.u32 %v1251, 4294901760
        %1253 = vmatpush1.msra.mxu0 %v1252
        %1254 = vmatprep.subr.mxu0 0.0
        %v1255 = vand.u32 %v1082, 4294901760
        %v1256 = vsub.f32 %v1082, %v1255
        %v1257 = vand.u32 %v1256, 4294901760
        %v1258 = vsub.f32 %v1256, %v1257
        %v1259 = vand.u32 %v1258, 4294901760
        %1260 = vmatpush1.msra.mxu0 %v1259
        %1261 = vmatprep.subr.mxu0 0.0
        %v1262 = vand.u32 %v1081, 4294901760
        %v1263 = vsub.f32 %v1081, %v1262
        %v1264 = vand.u32 %v1263, 4294901760
        %v1265 = vsub.f32 %v1263, %v1264
        %v1266 = vand.u32 %v1265, 4294901760
        %1267 = vmatpush1.msra.mxu0 %v1266
        %1268 = vmatprep.subr.mxu0 0.0
        %v1269 = vand.u32 %v1080, 4294901760
        %v1270 = vsub.f32 %v1080, %v1269
        %v1271 = vand.u32 %v1270, 4294901760
        %v1272 = vsub.f32 %v1270, %v1271
        %v1273 = vand.u32 %v1272, 4294901760
        %1274 = vmatpush1.msra.mxu0 %v1273
        %1275 = vmatprep.subr.mxu0 0.0
        %v1276 = vand.u32 %v1079, 4294901760
        %v1277 = vsub.f32 %v1079, %v1276
        %v1278 = vand.u32 %v1277, 4294901760
        %v1279 = vsub.f32 %v1277, %v1278
        %v1280 = vand.u32 %v1279, 4294901760
        %1281 = vmatpush1.msra.mxu0 %v1280
        %1282 = vmatprep.subr.mxu0 0.0
        %v1283 = vand.u32 %v1078, 4294901760
        %v1284 = vsub.f32 %v1078, %v1283
        %v1285 = vand.u32 %v1284, 4294901760
        %v1286 = vsub.f32 %v1284, %v1285
        %v1287 = vand.u32 %v1286, 4294901760
        %1288 = vmatpush1.msra.mxu0 %v1287
        %1289 = vmatprep.subr.mxu0 0.0
        %v1290 = vand.u32 %v1077, 4294901760
        %v1291 = vsub.f32 %v1077, %v1290
        %v1292 = vand.u32 %v1291, 4294901760
        %v1293 = vsub.f32 %v1291, %v1292
        %v1294 = vand.u32 %v1293, 4294901760
        %1295 = vmatpush1.msra.mxu0 %v1294
        %1296 = vmatprep.subr.mxu0 0.0
        %v1297 = vand.u32 %v1076, 4294901760
        %v1298 = vsub.f32 %v1076, %v1297
        %v1299 = vand.u32 %v1298, 4294901760
        %v1300 = vsub.f32 %v1298, %v1299
        %v1301 = vand.u32 %v1300, 4294901760
        %1302 = vmatpush1.msra.mxu0 %v1301
        %1303 = vmatprep.subr.mxu0 0.0
        %v1304 = vand.u32 %v1075, 4294901760
        %v1305 = vsub.f32 %v1075, %v1304
        %v1306 = vand.u32 %v1305, 4294901760
        %v1307 = vsub.f32 %v1305, %v1306
        %v1308 = vand.u32 %v1307, 4294901760
        %1309 = vmatpush1.msra.mxu0 %v1308
        %1310 = vmatprep.subr.mxu0 0.0
        %v1311 = vand.u32 %v1074, 4294901760
        %v1312 = vsub.f32 %v1074, %v1311
        %v1313 = vand.u32 %v1312, 4294901760
        %v1314 = vsub.f32 %v1312, %v1313
        %v1315 = vand.u32 %v1314, 4294901760
        %1316 = vmatpush1.msra.mxu0 %v1315
        %1317 = vmatprep.subr.mxu0 0.0
        %v1318 = vand.u32 %v1073, 4294901760
        %v1319 = vsub.f32 %v1073, %v1318
        %v1320 = vand.u32 %v1319, 4294901760
        %v1321 = vsub.f32 %v1319, %v1320
        %v1322 = vand.u32 %v1321, 4294901760
        %1323 = vmatpush1.msra.mxu0 %v1322
        %1324 = vmatprep.subr.mxu0 0.0
        %v1325 = vand.u32 %v1072, 4294901760
        %v1326 = vsub.f32 %v1072, %v1325
        %v1327 = vand.u32 %v1326, 4294901760
        %v1328 = vsub.f32 %v1326, %v1327
        %v1329 = vand.u32 %v1328, 4294901760
        %1330 = vmatpush1.msra.mxu0 %v1329
        %1331 = vmatprep.subr.mxu0 0.0
        %v1332 = vand.u32 %v1103, 4294901760
        %v1333 = vsub.f32 %v1103, %v1332
        %v1334 = vand.u32 %v1333, 4294901760
        %v1335 = vsub.f32 %v1333, %v1334
        %v1336 = vand.u32 %v1335, 4294901760
        %1337 = vmatpush2.msra.mxu0 %v1336
        %1338 = vmatprep.subr.mxu0 0.0
        %v1339 = vand.u32 %v1102, 4294901760
        %v1340 = vsub.f32 %v1102, %v1339
        %v1341 = vand.u32 %v1340, 4294901760
        %v1342 = vsub.f32 %v1340, %v1341
        %v1343 = vand.u32 %v1342, 4294901760
        %1344 = vmatpush2.msra.mxu0 %v1343
        %1345 = vmatprep.subr.mxu0 0.0
        %v1346 = vand.u32 %v1101, 4294901760
        %v1347 = vsub.f32 %v1101, %v1346
        %v1348 = vand.u32 %v1347, 4294901760
        %v1349 = vsub.f32 %v1347, %v1348
        %v1350 = vand.u32 %v1349, 4294901760
        %1351 = vmatpush2.msra.mxu0 %v1350
        %1352 = vmatprep.subr.mxu0 0.0
        %v1353 = vand.u32 %v1100, 4294901760
        %v1354 = vsub.f32 %v1100, %v1353
        %v1355 = vand.u32 %v1354, 4294901760
        %v1356 = vsub.f32 %v1354, %v1355
        %v1357 = vand.u32 %v1356, 4294901760
        %1358 = vmatpush2.msra.mxu0 %v1357
        %1359 = vmatprep.subr.mxu0 0.0
        %v1360 = vand.u32 %v1099, 4294901760
        %v1361 = vsub.f32 %v1099, %v1360
        %v1362 = vand.u32 %v1361, 4294901760
        %v1363 = vsub.f32 %v1361, %v1362
        %v1364 = vand.u32 %v1363, 4294901760
        %1365 = vmatpush2.msra.mxu0 %v1364
        %1366 = vmatprep.subr.mxu0 0.0
        %v1367 = vand.u32 %v1098, 4294901760
        %v1368 = vsub.f32 %v1098, %v1367
        %v1369 = vand.u32 %v1368, 4294901760
        %v1370 = vsub.f32 %v1368, %v1369
        %v1371 = vand.u32 %v1370, 4294901760
        %1372 = vmatpush2.msra.mxu0 %v1371
        %1373 = vmatprep.subr.mxu0 0.0
        %v1374 = vand.u32 %v1097, 4294901760
        %v1375 = vsub.f32 %v1097, %v1374
        %v1376 = vand.u32 %v1375, 4294901760
        %v1377 = vsub.f32 %v1375, %v1376
        %v1378 = vand.u32 %v1377, 4294901760
        %1379 = vmatpush2.msra.mxu0 %v1378
        %1380 = vmatprep.subr.mxu0 0.0
        %v1381 = vand.u32 %v1096, 4294901760
        %v1382 = vsub.f32 %v1096, %v1381
        %v1383 = vand.u32 %v1382, 4294901760
        %v1384 = vsub.f32 %v1382, %v1383
        %v1385 = vand.u32 %v1384, 4294901760
        %1386 = vmatpush2.msra.mxu0 %v1385
        %1387 = vmatprep.subr.mxu0 0.0
        %v1388 = vand.u32 %v1095, 4294901760
        %v1389 = vsub.f32 %v1095, %v1388
        %v1390 = vand.u32 %v1389, 4294901760
        %v1391 = vsub.f32 %v1389, %v1390
        %v1392 = vand.u32 %v1391, 4294901760
        %1393 = vmatpush2.msra.mxu0 %v1392
        %1394 = vmatprep.subr.mxu0 0.0
        %v1395 = vand.u32 %v1094, 4294901760
        %v1396 = vsub.f32 %v1094, %v1395
        %v1397 = vand.u32 %v1396, 4294901760
        %v1398 = vsub.f32 %v1396, %v1397
        %v1399 = vand.u32 %v1398, 4294901760
        %1400 = vmatpush2.msra.mxu0 %v1399
        %1401 = vmatprep.subr.mxu0 0.0
        %v1402 = vand.u32 %v1093, 4294901760
        %v1403 = vsub.f32 %v1093, %v1402
        %v1404 = vand.u32 %v1403, 4294901760
        %v1405 = vsub.f32 %v1403, %v1404
        %v1406 = vand.u32 %v1405, 4294901760
        %1407 = vmatpush2.msra.mxu0 %v1406
        %1408 = vmatprep.subr.mxu0 0.0
        %v1409 = vand.u32 %v1092, 4294901760
        %v1410 = vsub.f32 %v1092, %v1409
        %v1411 = vand.u32 %v1410, 4294901760
        %v1412 = vsub.f32 %v1410, %v1411
        %v1413 = vand.u32 %v1412, 4294901760
        %1414 = vmatpush2.msra.mxu0 %v1413
        %1415 = vmatprep.subr.mxu0 0.0
        %v1416 = vand.u32 %v1091, 4294901760
        %v1417 = vsub.f32 %v1091, %v1416
        %v1418 = vand.u32 %v1417, 4294901760
        %v1419 = vsub.f32 %v1417, %v1418
        %v1420 = vand.u32 %v1419, 4294901760
        %1421 = vmatpush2.msra.mxu0 %v1420
        %1422 = vmatprep.subr.mxu0 0.0
        %v1423 = vand.u32 %v1090, 4294901760
        %v1424 = vsub.f32 %v1090, %v1423
        %v1425 = vand.u32 %v1424, 4294901760
        %v1426 = vsub.f32 %v1424, %v1425
        %v1427 = vand.u32 %v1426, 4294901760
        %1428 = vmatpush2.msra.mxu0 %v1427
        %1429 = vmatprep.subr.mxu0 0.0
        %v1430 = vand.u32 %v1089, 4294901760
        %v1431 = vsub.f32 %v1089, %v1430
        %v1432 = vand.u32 %v1431, 4294901760
        %v1433 = vsub.f32 %v1431, %v1432
        %v1434 = vand.u32 %v1433, 4294901760
        %1435 = vmatpush2.msra.mxu0 %v1434
        %1436 = vmatprep.subr.mxu0 0.0
        %v1437 = vand.u32 %v1088, 4294901760
        %v1438 = vsub.f32 %v1088, %v1437
        %v1439 = vand.u32 %v1438, 4294901760
        %v1440 = vsub.f32 %v1438, %v1439
        %v1441 = vand.u32 %v1440, 4294901760
        %1442 = vmatpush2.msra.mxu0 %v1441
        %v1443 = vand.u32 %v1105, 4294901760
        %1444 = vmatprep.mubr.f32.mxu0 %v1443
        %v1445 = vand.u32 %v1070, 4294901760
        %1446 = vmatmul.mubr.f32.gmra.mxu0 %v1445
        %v1447 = vpop.f32.mrf.mxu0
        %v1448 = vadd.f32 %v1216, %v1447
        %v1449 = vpop.f32.mrf.mxu0
        %1450 = vdwg.mxu0
        %1451 = vmatprep.subr.mxu0 0.0
        %v1452 = vand.u32 %v1087, 4294901760
        %v1453 = vsub.f32 %v1087, %v1452
        %1454 = vmatpush1.msra.mxu0 %v1453
        %1455 = vmatprep.subr.mxu0 0.0
        %v1456 = vand.u32 %v1086, 4294901760
        %v1457 = vsub.f32 %v1086, %v1456
        %1458 = vmatpush1.msra.mxu0 %v1457
        %1459 = vmatprep.subr.mxu0 0.0
        %v1460 = vand.u32 %v1085, 4294901760
        %v1461 = vsub.f32 %v1085, %v1460
        %1462 = vmatpush1.msra.mxu0 %v1461
        %1463 = vmatprep.subr.mxu0 0.0
        %v1464 = vand.u32 %v1084, 4294901760
        %v1465 = vsub.f32 %v1084, %v1464
        %1466 = vmatpush1.msra.mxu0 %v1465
        %1467 = vmatprep.subr.mxu0 0.0
        %v1468 = vand.u32 %v1083, 4294901760
        %v1469 = vsub.f32 %v1083, %v1468
        %1470 = vmatpush1.msra.mxu0 %v1469
        %1471 = vmatprep.subr.mxu0 0.0
        %v1472 = vand.u32 %v1082, 4294901760
        %v1473 = vsub.f32 %v1082, %v1472
        %1474 = vmatpush1.msra.mxu0 %v1473
        %1475 = vmatprep.subr.mxu0 0.0
        %v1476 = vand.u32 %v1081, 4294901760
        %v1477 = vsub.f32 %v1081, %v1476
        %1478 = vmatpush1.msra.mxu0 %v1477
        %1479 = vmatprep.subr.mxu0 0.0
        %v1480 = vand.u32 %v1080, 4294901760
        %v1481 = vsub.f32 %v1080, %v1480
        %1482 = vmatpush1.msra.mxu0 %v1481
        %1483 = vmatprep.subr.mxu0 0.0
        %v1484 = vand.u32 %v1079, 4294901760
        %v1485 = vsub.f32 %v1079, %v1484
        %1486 = vmatpush1.msra.mxu0 %v1485
        %1487 = vmatprep.subr.mxu0 0.0
        %v1488 = vand.u32 %v1078, 4294901760
        %v1489 = vsub.f32 %v1078, %v1488
        %1490 = vmatpush1.msra.mxu0 %v1489
        %1491 = vmatprep.subr.mxu0 0.0
        %v1492 = vand.u32 %v1077, 4294901760
        %v1493 = vsub.f32 %v1077, %v1492
        %1494 = vmatpush1.msra.mxu0 %v1493
        %1495 = vmatprep.subr.mxu0 0.0
        %v1496 = vand.u32 %v1076, 4294901760
        %v1497 = vsub.f32 %v1076, %v1496
        %1498 = vmatpush1.msra.mxu0 %v1497
        %1499 = vmatprep.subr.mxu0 0.0
        %v1500 = vand.u32 %v1075, 4294901760
        %v1501 = vsub.f32 %v1075, %v1500
        %1502 = vmatpush1.msra.mxu0 %v1501
        %1503 = vmatprep.subr.mxu0 0.0
        %v1504 = vand.u32 %v1074, 4294901760
        %v1505 = vsub.f32 %v1074, %v1504
        %1506 = vmatpush1.msra.mxu0 %v1505
        %1507 = vmatprep.subr.mxu0 0.0
        %v1508 = vand.u32 %v1073, 4294901760
        %v1509 = vsub.f32 %v1073, %v1508
        %1510 = vmatpush1.msra.mxu0 %v1509
        %1511 = vmatprep.subr.mxu0 0.0
        %v1512 = vand.u32 %v1072, 4294901760
        %v1513 = vsub.f32 %v1072, %v1512
        %1514 = vmatpush1.msra.mxu0 %v1513
        %1515 = vmatprep.subr.mxu0 0.0
        %v1516 = vand.u32 %v1103, 4294901760
        %v1517 = vsub.f32 %v1103, %v1516
        %1518 = vmatpush2.msra.mxu0 %v1517
        %1519 = vmatprep.subr.mxu0 0.0
        %v1520 = vand.u32 %v1102, 4294901760
        %v1521 = vsub.f32 %v1102, %v1520
        %1522 = vmatpush2.msra.mxu0 %v1521
        %1523 = vmatprep.subr.mxu0 0.0
        %v1524 = vand.u32 %v1101, 4294901760
        %v1525 = vsub.f32 %v1101, %v1524
        %1526 = vmatpush2.msra.mxu0 %v1525
        %1527 = vmatprep.subr.mxu0 0.0
        %v1528 = vand.u32 %v1100, 4294901760
        %v1529 = vsub.f32 %v1100, %v1528
        %1530 = vmatpush2.msra.mxu0 %v1529
        %1531 = vmatprep.subr.mxu0 0.0
        %v1532 = vand.u32 %v1099, 4294901760
        %v1533 = vsub.f32 %v1099, %v1532
        %1534 = vmatpush2.msra.mxu0 %v1533
        %1535 = vmatprep.subr.mxu0 0.0
        %v1536 = vand.u32 %v1098, 4294901760
        %v1537 = vsub.f32 %v1098, %v1536
        %1538 = vmatpush2.msra.mxu0 %v1537
        %1539 = vmatprep.subr.mxu0 0.0
        %v1540 = vand.u32 %v1097, 4294901760
        %v1541 = vsub.f32 %v1097, %v1540
        %1542 = vmatpush2.msra.mxu0 %v1541
        %1543 = vmatprep.subr.mxu0 0.0
        %v1544 = vand.u32 %v1096, 4294901760
        %v1545 = vsub.f32 %v1096, %v1544
        %1546 = vmatpush2.msra.mxu0 %v1545
        %1547 = vmatprep.subr.mxu0 0.0
        %v1548 = vand.u32 %v1095, 4294901760
        %v1549 = vsub.f32 %v1095, %v1548
        %1550 = vmatpush2.msra.mxu0 %v1549
        %1551 = vmatprep.subr.mxu0 0.0
        %v1552 = vand.u32 %v1094, 4294901760
        %v1553 = vsub.f32 %v1094, %v1552
        %1554 = vmatpush2.msra.mxu0 %v1553
        %1555 = vmatprep.subr.mxu0 0.0
        %v1556 = vand.u32 %v1093, 4294901760
        %v1557 = vsub.f32 %v1093, %v1556
        %1558 = vmatpush2.msra.mxu0 %v1557
        %1559 = vmatprep.subr.mxu0 0.0
        %v1560 = vand.u32 %v1092, 4294901760
        %v1561 = vsub.f32 %v1092, %v1560
        %1562 = vmatpush2.msra.mxu0 %v1561
        %1563 = vmatprep.subr.mxu0 0.0
        %v1564 = vand.u32 %v1091, 4294901760
        %v1565 = vsub.f32 %v1091, %v1564
        %1566 = vmatpush2.msra.mxu0 %v1565
        %1567 = vmatprep.subr.mxu0 0.0
        %v1568 = vand.u32 %v1090, 4294901760
        %v1569 = vsub.f32 %v1090, %v1568
        %1570 = vmatpush2.msra.mxu0 %v1569
        %1571 = vmatprep.subr.mxu0 0.0
        %v1572 = vand.u32 %v1089, 4294901760
        %v1573 = vsub.f32 %v1089, %v1572
        %1574 = vmatpush2.msra.mxu0 %v1573
        %1575 = vmatprep.subr.mxu0 0.0
        %v1576 = vand.u32 %v1088, 4294901760
        %v1577 = vsub.f32 %v1088, %v1576
        %1578 = vmatpush2.msra.mxu0 %v1577
        %v1579 = vand.u32 %v1105, 4294901760
        %v1580 = vsub.f32 %v1105, %v1579
        %1581 = vmatprep.mubr.f32.mxu0 %v1580
        %v1582 = vand.u32 %v1070, 4294901760
        %v1583 = vsub.f32 %v1070, %v1582
        %1584 = vmatmul.mubr.f32.gmra.mxu0 %v1583
        %v1585 = vpop.f32.mrf.mxu0
        %v1586 = vadd.f32 %v1448, %v1585
        %v1587 = vpop.f32.mrf.mxu0
        %1588 = vdwg.mxu0
        %1589 = vmatprep.subr.mxu0 0.0
        %v1590 = vand.u32 %v1087, 4294901760
        %1591 = vmatpush1.msra.mxu0 %v1590
        %1592 = vmatprep.subr.mxu0 0.0
        %v1593 = vand.u32 %v1086, 4294901760
        %1594 = vmatpush1.msra.mxu0 %v1593
        %1595 = vmatprep.subr.mxu0 0.0
        %v1596 = vand.u32 %v1085, 4294901760
        %1597 = vmatpush1.msra.mxu0 %v1596
        %1598 = vmatprep.subr.mxu0 0.0
        %v1599 = vand.u32 %v1084, 4294901760
        %1600 = vmatpush1.msra.mxu0 %v1599
        %1601 = vmatprep.subr.mxu0 0.0
        %v1602 = vand.u32 %v1083, 4294901760
        %1603 = vmatpush1.msra.mxu0 %v1602
        %1604 = vmatprep.subr.mxu0 0.0
        %v1605 = vand.u32 %v1082, 4294901760
        %1606 = vmatpush1.msra.mxu0 %v1605
        %1607 = vmatprep.subr.mxu0 0.0
        %v1608 = vand.u32 %v1081, 4294901760
        %1609 = vmatpush1.msra.mxu0 %v1608
        %1610 = vmatprep.subr.mxu0 0.0
        %v1611 = vand.u32 %v1080, 4294901760
        %1612 = vmatpush1.msra.mxu0 %v1611
        %1613 = vmatprep.subr.mxu0 0.0
        %v1614 = vand.u32 %v1079, 4294901760
        %1615 = vmatpush1.msra.mxu0 %v1614
        %1616 = vmatprep.subr.mxu0 0.0
        %v1617 = vand.u32 %v1078, 4294901760
        %1618 = vmatpush1.msra.mxu0 %v1617
        %1619 = vmatprep.subr.mxu0 0.0
        %v1620 = vand.u32 %v1077, 4294901760
        %1621 = vmatpush1.msra.mxu0 %v1620
        %1622 = vmatprep.subr.mxu0 0.0
        %v1623 = vand.u32 %v1076, 4294901760
        %1624 = vmatpush1.msra.mxu0 %v1623
        %1625 = vmatprep.subr.mxu0 0.0
        %v1626 = vand.u32 %v1075, 4294901760
        %1627 = vmatpush1.msra.mxu0 %v1626
        %1628 = vmatprep.subr.mxu0 0.0
        %v1629 = vand.u32 %v1074, 4294901760
        %1630 = vmatpush1.msra.mxu0 %v1629
        %1631 = vmatprep.subr.mxu0 0.0
        %v1632 = vand.u32 %v1073, 4294901760
        %1633 = vmatpush1.msra.mxu0 %v1632
        %1634 = vmatprep.subr.mxu0 0.0
        %v1635 = vand.u32 %v1072, 4294901760
        %1636 = vmatpush1.msra.mxu0 %v1635
        %1637 = vmatprep.subr.mxu0 0.0
        %v1638 = vand.u32 %v1103, 4294901760
        %1639 = vmatpush2.msra.mxu0 %v1638
        %1640 = vmatprep.subr.mxu0 0.0
        %v1641 = vand.u32 %v1102, 4294901760
        %1642 = vmatpush2.msra.mxu0 %v1641
        %1643 = vmatprep.subr.mxu0 0.0
        %v1644 = vand.u32 %v1101, 4294901760
        %1645 = vmatpush2.msra.mxu0 %v1644
        %1646 = vmatprep.subr.mxu0 0.0
        %v1647 = vand.u32 %v1100, 4294901760
        %1648 = vmatpush2.msra.mxu0 %v1647
        %1649 = vmatprep.subr.mxu0 0.0
        %v1650 = vand.u32 %v1099, 4294901760
        %1651 = vmatpush2.msra.mxu0 %v1650
        %1652 = vmatprep.subr.mxu0 0.0
        %v1653 = vand.u32 %v1098, 4294901760
        %1654 = vmatpush2.msra.mxu0 %v1653
        %1655 = vmatprep.subr.mxu0 0.0
        %v1656 = vand.u32 %v1097, 4294901760
        %1657 = vmatpush2.msra.mxu0 %v1656
        %1658 = vmatprep.subr.mxu0 0.0
        %v1659 = vand.u32 %v1096, 4294901760
        %1660 = vmatpush2.msra.mxu0 %v1659
        %1661 = vmatprep.subr.mxu0 0.0
        %v1662 = vand.u32 %v1095, 4294901760
        %1663 = vmatpush2.msra.mxu0 %v1662
        %1664 = vmatprep.subr.mxu0 0.0
        %v1665 = vand.u32 %v1094, 4294901760
        %1666 = vmatpush2.msra.mxu0 %v1665
        %1667 = vmatprep.subr.mxu0 0.0
        %v1668 = vand.u32 %v1093, 4294901760
        %1669 = vmatpush2.msra.mxu0 %v1668
        %1670 = vmatprep.subr.mxu0 0.0
        %v1671 = vand.u32 %v1092, 4294901760
        %1672 = vmatpush2.msra.mxu0 %v1671
        %1673 = vmatprep.subr.mxu0 0.0
        %v1674 = vand.u32 %v1091, 4294901760
        %1675 = vmatpush2.msra.mxu0 %v1674
        %1676 = vmatprep.subr.mxu0 0.0
        %v1677 = vand.u32 %v1090, 4294901760
        %1678 = vmatpush2.msra.mxu0 %v1677
        %1679 = vmatprep.subr.mxu0 0.0
        %v1680 = vand.u32 %v1089, 4294901760
        %1681 = vmatpush2.msra.mxu0 %v1680
        %1682 = vmatprep.subr.mxu0 0.0
        %v1683 = vand.u32 %v1088, 4294901760
        %1684 = vmatpush2.msra.mxu0 %v1683
        %v1685 = vand.u32 %v1105, 4294901760
        %v1686 = vsub.f32 %v1105, %v1685
        %v1687 = vand.u32 %v1686, 4294901760
        %1688 = vmatprep.mubr.f32.mxu0 %v1687
        %v1689 = vand.u32 %v1070, 4294901760
        %v1690 = vsub.f32 %v1070, %v1689
        %v1691 = vand.u32 %v1690, 4294901760
        %1692 = vmatmul.mubr.f32.gmra.mxu0 %v1691
        %v1693 = vpop.f32.mrf.mxu0
        %v1694 = vadd.f32 %v1586, %v1693
        %v1695 = vpop.f32.mrf.mxu0
        %1696 = vdwg.mxu0
        %1697 = vmatprep.subr.mxu0 0.0
        %v1698 = vand.u32 %v1087, 4294901760
        %v1699 = vsub.f32 %v1087, %v1698
        %v1700 = vand.u32 %v1699, 4294901760
        %1701 = vmatpush1.msra.mxu0 %v1700
        %1702 = vmatprep.subr.mxu0 0.0
        %v1703 = vand.u32 %v1086, 4294901760
        %v1704 = vsub.f32 %v1086, %v1703
        %v1705 = vand.u32 %v1704, 4294901760
        %1706 = vmatpush1.msra.mxu0 %v1705
        %1707 = vmatprep.subr.mxu0 0.0
        %v1708 = vand.u32 %v1085, 4294901760
        %v1709 = vsub.f32 %v1085, %v1708
        %v1710 = vand.u32 %v1709, 4294901760
        %1711 = vmatpush1.msra.mxu0 %v1710
        %1712 = vmatprep.subr.mxu0 0.0
        %v1713 = vand.u32 %v1084, 4294901760
        %v1714 = vsub.f32 %v1084, %v1713
        %v1715 = vand.u32 %v1714, 4294901760
        %1716 = vmatpush1.msra.mxu0 %v1715
        %1717 = vmatprep.subr.mxu0 0.0
        %v1718 = vand.u32 %v1083, 4294901760
        %v1719 = vsub.f32 %v1083, %v1718
        %v1720 = vand.u32 %v1719, 4294901760
        %1721 = vmatpush1.msra.mxu0 %v1720
        %1722 = vmatprep.subr.mxu0 0.0
        %v1723 = vand.u32 %v1082, 4294901760
        %v1724 = vsub.f32 %v1082, %v1723
        %v1725 = vand.u32 %v1724, 4294901760
        %1726 = vmatpush1.msra.mxu0 %v1725
        %1727 = vmatprep.subr.mxu0 0.0
        %v1728 = vand.u32 %v1081, 4294901760
        %v1729 = vsub.f32 %v1081, %v1728
        %v1730 = vand.u32 %v1729, 4294901760
        %1731 = vmatpush1.msra.mxu0 %v1730
        %1732 = vmatprep.subr.mxu0 0.0
        %v1733 = vand.u32 %v1080, 4294901760
        %v1734 = vsub.f32 %v1080, %v1733
        %v1735 = vand.u32 %v1734, 4294901760
        %1736 = vmatpush1.msra.mxu0 %v1735
        %1737 = vmatprep.subr.mxu0 0.0
        %v1738 = vand.u32 %v1079, 4294901760
        %v1739 = vsub.f32 %v1079, %v1738
        %v1740 = vand.u32 %v1739, 4294901760
        %1741 = vmatpush1.msra.mxu0 %v1740
        %1742 = vmatprep.subr.mxu0 0.0
        %v1743 = vand.u32 %v1078, 4294901760
        %v1744 = vsub.f32 %v1078, %v1743
        %v1745 = vand.u32 %v1744, 4294901760
        %1746 = vmatpush1.msra.mxu0 %v1745
        %1747 = vmatprep.subr.mxu0 0.0
        %v1748 = vand.u32 %v1077, 4294901760
        %v1749 = vsub.f32 %v1077, %v1748
        %v1750 = vand.u32 %v1749, 4294901760
        %1751 = vmatpush1.msra.mxu0 %v1750
        %1752 = vmatprep.subr.mxu0 0.0
        %v1753 = vand.u32 %v1076, 4294901760
        %v1754 = vsub.f32 %v1076, %v1753
        %v1755 = vand.u32 %v1754, 4294901760
        %1756 = vmatpush1.msra.mxu0 %v1755
        %1757 = vmatprep.subr.mxu0 0.0
        %v1758 = vand.u32 %v1075, 4294901760
        %v1759 = vsub.f32 %v1075, %v1758
        %v1760 = vand.u32 %v1759, 4294901760
        %1761 = vmatpush1.msra.mxu0 %v1760
        %1762 = vmatprep.subr.mxu0 0.0
        %v1763 = vand.u32 %v1074, 4294901760
        %v1764 = vsub.f32 %v1074, %v1763
        %v1765 = vand.u32 %v1764, 4294901760
        %1766 = vmatpush1.msra.mxu0 %v1765
        %1767 = vmatprep.subr.mxu0 0.0
        %v1768 = vand.u32 %v1073, 4294901760
        %v1769 = vsub.f32 %v1073, %v1768
        %v1770 = vand.u32 %v1769, 4294901760
        %1771 = vmatpush1.msra.mxu0 %v1770
        %1772 = vmatprep.subr.mxu0 0.0
        %v1773 = vand.u32 %v1072, 4294901760
        %v1774 = vsub.f32 %v1072, %v1773
        %v1775 = vand.u32 %v1774, 4294901760
        %1776 = vmatpush1.msra.mxu0 %v1775
        %1777 = vmatprep.subr.mxu0 0.0
        %v1778 = vand.u32 %v1103, 4294901760
        %v1779 = vsub.f32 %v1103, %v1778
        %v1780 = vand.u32 %v1779, 4294901760
        %1781 = vmatpush2.msra.mxu0 %v1780
        %1782 = vmatprep.subr.mxu0 0.0
        %v1783 = vand.u32 %v1102, 4294901760
        %v1784 = vsub.f32 %v1102, %v1783
        %v1785 = vand.u32 %v1784, 4294901760
        %1786 = vmatpush2.msra.mxu0 %v1785
        %1787 = vmatprep.subr.mxu0 0.0
        %v1788 = vand.u32 %v1101, 4294901760
        %v1789 = vsub.f32 %v1101, %v1788
        %v1790 = vand.u32 %v1789, 4294901760
        %1791 = vmatpush2.msra.mxu0 %v1790
        %1792 = vmatprep.subr.mxu0 0.0
        %v1793 = vand.u32 %v1100, 4294901760
        %v1794 = vsub.f32 %v1100, %v1793
        %v1795 = vand.u32 %v1794, 4294901760
        %1796 = vmatpush2.msra.mxu0 %v1795
        %1797 = vmatprep.subr.mxu0 0.0
        %v1798 = vand.u32 %v1099, 4294901760
        %v1799 = vsub.f32 %v1099, %v1798
        %v1800 = vand.u32 %v1799, 4294901760
        %1801 = vmatpush2.msra.mxu0 %v1800
        %1802 = vmatprep.subr.mxu0 0.0
        %v1803 = vand.u32 %v1098, 4294901760
        %v1804 = vsub.f32 %v1098, %v1803
        %v1805 = vand.u32 %v1804, 4294901760
        %1806 = vmatpush2.msra.mxu0 %v1805
        %1807 = vmatprep.subr.mxu0 0.0
        %v1808 = vand.u32 %v1097, 4294901760
        %v1809 = vsub.f32 %v1097, %v1808
        %v1810 = vand.u32 %v1809, 4294901760
        %1811 = vmatpush2.msra.mxu0 %v1810
        %1812 = vmatprep.subr.mxu0 0.0
        %v1813 = vand.u32 %v1096, 4294901760
        %v1814 = vsub.f32 %v1096, %v1813
        %v1815 = vand.u32 %v1814, 4294901760
        %1816 = vmatpush2.msra.mxu0 %v1815
        %1817 = vmatprep.subr.mxu0 0.0
        %v1818 = vand.u32 %v1095, 4294901760
        %v1819 = vsub.f32 %v1095, %v1818
        %v1820 = vand.u32 %v1819, 4294901760
        %1821 = vmatpush2.msra.mxu0 %v1820
        %1822 = vmatprep.subr.mxu0 0.0
        %v1823 = vand.u32 %v1094, 4294901760
        %v1824 = vsub.f32 %v1094, %v1823
        %v1825 = vand.u32 %v1824, 4294901760
        %1826 = vmatpush2.msra.mxu0 %v1825
        %1827 = vmatprep.subr.mxu0 0.0
        %v1828 = vand.u32 %v1093, 4294901760
        %v1829 = vsub.f32 %v1093, %v1828
        %v1830 = vand.u32 %v1829, 4294901760
        %1831 = vmatpush2.msra.mxu0 %v1830
        %1832 = vmatprep.subr.mxu0 0.0
        %v1833 = vand.u32 %v1092, 4294901760
        %v1834 = vsub.f32 %v1092, %v1833
        %v1835 = vand.u32 %v1834, 4294901760
        %1836 = vmatpush2.msra.mxu0 %v1835
        %1837 = vmatprep.subr.mxu0 0.0
        %v1838 = vand.u32 %v1091, 4294901760
        %v1839 = vsub.f32 %v1091, %v1838
        %v1840 = vand.u32 %v1839, 4294901760
        %1841 = vmatpush2.msra.mxu0 %v1840
        %1842 = vmatprep.subr.mxu0 0.0
        %v1843 = vand.u32 %v1090, 4294901760
        %v1844 = vsub.f32 %v1090, %v1843
        %v1845 = vand.u32 %v1844, 4294901760
        %1846 = vmatpush2.msra.mxu0 %v1845
        %1847 = vmatprep.subr.mxu0 0.0
        %v1848 = vand.u32 %v1089, 4294901760
        %v1849 = vsub.f32 %v1089, %v1848
        %v1850 = vand.u32 %v1849, 4294901760
        %1851 = vmatpush2.msra.mxu0 %v1850
        %1852 = vmatprep.subr.mxu0 0.0
        %v1853 = vand.u32 %v1088, 4294901760
        %v1854 = vsub.f32 %v1088, %v1853
        %v1855 = vand.u32 %v1854, 4294901760
        %1856 = vmatpush2.msra.mxu0 %v1855
        %v1857 = vand.u32 %v1105, 4294901760
        %1858 = vmatprep.mubr.f32.mxu0 %v1857
        %v1859 = vand.u32 %v1070, 4294901760
        %1860 = vmatmul.mubr.f32.gmra.mxu0 %v1859
        %v1861 = vpop.f32.mrf.mxu0
        %v1862 = vadd.f32 %v1694, %v1861
        %v1863 = vpop.f32.mrf.mxu0
        %1864 = vdwg.mxu0
        %1865 = vmatprep.subr.mxu0 0.0
        %v1866 = vand.u32 %v1087, 4294901760
        %1867 = vmatpush1.msra.mxu0 %v1866
        %1868 = vmatprep.subr.mxu0 0.0
        %v1869 = vand.u32 %v1086, 4294901760
        %1870 = vmatpush1.msra.mxu0 %v1869
        %1871 = vmatprep.subr.mxu0 0.0
        %v1872 = vand.u32 %v1085, 4294901760
        %1873 = vmatpush1.msra.mxu0 %v1872
        %1874 = vmatprep.subr.mxu0 0.0
        %v1875 = vand.u32 %v1084, 4294901760
        %1876 = vmatpush1.msra.mxu0 %v1875
        %1877 = vmatprep.subr.mxu0 0.0
        %v1878 = vand.u32 %v1083, 4294901760
        %1879 = vmatpush1.msra.mxu0 %v1878
        %1880 = vmatprep.subr.mxu0 0.0
        %v1881 = vand.u32 %v1082, 4294901760
        %1882 = vmatpush1.msra.mxu0 %v1881
        %1883 = vmatprep.subr.mxu0 0.0
        %v1884 = vand.u32 %v1081, 4294901760
        %1885 = vmatpush1.msra.mxu0 %v1884
        %1886 = vmatprep.subr.mxu0 0.0
        %v1887 = vand.u32 %v1080, 4294901760
        %1888 = vmatpush1.msra.mxu0 %v1887
        %1889 = vmatprep.subr.mxu0 0.0
        %v1890 = vand.u32 %v1079, 4294901760
        %1891 = vmatpush1.msra.mxu0 %v1890
        %1892 = vmatprep.subr.mxu0 0.0
        %v1893 = vand.u32 %v1078, 4294901760
        %1894 = vmatpush1.msra.mxu0 %v1893
        %1895 = vmatprep.subr.mxu0 0.0
        %v1896 = vand.u32 %v1077, 4294901760
        %1897 = vmatpush1.msra.mxu0 %v1896
        %1898 = vmatprep.subr.mxu0 0.0
        %v1899 = vand.u32 %v1076, 4294901760
        %1900 = vmatpush1.msra.mxu0 %v1899
        %1901 = vmatprep.subr.mxu0 0.0
        %v1902 = vand.u32 %v1075, 4294901760
        %1903 = vmatpush1.msra.mxu0 %v1902
        %1904 = vmatprep.subr.mxu0 0.0
        %v1905 = vand.u32 %v1074, 4294901760
        %1906 = vmatpush1.msra.mxu0 %v1905
        %1907 = vmatprep.subr.mxu0 0.0
        %v1908 = vand.u32 %v1073, 4294901760
        %1909 = vmatpush1.msra.mxu0 %v1908
        %1910 = vmatprep.subr.mxu0 0.0
        %v1911 = vand.u32 %v1072, 4294901760
        %1912 = vmatpush1.msra.mxu0 %v1911
        %1913 = vmatprep.subr.mxu0 0.0
        %v1914 = vand.u32 %v1103, 4294901760
        %1915 = vmatpush2.msra.mxu0 %v1914
        %1916 = vmatprep.subr.mxu0 0.0
        %v1917 = vand.u32 %v1102, 4294901760
        %1918 = vmatpush2.msra.mxu0 %v1917
        %1919 = vmatprep.subr.mxu0 0.0
        %v1920 = vand.u32 %v1101, 4294901760
        %1921 = vmatpush2.msra.mxu0 %v1920
        %1922 = vmatprep.subr.mxu0 0.0
        %v1923 = vand.u32 %v1100, 4294901760
        %1924 = vmatpush2.msra.mxu0 %v1923
        %1925 = vmatprep.subr.mxu0 0.0
        %v1926 = vand.u32 %v1099, 4294901760
        %1927 = vmatpush2.msra.mxu0 %v1926
        %1928 = vmatprep.subr.mxu0 0.0
        %v1929 = vand.u32 %v1098, 4294901760
        %1930 = vmatpush2.msra.mxu0 %v1929
        %1931 = vmatprep.subr.mxu0 0.0
        %v1932 = vand.u32 %v1097, 4294901760
        %1933 = vmatpush2.msra.mxu0 %v1932
        %1934 = vmatprep.subr.mxu0 0.0
        %v1935 = vand.u32 %v1096, 4294901760
        %1936 = vmatpush2.msra.mxu0 %v1935
        %1937 = vmatprep.subr.mxu0 0.0
        %v1938 = vand.u32 %v1095, 4294901760
        %1939 = vmatpush2.msra.mxu0 %v1938
        %1940 = vmatprep.subr.mxu0 0.0
        %v1941 = vand.u32 %v1094, 4294901760
        %1942 = vmatpush2.msra.mxu0 %v1941
        %1943 = vmatprep.subr.mxu0 0.0
        %v1944 = vand.u32 %v1093, 4294901760
        %1945 = vmatpush2.msra.mxu0 %v1944
        %1946 = vmatprep.subr.mxu0 0.0
        %v1947 = vand.u32 %v1092, 4294901760
        %1948 = vmatpush2.msra.mxu0 %v1947
        %1949 = vmatprep.subr.mxu0 0.0
        %v1950 = vand.u32 %v1091, 4294901760
        %1951 = vmatpush2.msra.mxu0 %v1950
        %1952 = vmatprep.subr.mxu0 0.0
        %v1953 = vand.u32 %v1090, 4294901760
        %1954 = vmatpush2.msra.mxu0 %v1953
        %1955 = vmatprep.subr.mxu0 0.0
        %v1956 = vand.u32 %v1089, 4294901760
        %1957 = vmatpush2.msra.mxu0 %v1956
        %1958 = vmatprep.subr.mxu0 0.0
        %v1959 = vand.u32 %v1088, 4294901760
        %1960 = vmatpush2.msra.mxu0 %v1959
        %v1961 = vand.u32 %v1105, 4294901760
        %1962 = vmatprep.mubr.f32.mxu0 %v1961
        %v1963 = vand.u32 %v1070, 4294901760
        %1964 = vmatmul.mubr.f32.gmra.mxu0 %v1963
        %v1965 = vpop.f32.mrf.mxu0
        %v1966 = vadd.f32 %v1862, %v1965
        %v1967 = vpop.f32.mrf.mxu0
        %1968 = vdwg.mxu0
        %s1969 = scalar_lea.vmem %s160, 4 [#allocation2]
        %1970 = vst.msk [vmem:[%s1969] sm:$0xf] %vm1068, %v1966
        %v1971 = vld [vmem:[%s169] sm:$0xff]
        %s1972 = scalar_lea.vmem %s1, 512
        %v1973 = vld [vmem:[%s1972] sm:$0xff]
        %v1974 = vld [vmem:[%s1972 + $0x8] sm:$0xff]
        %v1975 = vld [vmem:[%s1972 + $0x10] sm:$0xff]
        %v1976 = vld [vmem:[%s1972 + $0x18] sm:$0xff]
        %v1977 = vld [vmem:[%s1972 + $0x20] sm:$0xff]
        %v1978 = vld [vmem:[%s1972 + $0x28] sm:$0xff]
        %v1979 = vld [vmem:[%s1972 + $0x30] sm:$0xff]
        %v1980 = vld [vmem:[%s1972 + $0x38] sm:$0xff]
        %v1981 = vld [vmem:[%s1972 + $0x40] sm:$0xff]
        %v1982 = vld [vmem:[%s1972 + $0x48] sm:$0xff]
        %v1983 = vld [vmem:[%s1972 + $0x50] sm:$0xff]
        %v1984 = vld [vmem:[%s1972 + $0x58] sm:$0xff]
        %v1985 = vld [vmem:[%s1972 + $0x60] sm:$0xff]
        %v1986 = vld [vmem:[%s1972 + $0x68] sm:$0xff]
        %v1987 = vld [vmem:[%s1972 + $0x70] sm:$0xff]
        %v1988 = vld [vmem:[%s1972 + $0x78] sm:$0xff]
        %v1989 = vld [vmem:[%s1972 + $0x80] sm:$0xff]
        %v1990 = vld [vmem:[%s1972 + $0x88] sm:$0xff]
        %v1991 = vld [vmem:[%s1972 + $0x90] sm:$0xff]
        %v1992 = vld [vmem:[%s1972 + $0x98] sm:$0xff]
        %v1993 = vld [vmem:[%s1972 + $0xa0] sm:$0xff]
        %v1994 = vld [vmem:[%s1972 + $0xa8] sm:$0xff]
        %v1995 = vld [vmem:[%s1972 + $0xb0] sm:$0xff]
        %v1996 = vld [vmem:[%s1972 + $0xb8] sm:$0xff]
        %v1997 = vld [vmem:[%s1972 + $0xc0] sm:$0xff]
        %v1998 = vld [vmem:[%s1972 + $0xc8] sm:$0xff]
        %v1999 = vld [vmem:[%s1972 + $0xd0] sm:$0xff]
        %v2000 = vld [vmem:[%s1972 + $0xd8] sm:$0xff]
        %v2001 = vld [vmem:[%s1972 + $0xe0] sm:$0xff]
        %v2002 = vld [vmem:[%s1972 + $0xe8] sm:$0xff]
        %v2003 = vld [vmem:[%s1972 + $0xf0] sm:$0xff]
        %v2004 = vld [vmem:[%s1972 + $0xf8] sm:$0xff]
        %v2006 = vcombine.high %v1971, %v1971
        %2008 = vmatprep.subr.mxu0 0.0
        %v2009 = vand.u32 %v1988, 4294901760
        %2010 = vmatpush1.msra.mxu0 %v2009
        %2011 = vmatprep.subr.mxu0 0.0
        %v2012 = vand.u32 %v1987, 4294901760
        %2013 = vmatpush1.msra.mxu0 %v2012
        %2014 = vmatprep.subr.mxu0 0.0
        %v2015 = vand.u32 %v1986, 4294901760
        %2016 = vmatpush1.msra.mxu0 %v2015
        %2017 = vmatprep.subr.mxu0 0.0
        %v2018 = vand.u32 %v1985, 4294901760
        %2019 = vmatpush1.msra.mxu0 %v2018
        %2020 = vmatprep.subr.mxu0 0.0
        %v2021 = vand.u32 %v1984, 4294901760
        %2022 = vmatpush1.msra.mxu0 %v2021
        %2023 = vmatprep.subr.mxu0 0.0
        %v2024 = vand.u32 %v1983, 4294901760
        %2025 = vmatpush1.msra.mxu0 %v2024
        %2026 = vmatprep.subr.mxu0 0.0
        %v2027 = vand.u32 %v1982, 4294901760
        %2028 = vmatpush1.msra.mxu0 %v2027
        %2029 = vmatprep.subr.mxu0 0.0
        %v2030 = vand.u32 %v1981, 4294901760
        %2031 = vmatpush1.msra.mxu0 %v2030
        %2032 = vmatprep.subr.mxu0 0.0
        %v2033 = vand.u32 %v1980, 4294901760
        %2034 = vmatpush1.msra.mxu0 %v2033
        %2035 = vmatprep.subr.mxu0 0.0
        %v2036 = vand.u32 %v1979, 4294901760
        %2037 = vmatpush1.msra.mxu0 %v2036
        %2038 = vmatprep.subr.mxu0 0.0
        %v2039 = vand.u32 %v1978, 4294901760
        %2040 = vmatpush1.msra.mxu0 %v2039
        %2041 = vmatprep.subr.mxu0 0.0
        %v2042 = vand.u32 %v1977, 4294901760
        %2043 = vmatpush1.msra.mxu0 %v2042
        %2044 = vmatprep.subr.mxu0 0.0
        %v2045 = vand.u32 %v1976, 4294901760
        %2046 = vmatpush1.msra.mxu0 %v2045
        %2047 = vmatprep.subr.mxu0 0.0
        %v2048 = vand.u32 %v1975, 4294901760
        %2049 = vmatpush1.msra.mxu0 %v2048
        %2050 = vmatprep.subr.mxu0 0.0
        %v2051 = vand.u32 %v1974, 4294901760
        %2052 = vmatpush1.msra.mxu0 %v2051
        %2053 = vmatprep.subr.mxu0 0.0
        %v2054 = vand.u32 %v1973, 4294901760
        %2055 = vmatpush1.msra.mxu0 %v2054
        %2056 = vmatprep.subr.mxu0 0.0
        %v2057 = vand.u32 %v2004, 4294901760
        %2058 = vmatpush2.msra.mxu0 %v2057
        %2059 = vmatprep.subr.mxu0 0.0
        %v2060 = vand.u32 %v2003, 4294901760
        %2061 = vmatpush2.msra.mxu0 %v2060
        %2062 = vmatprep.subr.mxu0 0.0
        %v2063 = vand.u32 %v2002, 4294901760
        %2064 = vmatpush2.msra.mxu0 %v2063
        %2065 = vmatprep.subr.mxu0 0.0
        %v2066 = vand.u32 %v2001, 4294901760
        %2067 = vmatpush2.msra.mxu0 %v2066
        %2068 = vmatprep.subr.mxu0 0.0
        %v2069 = vand.u32 %v2000, 4294901760
        %2070 = vmatpush2.msra.mxu0 %v2069
        %2071 = vmatprep.subr.mxu0 0.0
        %v2072 = vand.u32 %v1999, 4294901760
        %2073 = vmatpush2.msra.mxu0 %v2072
        %2074 = vmatprep.subr.mxu0 0.0
        %v2075 = vand.u32 %v1998, 4294901760
        %2076 = vmatpush2.msra.mxu0 %v2075
        %2077 = vmatprep.subr.mxu0 0.0
        %v2078 = vand.u32 %v1997, 4294901760
        %2079 = vmatpush2.msra.mxu0 %v2078
        %2080 = vmatprep.subr.mxu0 0.0
        %v2081 = vand.u32 %v1996, 4294901760
        %2082 = vmatpush2.msra.mxu0 %v2081
        %2083 = vmatprep.subr.mxu0 0.0
        %v2084 = vand.u32 %v1995, 4294901760
        %2085 = vmatpush2.msra.mxu0 %v2084
        %2086 = vmatprep.subr.mxu0 0.0
        %v2087 = vand.u32 %v1994, 4294901760
        %2088 = vmatpush2.msra.mxu0 %v2087
        %2089 = vmatprep.subr.mxu0 0.0
        %v2090 = vand.u32 %v1993, 4294901760
        %2091 = vmatpush2.msra.mxu0 %v2090
        %2092 = vmatprep.subr.mxu0 0.0
        %v2093 = vand.u32 %v1992, 4294901760
        %2094 = vmatpush2.msra.mxu0 %v2093
        %2095 = vmatprep.subr.mxu0 0.0
        %v2096 = vand.u32 %v1991, 4294901760
        %2097 = vmatpush2.msra.mxu0 %v2096
        %2098 = vmatprep.subr.mxu0 0.0
        %v2099 = vand.u32 %v1990, 4294901760
        %2100 = vmatpush2.msra.mxu0 %v2099
        %2101 = vmatprep.subr.mxu0 0.0
        %v2102 = vand.u32 %v1989, 4294901760
        %2103 = vmatpush2.msra.mxu0 %v2102
        %v2104 = vand.u32 %v2006, 4294901760
        %v2105 = vsub.f32 %v2006, %v2104
        %v2106 = vand.u32 %v2105, 4294901760
        %v2107 = vsub.f32 %v2105, %v2106
        %v2108 = vand.u32 %v2107, 4294901760
        %2109 = vmatprep.mubr.f32.mxu0 %v2108
        %v2110 = vand.u32 %v1971, 4294901760
        %v2111 = vsub.f32 %v1971, %v2110
        %v2112 = vand.u32 %v2111, 4294901760
        %v2113 = vsub.f32 %v2111, %v2112
        %v2114 = vand.u32 %v2113, 4294901760
        %2115 = vmatmul.mubr.f32.gmra.mxu0 %v2114
        %v2116 = vpop.f32.mrf.mxu0
        %v2117 = vadd.f32 0.0, %v2116
        %v2118 = vpop.f32.mrf.mxu0
        %2119 = vdwg.mxu0
        %2120 = vmatprep.subr.mxu0 0.0
        %v2121 = vand.u32 %v1988, 4294901760
        %v2122 = vsub.f32 %v1988, %v2121
        %v2123 = vand.u32 %v2122, 4294901760
        %v2124 = vsub.f32 %v2122, %v2123
        %v2125 = vand.u32 %v2124, 4294901760
        %2126 = vmatpush1.msra.mxu0 %v2125
        %2127 = vmatprep.subr.mxu0 0.0
        %v2128 = vand.u32 %v1987, 4294901760
        %v2129 = vsub.f32 %v1987, %v2128
        %v2130 = vand.u32 %v2129, 4294901760
        %v2131 = vsub.f32 %v2129, %v2130
        %v2132 = vand.u32 %v2131, 4294901760
        %2133 = vmatpush1.msra.mxu0 %v2132
        %2134 = vmatprep.subr.mxu0 0.0
        %v2135 = vand.u32 %v1986, 4294901760
        %v2136 = vsub.f32 %v1986, %v2135
        %v2137 = vand.u32 %v2136, 4294901760
        %v2138 = vsub.f32 %v2136, %v2137
        %v2139 = vand.u32 %v2138, 4294901760
        %2140 = vmatpush1.msra.mxu0 %v2139
        %2141 = vmatprep.subr.mxu0 0.0
        %v2142 = vand.u32 %v1985, 4294901760
        %v2143 = vsub.f32 %v1985, %v2142
        %v2144 = vand.u32 %v2143, 4294901760
        %v2145 = vsub.f32 %v2143, %v2144
        %v2146 = vand.u32 %v2145, 4294901760
        %2147 = vmatpush1.msra.mxu0 %v2146
        %2148 = vmatprep.subr.mxu0 0.0
        %v2149 = vand.u32 %v1984, 4294901760
        %v2150 = vsub.f32 %v1984, %v2149
        %v2151 = vand.u32 %v2150, 4294901760
        %v2152 = vsub.f32 %v2150, %v2151
        %v2153 = vand.u32 %v2152, 4294901760
        %2154 = vmatpush1.msra.mxu0 %v2153
        %2155 = vmatprep.subr.mxu0 0.0
        %v2156 = vand.u32 %v1983, 4294901760
        %v2157 = vsub.f32 %v1983, %v2156
        %v2158 = vand.u32 %v2157, 4294901760
        %v2159 = vsub.f32 %v2157, %v2158
        %v2160 = vand.u32 %v2159, 4294901760
        %2161 = vmatpush1.msra.mxu0 %v2160
        %2162 = vmatprep.subr.mxu0 0.0
        %v2163 = vand.u32 %v1982, 4294901760
        %v2164 = vsub.f32 %v1982, %v2163
        %v2165 = vand.u32 %v2164, 4294901760
        %v2166 = vsub.f32 %v2164, %v2165
        %v2167 = vand.u32 %v2166, 4294901760
        %2168 = vmatpush1.msra.mxu0 %v2167
        %2169 = vmatprep.subr.mxu0 0.0
        %v2170 = vand.u32 %v1981, 4294901760
        %v2171 = vsub.f32 %v1981, %v2170
        %v2172 = vand.u32 %v2171, 4294901760
        %v2173 = vsub.f32 %v2171, %v2172
        %v2174 = vand.u32 %v2173, 4294901760
        %2175 = vmatpush1.msra.mxu0 %v2174
        %2176 = vmatprep.subr.mxu0 0.0
        %v2177 = vand.u32 %v1980, 4294901760
        %v2178 = vsub.f32 %v1980, %v2177
        %v2179 = vand.u32 %v2178, 4294901760
        %v2180 = vsub.f32 %v2178, %v2179
        %v2181 = vand.u32 %v2180, 4294901760
        %2182 = vmatpush1.msra.mxu0 %v2181
        %2183 = vmatprep.subr.mxu0 0.0
        %v2184 = vand.u32 %v1979, 4294901760
        %v2185 = vsub.f32 %v1979, %v2184
        %v2186 = vand.u32 %v2185, 4294901760
        %v2187 = vsub.f32 %v2185, %v2186
        %v2188 = vand.u32 %v2187, 4294901760
        %2189 = vmatpush1.msra.mxu0 %v2188
        %2190 = vmatprep.subr.mxu0 0.0
        %v2191 = vand.u32 %v1978, 4294901760
        %v2192 = vsub.f32 %v1978, %v2191
        %v2193 = vand.u32 %v2192, 4294901760
        %v2194 = vsub.f32 %v2192, %v2193
        %v2195 = vand.u32 %v2194, 4294901760
        %2196 = vmatpush1.msra.mxu0 %v2195
        %2197 = vmatprep.subr.mxu0 0.0
        %v2198 = vand.u32 %v1977, 4294901760
        %v2199 = vsub.f32 %v1977, %v2198
        %v2200 = vand.u32 %v2199, 4294901760
        %v2201 = vsub.f32 %v2199, %v2200
        %v2202 = vand.u32 %v2201, 4294901760
        %2203 = vmatpush1.msra.mxu0 %v2202
        %2204 = vmatprep.subr.mxu0 0.0
        %v2205 = vand.u32 %v1976, 4294901760
        %v2206 = vsub.f32 %v1976, %v2205
        %v2207 = vand.u32 %v2206, 4294901760
        %v2208 = vsub.f32 %v2206, %v2207
        %v2209 = vand.u32 %v2208, 4294901760
        %2210 = vmatpush1.msra.mxu0 %v2209
        %2211 = vmatprep.subr.mxu0 0.0
        %v2212 = vand.u32 %v1975, 4294901760
        %v2213 = vsub.f32 %v1975, %v2212
        %v2214 = vand.u32 %v2213, 4294901760
        %v2215 = vsub.f32 %v2213, %v2214
        %v2216 = vand.u32 %v2215, 4294901760
        %2217 = vmatpush1.msra.mxu0 %v2216
        %2218 = vmatprep.subr.mxu0 0.0
        %v2219 = vand.u32 %v1974, 4294901760
        %v2220 = vsub.f32 %v1974, %v2219
        %v2221 = vand.u32 %v2220, 4294901760
        %v2222 = vsub.f32 %v2220, %v2221
        %v2223 = vand.u32 %v2222, 4294901760
        %2224 = vmatpush1.msra.mxu0 %v2223
        %2225 = vmatprep.subr.mxu0 0.0
        %v2226 = vand.u32 %v1973, 4294901760
        %v2227 = vsub.f32 %v1973, %v2226
        %v2228 = vand.u32 %v2227, 4294901760
        %v2229 = vsub.f32 %v2227, %v2228
        %v2230 = vand.u32 %v2229, 4294901760
        %2231 = vmatpush1.msra.mxu0 %v2230
        %2232 = vmatprep.subr.mxu0 0.0
        %v2233 = vand.u32 %v2004, 4294901760
        %v2234 = vsub.f32 %v2004, %v2233
        %v2235 = vand.u32 %v2234, 4294901760
        %v2236 = vsub.f32 %v2234, %v2235
        %v2237 = vand.u32 %v2236, 4294901760
        %2238 = vmatpush2.msra.mxu0 %v2237
        %2239 = vmatprep.subr.mxu0 0.0
        %v2240 = vand.u32 %v2003, 4294901760
        %v2241 = vsub.f32 %v2003, %v2240
        %v2242 = vand.u32 %v2241, 4294901760
        %v2243 = vsub.f32 %v2241, %v2242
        %v2244 = vand.u32 %v2243, 4294901760
        %2245 = vmatpush2.msra.mxu0 %v2244
        %2246 = vmatprep.subr.mxu0 0.0
        %v2247 = vand.u32 %v2002, 4294901760
        %v2248 = vsub.f32 %v2002, %v2247
        %v2249 = vand.u32 %v2248, 4294901760
        %v2250 = vsub.f32 %v2248, %v2249
        %v2251 = vand.u32 %v2250, 4294901760
        %2252 = vmatpush2.msra.mxu0 %v2251
        %2253 = vmatprep.subr.mxu0 0.0
        %v2254 = vand.u32 %v2001, 4294901760
        %v2255 = vsub.f32 %v2001, %v2254
        %v2256 = vand.u32 %v2255, 4294901760
        %v2257 = vsub.f32 %v2255, %v2256
        %v2258 = vand.u32 %v2257, 4294901760
        %2259 = vmatpush2.msra.mxu0 %v2258
        %2260 = vmatprep.subr.mxu0 0.0
        %v2261 = vand.u32 %v2000, 4294901760
        %v2262 = vsub.f32 %v2000, %v2261
        %v2263 = vand.u32 %v2262, 4294901760
        %v2264 = vsub.f32 %v2262, %v2263
        %v2265 = vand.u32 %v2264, 4294901760
        %2266 = vmatpush2.msra.mxu0 %v2265
        %2267 = vmatprep.subr.mxu0 0.0
        %v2268 = vand.u32 %v1999, 4294901760
        %v2269 = vsub.f32 %v1999, %v2268
        %v2270 = vand.u32 %v2269, 4294901760
        %v2271 = vsub.f32 %v2269, %v2270
        %v2272 = vand.u32 %v2271, 4294901760
        %2273 = vmatpush2.msra.mxu0 %v2272
        %2274 = vmatprep.subr.mxu0 0.0
        %v2275 = vand.u32 %v1998, 4294901760
        %v2276 = vsub.f32 %v1998, %v2275
        %v2277 = vand.u32 %v2276, 4294901760
        %v2278 = vsub.f32 %v2276, %v2277
        %v2279 = vand.u32 %v2278, 4294901760
        %2280 = vmatpush2.msra.mxu0 %v2279
        %2281 = vmatprep.subr.mxu0 0.0
        %v2282 = vand.u32 %v1997, 4294901760
        %v2283 = vsub.f32 %v1997, %v2282
        %v2284 = vand.u32 %v2283, 4294901760
        %v2285 = vsub.f32 %v2283, %v2284
        %v2286 = vand.u32 %v2285, 4294901760
        %2287 = vmatpush2.msra.mxu0 %v2286
        %2288 = vmatprep.subr.mxu0 0.0
        %v2289 = vand.u32 %v1996, 4294901760
        %v2290 = vsub.f32 %v1996, %v2289
        %v2291 = vand.u32 %v2290, 4294901760
        %v2292 = vsub.f32 %v2290, %v2291
        %v2293 = vand.u32 %v2292, 4294901760
        %2294 = vmatpush2.msra.mxu0 %v2293
        %2295 = vmatprep.subr.mxu0 0.0
        %v2296 = vand.u32 %v1995, 4294901760
        %v2297 = vsub.f32 %v1995, %v2296
        %v2298 = vand.u32 %v2297, 4294901760
        %v2299 = vsub.f32 %v2297, %v2298
        %v2300 = vand.u32 %v2299, 4294901760
        %2301 = vmatpush2.msra.mxu0 %v2300
        %2302 = vmatprep.subr.mxu0 0.0
        %v2303 = vand.u32 %v1994, 4294901760
        %v2304 = vsub.f32 %v1994, %v2303
        %v2305 = vand.u32 %v2304, 4294901760
        %v2306 = vsub.f32 %v2304, %v2305
        %v2307 = vand.u32 %v2306, 4294901760
        %2308 = vmatpush2.msra.mxu0 %v2307
        %2309 = vmatprep.subr.mxu0 0.0
        %v2310 = vand.u32 %v1993, 4294901760
        %v2311 = vsub.f32 %v1993, %v2310
        %v2312 = vand.u32 %v2311, 4294901760
        %v2313 = vsub.f32 %v2311, %v2312
        %v2314 = vand.u32 %v2313, 4294901760
        %2315 = vmatpush2.msra.mxu0 %v2314
        %2316 = vmatprep.subr.mxu0 0.0
        %v2317 = vand.u32 %v1992, 4294901760
        %v2318 = vsub.f32 %v1992, %v2317
        %v2319 = vand.u32 %v2318, 4294901760
        %v2320 = vsub.f32 %v2318, %v2319
        %v2321 = vand.u32 %v2320, 4294901760
        %2322 = vmatpush2.msra.mxu0 %v2321
        %2323 = vmatprep.subr.mxu0 0.0
        %v2324 = vand.u32 %v1991, 4294901760
        %v2325 = vsub.f32 %v1991, %v2324
        %v2326 = vand.u32 %v2325, 4294901760
        %v2327 = vsub.f32 %v2325, %v2326
        %v2328 = vand.u32 %v2327, 4294901760
        %2329 = vmatpush2.msra.mxu0 %v2328
        %2330 = vmatprep.subr.mxu0 0.0
        %v2331 = vand.u32 %v1990, 4294901760
        %v2332 = vsub.f32 %v1990, %v2331
        %v2333 = vand.u32 %v2332, 4294901760
        %v2334 = vsub.f32 %v2332, %v2333
        %v2335 = vand.u32 %v2334, 4294901760
        %2336 = vmatpush2.msra.mxu0 %v2335
        %2337 = vmatprep.subr.mxu0 0.0
        %v2338 = vand.u32 %v1989, 4294901760
        %v2339 = vsub.f32 %v1989, %v2338
        %v2340 = vand.u32 %v2339, 4294901760
        %v2341 = vsub.f32 %v2339, %v2340
        %v2342 = vand.u32 %v2341, 4294901760
        %2343 = vmatpush2.msra.mxu0 %v2342
        %v2344 = vand.u32 %v2006, 4294901760
        %2345 = vmatprep.mubr.f32.mxu0 %v2344
        %v2346 = vand.u32 %v1971, 4294901760
        %2347 = vmatmul.mubr.f32.gmra.mxu0 %v2346
        %v2348 = vpop.f32.mrf.mxu0
        %v2349 = vadd.f32 %v2117, %v2348
        %v2350 = vpop.f32.mrf.mxu0
        %2351 = vdwg.mxu0
        %2352 = vmatprep.subr.mxu0 0.0
        %v2353 = vand.u32 %v1988, 4294901760
        %v2354 = vsub.f32 %v1988, %v2353
        %2355 = vmatpush1.msra.mxu0 %v2354
        %2356 = vmatprep.subr.mxu0 0.0
        %v2357 = vand.u32 %v1987, 4294901760
        %v2358 = vsub.f32 %v1987, %v2357
        %2359 = vmatpush1.msra.mxu0 %v2358
        %2360 = vmatprep.subr.mxu0 0.0
        %v2361 = vand.u32 %v1986, 4294901760
        %v2362 = vsub.f32 %v1986, %v2361
        %2363 = vmatpush1.msra.mxu0 %v2362
        %2364 = vmatprep.subr.mxu0 0.0
        %v2365 = vand.u32 %v1985, 4294901760
        %v2366 = vsub.f32 %v1985, %v2365
        %2367 = vmatpush1.msra.mxu0 %v2366
        %2368 = vmatprep.subr.mxu0 0.0
        %v2369 = vand.u32 %v1984, 4294901760
        %v2370 = vsub.f32 %v1984, %v2369
        %2371 = vmatpush1.msra.mxu0 %v2370
        %2372 = vmatprep.subr.mxu0 0.0
        %v2373 = vand.u32 %v1983, 4294901760
        %v2374 = vsub.f32 %v1983, %v2373
        %2375 = vmatpush1.msra.mxu0 %v2374
        %2376 = vmatprep.subr.mxu0 0.0
        %v2377 = vand.u32 %v1982, 4294901760
        %v2378 = vsub.f32 %v1982, %v2377
        %2379 = vmatpush1.msra.mxu0 %v2378
        %2380 = vmatprep.subr.mxu0 0.0
        %v2381 = vand.u32 %v1981, 4294901760
        %v2382 = vsub.f32 %v1981, %v2381
        %2383 = vmatpush1.msra.mxu0 %v2382
        %2384 = vmatprep.subr.mxu0 0.0
        %v2385 = vand.u32 %v1980, 4294901760
        %v2386 = vsub.f32 %v1980, %v2385
        %2387 = vmatpush1.msra.mxu0 %v2386
        %2388 = vmatprep.subr.mxu0 0.0
        %v2389 = vand.u32 %v1979, 4294901760
        %v2390 = vsub.f32 %v1979, %v2389
        %2391 = vmatpush1.msra.mxu0 %v2390
        %2392 = vmatprep.subr.mxu0 0.0
        %v2393 = vand.u32 %v1978, 4294901760
        %v2394 = vsub.f32 %v1978, %v2393
        %2395 = vmatpush1.msra.mxu0 %v2394
        %2396 = vmatprep.subr.mxu0 0.0
        %v2397 = vand.u32 %v1977, 4294901760
        %v2398 = vsub.f32 %v1977, %v2397
        %2399 = vmatpush1.msra.mxu0 %v2398
        %2400 = vmatprep.subr.mxu0 0.0
        %v2401 = vand.u32 %v1976, 4294901760
        %v2402 = vsub.f32 %v1976, %v2401
        %2403 = vmatpush1.msra.mxu0 %v2402
        %2404 = vmatprep.subr.mxu0 0.0
        %v2405 = vand.u32 %v1975, 4294901760
        %v2406 = vsub.f32 %v1975, %v2405
        %2407 = vmatpush1.msra.mxu0 %v2406
        %2408 = vmatprep.subr.mxu0 0.0
        %v2409 = vand.u32 %v1974, 4294901760
        %v2410 = vsub.f32 %v1974, %v2409
        %2411 = vmatpush1.msra.mxu0 %v2410
        %2412 = vmatprep.subr.mxu0 0.0
        %v2413 = vand.u32 %v1973, 4294901760
        %v2414 = vsub.f32 %v1973, %v2413
        %2415 = vmatpush1.msra.mxu0 %v2414
        %2416 = vmatprep.subr.mxu0 0.0
        %v2417 = vand.u32 %v2004, 4294901760
        %v2418 = vsub.f32 %v2004, %v2417
        %2419 = vmatpush2.msra.mxu0 %v2418
        %2420 = vmatprep.subr.mxu0 0.0
        %v2421 = vand.u32 %v2003, 4294901760
        %v2422 = vsub.f32 %v2003, %v2421
        %2423 = vmatpush2.msra.mxu0 %v2422
        %2424 = vmatprep.subr.mxu0 0.0
        %v2425 = vand.u32 %v2002, 4294901760
        %v2426 = vsub.f32 %v2002, %v2425
        %2427 = vmatpush2.msra.mxu0 %v2426
        %2428 = vmatprep.subr.mxu0 0.0
        %v2429 = vand.u32 %v2001, 4294901760
        %v2430 = vsub.f32 %v2001, %v2429
        %2431 = vmatpush2.msra.mxu0 %v2430
        %2432 = vmatprep.subr.mxu0 0.0
        %v2433 = vand.u32 %v2000, 4294901760
        %v2434 = vsub.f32 %v2000, %v2433
        %2435 = vmatpush2.msra.mxu0 %v2434
        %2436 = vmatprep.subr.mxu0 0.0
        %v2437 = vand.u32 %v1999, 4294901760
        %v2438 = vsub.f32 %v1999, %v2437
        %2439 = vmatpush2.msra.mxu0 %v2438
        %2440 = vmatprep.subr.mxu0 0.0
        %v2441 = vand.u32 %v1998, 4294901760
        %v2442 = vsub.f32 %v1998, %v2441
        %2443 = vmatpush2.msra.mxu0 %v2442
        %2444 = vmatprep.subr.mxu0 0.0
        %v2445 = vand.u32 %v1997, 4294901760
        %v2446 = vsub.f32 %v1997, %v2445
        %2447 = vmatpush2.msra.mxu0 %v2446
        %2448 = vmatprep.subr.mxu0 0.0
        %v2449 = vand.u32 %v1996, 4294901760
        %v2450 = vsub.f32 %v1996, %v2449
        %2451 = vmatpush2.msra.mxu0 %v2450
        %2452 = vmatprep.subr.mxu0 0.0
        %v2453 = vand.u32 %v1995, 4294901760
        %v2454 = vsub.f32 %v1995, %v2453
        %2455 = vmatpush2.msra.mxu0 %v2454
        %2456 = vmatprep.subr.mxu0 0.0
        %v2457 = vand.u32 %v1994, 4294901760
        %v2458 = vsub.f32 %v1994, %v2457
        %2459 = vmatpush2.msra.mxu0 %v2458
        %2460 = vmatprep.subr.mxu0 0.0
        %v2461 = vand.u32 %v1993, 4294901760
        %v2462 = vsub.f32 %v1993, %v2461
        %2463 = vmatpush2.msra.mxu0 %v2462
        %2464 = vmatprep.subr.mxu0 0.0
        %v2465 = vand.u32 %v1992, 4294901760
        %v2466 = vsub.f32 %v1992, %v2465
        %2467 = vmatpush2.msra.mxu0 %v2466
        %2468 = vmatprep.subr.mxu0 0.0
        %v2469 = vand.u32 %v1991, 4294901760
        %v2470 = vsub.f32 %v1991, %v2469
        %2471 = vmatpush2.msra.mxu0 %v2470
        %2472 = vmatprep.subr.mxu0 0.0
        %v2473 = vand.u32 %v1990, 4294901760
        %v2474 = vsub.f32 %v1990, %v2473
        %2475 = vmatpush2.msra.mxu0 %v2474
        %2476 = vmatprep.subr.mxu0 0.0
        %v2477 = vand.u32 %v1989, 4294901760
        %v2478 = vsub.f32 %v1989, %v2477
        %2479 = vmatpush2.msra.mxu0 %v2478
        %v2480 = vand.u32 %v2006, 4294901760
        %v2481 = vsub.f32 %v2006, %v2480
        %2482 = vmatprep.mubr.f32.mxu0 %v2481
        %v2483 = vand.u32 %v1971, 4294901760
        %v2484 = vsub.f32 %v1971, %v2483
        %2485 = vmatmul.mubr.f32.gmra.mxu0 %v2484
        %v2486 = vpop.f32.mrf.mxu0
        %v2487 = vadd.f32 %v2349, %v2486
        %v2488 = vpop.f32.mrf.mxu0
        %2489 = vdwg.mxu0
        %2490 = vmatprep.subr.mxu0 0.0
        %v2491 = vand.u32 %v1988, 4294901760
        %2492 = vmatpush1.msra.mxu0 %v2491
        %2493 = vmatprep.subr.mxu0 0.0
        %v2494 = vand.u32 %v1987, 4294901760
        %2495 = vmatpush1.msra.mxu0 %v2494
        %2496 = vmatprep.subr.mxu0 0.0
        %v2497 = vand.u32 %v1986, 4294901760
        %2498 = vmatpush1.msra.mxu0 %v2497
        %2499 = vmatprep.subr.mxu0 0.0
        %v2500 = vand.u32 %v1985, 4294901760
        %2501 = vmatpush1.msra.mxu0 %v2500
        %2502 = vmatprep.subr.mxu0 0.0
        %v2503 = vand.u32 %v1984, 4294901760
        %2504 = vmatpush1.msra.mxu0 %v2503
        %2505 = vmatprep.subr.mxu0 0.0
        %v2506 = vand.u32 %v1983, 4294901760
        %2507 = vmatpush1.msra.mxu0 %v2506
        %2508 = vmatprep.subr.mxu0 0.0
        %v2509 = vand.u32 %v1982, 4294901760
        %2510 = vmatpush1.msra.mxu0 %v2509
        %2511 = vmatprep.subr.mxu0 0.0
        %v2512 = vand.u32 %v1981, 4294901760
        %2513 = vmatpush1.msra.mxu0 %v2512
        %2514 = vmatprep.subr.mxu0 0.0
        %v2515 = vand.u32 %v1980, 4294901760
        %2516 = vmatpush1.msra.mxu0 %v2515
        %2517 = vmatprep.subr.mxu0 0.0
        %v2518 = vand.u32 %v1979, 4294901760
        %2519 = vmatpush1.msra.mxu0 %v2518
        %2520 = vmatprep.subr.mxu0 0.0
        %v2521 = vand.u32 %v1978, 4294901760
        %2522 = vmatpush1.msra.mxu0 %v2521
        %2523 = vmatprep.subr.mxu0 0.0
        %v2524 = vand.u32 %v1977, 4294901760
        %2525 = vmatpush1.msra.mxu0 %v2524
        %2526 = vmatprep.subr.mxu0 0.0
        %v2527 = vand.u32 %v1976, 4294901760
        %2528 = vmatpush1.msra.mxu0 %v2527
        %2529 = vmatprep.subr.mxu0 0.0
        %v2530 = vand.u32 %v1975, 4294901760
        %2531 = vmatpush1.msra.mxu0 %v2530
        %2532 = vmatprep.subr.mxu0 0.0
        %v2533 = vand.u32 %v1974, 4294901760
        %2534 = vmatpush1.msra.mxu0 %v2533
        %2535 = vmatprep.subr.mxu0 0.0
        %v2536 = vand.u32 %v1973, 4294901760
        %2537 = vmatpush1.msra.mxu0 %v2536
        %2538 = vmatprep.subr.mxu0 0.0
        %v2539 = vand.u32 %v2004, 4294901760
        %2540 = vmatpush2.msra.mxu0 %v2539
        %2541 = vmatprep.subr.mxu0 0.0
        %v2542 = vand.u32 %v2003, 4294901760
        %2543 = vmatpush2.msra.mxu0 %v2542
        %2544 = vmatprep.subr.mxu0 0.0
        %v2545 = vand.u32 %v2002, 4294901760
        %2546 = vmatpush2.msra.mxu0 %v2545
        %2547 = vmatprep.subr.mxu0 0.0
        %v2548 = vand.u32 %v2001, 4294901760
        %2549 = vmatpush2.msra.mxu0 %v2548
        %2550 = vmatprep.subr.mxu0 0.0
        %v2551 = vand.u32 %v2000, 4294901760
        %2552 = vmatpush2.msra.mxu0 %v2551
        %2553 = vmatprep.subr.mxu0 0.0
        %v2554 = vand.u32 %v1999, 4294901760
        %2555 = vmatpush2.msra.mxu0 %v2554
        %2556 = vmatprep.subr.mxu0 0.0
        %v2557 = vand.u32 %v1998, 4294901760
        %2558 = vmatpush2.msra.mxu0 %v2557
        %2559 = vmatprep.subr.mxu0 0.0
        %v2560 = vand.u32 %v1997, 4294901760
        %2561 = vmatpush2.msra.mxu0 %v2560
        %2562 = vmatprep.subr.mxu0 0.0
        %v2563 = vand.u32 %v1996, 4294901760
        %2564 = vmatpush2.msra.mxu0 %v2563
        %2565 = vmatprep.subr.mxu0 0.0
        %v2566 = vand.u32 %v1995, 4294901760
        %2567 = vmatpush2.msra.mxu0 %v2566
        %2568 = vmatprep.subr.mxu0 0.0
        %v2569 = vand.u32 %v1994, 4294901760
        %2570 = vmatpush2.msra.mxu0 %v2569
        %2571 = vmatprep.subr.mxu0 0.0
        %v2572 = vand.u32 %v1993, 4294901760
        %2573 = vmatpush2.msra.mxu0 %v2572
        %2574 = vmatprep.subr.mxu0 0.0
        %v2575 = vand.u32 %v1992, 4294901760
        %2576 = vmatpush2.msra.mxu0 %v2575
        %2577 = vmatprep.subr.mxu0 0.0
        %v2578 = vand.u32 %v1991, 4294901760
        %2579 = vmatpush2.msra.mxu0 %v2578
        %2580 = vmatprep.subr.mxu0 0.0
        %v2581 = vand.u32 %v1990, 4294901760
        %2582 = vmatpush2.msra.mxu0 %v2581
        %2583 = vmatprep.subr.mxu0 0.0
        %v2584 = vand.u32 %v1989, 4294901760
        %2585 = vmatpush2.msra.mxu0 %v2584
        %v2586 = vand.u32 %v2006, 4294901760
        %v2587 = vsub.f32 %v2006, %v2586
        %v2588 = vand.u32 %v2587, 4294901760
        %2589 = vmatprep.mubr.f32.mxu0 %v2588
        %v2590 = vand.u32 %v1971, 4294901760
        %v2591 = vsub.f32 %v1971, %v2590
        %v2592 = vand.u32 %v2591, 4294901760
        %2593 = vmatmul.mubr.f32.gmra.mxu0 %v2592
        %v2594 = vpop.f32.mrf.mxu0
        %v2595 = vadd.f32 %v2487, %v2594
        %v2596 = vpop.f32.mrf.mxu0
        %2597 = vdwg.mxu0
        %2598 = vmatprep.subr.mxu0 0.0
        %v2599 = vand.u32 %v1988, 4294901760
        %v2600 = vsub.f32 %v1988, %v2599
        %v2601 = vand.u32 %v2600, 4294901760
        %2602 = vmatpush1.msra.mxu0 %v2601
        %2603 = vmatprep.subr.mxu0 0.0
        %v2604 = vand.u32 %v1987, 4294901760
        %v2605 = vsub.f32 %v1987, %v2604
        %v2606 = vand.u32 %v2605, 4294901760
        %2607 = vmatpush1.msra.mxu0 %v2606
        %2608 = vmatprep.subr.mxu0 0.0
        %v2609 = vand.u32 %v1986, 4294901760
        %v2610 = vsub.f32 %v1986, %v2609
        %v2611 = vand.u32 %v2610, 4294901760
        %2612 = vmatpush1.msra.mxu0 %v2611
        %2613 = vmatprep.subr.mxu0 0.0
        %v2614 = vand.u32 %v1985, 4294901760
        %v2615 = vsub.f32 %v1985, %v2614
        %v2616 = vand.u32 %v2615, 4294901760
        %2617 = vmatpush1.msra.mxu0 %v2616
        %2618 = vmatprep.subr.mxu0 0.0
        %v2619 = vand.u32 %v1984, 4294901760
        %v2620 = vsub.f32 %v1984, %v2619
        %v2621 = vand.u32 %v2620, 4294901760
        %2622 = vmatpush1.msra.mxu0 %v2621
        %2623 = vmatprep.subr.mxu0 0.0
        %v2624 = vand.u32 %v1983, 4294901760
        %v2625 = vsub.f32 %v1983, %v2624
        %v2626 = vand.u32 %v2625, 4294901760
        %2627 = vmatpush1.msra.mxu0 %v2626
        %2628 = vmatprep.subr.mxu0 0.0
        %v2629 = vand.u32 %v1982, 4294901760
        %v2630 = vsub.f32 %v1982, %v2629
        %v2631 = vand.u32 %v2630, 4294901760
        %2632 = vmatpush1.msra.mxu0 %v2631
        %2633 = vmatprep.subr.mxu0 0.0
        %v2634 = vand.u32 %v1981, 4294901760
        %v2635 = vsub.f32 %v1981, %v2634
        %v2636 = vand.u32 %v2635, 4294901760
        %2637 = vmatpush1.msra.mxu0 %v2636
        %2638 = vmatprep.subr.mxu0 0.0
        %v2639 = vand.u32 %v1980, 4294901760
        %v2640 = vsub.f32 %v1980, %v2639
        %v2641 = vand.u32 %v2640, 4294901760
        %2642 = vmatpush1.msra.mxu0 %v2641
        %2643 = vmatprep.subr.mxu0 0.0
        %v2644 = vand.u32 %v1979, 4294901760
        %v2645 = vsub.f32 %v1979, %v2644
        %v2646 = vand.u32 %v2645, 4294901760
        %2647 = vmatpush1.msra.mxu0 %v2646
        %2648 = vmatprep.subr.mxu0 0.0
        %v2649 = vand.u32 %v1978, 4294901760
        %v2650 = vsub.f32 %v1978, %v2649
        %v2651 = vand.u32 %v2650, 4294901760
        %2652 = vmatpush1.msra.mxu0 %v2651
        %2653 = vmatprep.subr.mxu0 0.0
        %v2654 = vand.u32 %v1977, 4294901760
        %v2655 = vsub.f32 %v1977, %v2654
        %v2656 = vand.u32 %v2655, 4294901760
        %2657 = vmatpush1.msra.mxu0 %v2656
        %2658 = vmatprep.subr.mxu0 0.0
        %v2659 = vand.u32 %v1976, 4294901760
        %v2660 = vsub.f32 %v1976, %v2659
        %v2661 = vand.u32 %v2660, 4294901760
        %2662 = vmatpush1.msra.mxu0 %v2661
        %2663 = vmatprep.subr.mxu0 0.0
        %v2664 = vand.u32 %v1975, 4294901760
        %v2665 = vsub.f32 %v1975, %v2664
        %v2666 = vand.u32 %v2665, 4294901760
        %2667 = vmatpush1.msra.mxu0 %v2666
        %2668 = vmatprep.subr.mxu0 0.0
        %v2669 = vand.u32 %v1974, 4294901760
        %v2670 = vsub.f32 %v1974, %v2669
        %v2671 = vand.u32 %v2670, 4294901760
        %2672 = vmatpush1.msra.mxu0 %v2671
        %2673 = vmatprep.subr.mxu0 0.0
        %v2674 = vand.u32 %v1973, 4294901760
        %v2675 = vsub.f32 %v1973, %v2674
        %v2676 = vand.u32 %v2675, 4294901760
        %2677 = vmatpush1.msra.mxu0 %v2676
        %2678 = vmatprep.subr.mxu0 0.0
        %v2679 = vand.u32 %v2004, 4294901760
        %v2680 = vsub.f32 %v2004, %v2679
        %v2681 = vand.u32 %v2680, 4294901760
        %2682 = vmatpush2.msra.mxu0 %v2681
        %2683 = vmatprep.subr.mxu0 0.0
        %v2684 = vand.u32 %v2003, 4294901760
        %v2685 = vsub.f32 %v2003, %v2684
        %v2686 = vand.u32 %v2685, 4294901760
        %2687 = vmatpush2.msra.mxu0 %v2686
        %2688 = vmatprep.subr.mxu0 0.0
        %v2689 = vand.u32 %v2002, 4294901760
        %v2690 = vsub.f32 %v2002, %v2689
        %v2691 = vand.u32 %v2690, 4294901760
        %2692 = vmatpush2.msra.mxu0 %v2691
        %2693 = vmatprep.subr.mxu0 0.0
        %v2694 = vand.u32 %v2001, 4294901760
        %v2695 = vsub.f32 %v2001, %v2694
        %v2696 = vand.u32 %v2695, 4294901760
        %2697 = vmatpush2.msra.mxu0 %v2696
        %2698 = vmatprep.subr.mxu0 0.0
        %v2699 = vand.u32 %v2000, 4294901760
        %v2700 = vsub.f32 %v2000, %v2699
        %v2701 = vand.u32 %v2700, 4294901760
        %2702 = vmatpush2.msra.mxu0 %v2701
        %2703 = vmatprep.subr.mxu0 0.0
        %v2704 = vand.u32 %v1999, 4294901760
        %v2705 = vsub.f32 %v1999, %v2704
        %v2706 = vand.u32 %v2705, 4294901760
        %2707 = vmatpush2.msra.mxu0 %v2706
        %2708 = vmatprep.subr.mxu0 0.0
        %v2709 = vand.u32 %v1998, 4294901760
        %v2710 = vsub.f32 %v1998, %v2709
        %v2711 = vand.u32 %v2710, 4294901760
        %2712 = vmatpush2.msra.mxu0 %v2711
        %2713 = vmatprep.subr.mxu0 0.0
        %v2714 = vand.u32 %v1997, 4294901760
        %v2715 = vsub.f32 %v1997, %v2714
        %v2716 = vand.u32 %v2715, 4294901760
        %2717 = vmatpush2.msra.mxu0 %v2716
        %2718 = vmatprep.subr.mxu0 0.0
        %v2719 = vand.u32 %v1996, 4294901760
        %v2720 = vsub.f32 %v1996, %v2719
        %v2721 = vand.u32 %v2720, 4294901760
        %2722 = vmatpush2.msra.mxu0 %v2721
        %2723 = vmatprep.subr.mxu0 0.0
        %v2724 = vand.u32 %v1995, 4294901760
        %v2725 = vsub.f32 %v1995, %v2724
        %v2726 = vand.u32 %v2725, 4294901760
        %2727 = vmatpush2.msra.mxu0 %v2726
        %2728 = vmatprep.subr.mxu0 0.0
        %v2729 = vand.u32 %v1994, 4294901760
        %v2730 = vsub.f32 %v1994, %v2729
        %v2731 = vand.u32 %v2730, 4294901760
        %2732 = vmatpush2.msra.mxu0 %v2731
        %2733 = vmatprep.subr.mxu0 0.0
        %v2734 = vand.u32 %v1993, 4294901760
        %v2735 = vsub.f32 %v1993, %v2734
        %v2736 = vand.u32 %v2735, 4294901760
        %2737 = vmatpush2.msra.mxu0 %v2736
        %2738 = vmatprep.subr.mxu0 0.0
        %v2739 = vand.u32 %v1992, 4294901760
        %v2740 = vsub.f32 %v1992, %v2739
        %v2741 = vand.u32 %v2740, 4294901760
        %2742 = vmatpush2.msra.mxu0 %v2741
        %2743 = vmatprep.subr.mxu0 0.0
        %v2744 = vand.u32 %v1991, 4294901760
        %v2745 = vsub.f32 %v1991, %v2744
        %v2746 = vand.u32 %v2745, 4294901760
        %2747 = vmatpush2.msra.mxu0 %v2746
        %2748 = vmatprep.subr.mxu0 0.0
        %v2749 = vand.u32 %v1990, 4294901760
        %v2750 = vsub.f32 %v1990, %v2749
        %v2751 = vand.u32 %v2750, 4294901760
        %2752 = vmatpush2.msra.mxu0 %v2751
        %2753 = vmatprep.subr.mxu0 0.0
        %v2754 = vand.u32 %v1989, 4294901760
        %v2755 = vsub.f32 %v1989, %v2754
        %v2756 = vand.u32 %v2755, 4294901760
        %2757 = vmatpush2.msra.mxu0 %v2756
        %v2758 = vand.u32 %v2006, 4294901760
        %2759 = vmatprep.mubr.f32.mxu0 %v2758
        %v2760 = vand.u32 %v1971, 4294901760
        %2761 = vmatmul.mubr.f32.gmra.mxu0 %v2760
        %v2762 = vpop.f32.mrf.mxu0
        %v2763 = vadd.f32 %v2595, %v2762
        %v2764 = vpop.f32.mrf.mxu0
        %2765 = vdwg.mxu0
        %2766 = vmatprep.subr.mxu0 0.0
        %v2767 = vand.u32 %v1988, 4294901760
        %2768 = vmatpush1.msra.mxu0 %v2767
        %2769 = vmatprep.subr.mxu0 0.0
        %v2770 = vand.u32 %v1987, 4294901760
        %2771 = vmatpush1.msra.mxu0 %v2770
        %2772 = vmatprep.subr.mxu0 0.0
        %v2773 = vand.u32 %v1986, 4294901760
        %2774 = vmatpush1.msra.mxu0 %v2773
        %2775 = vmatprep.subr.mxu0 0.0
        %v2776 = vand.u32 %v1985, 4294901760
        %2777 = vmatpush1.msra.mxu0 %v2776
        %2778 = vmatprep.subr.mxu0 0.0
        %v2779 = vand.u32 %v1984, 4294901760
        %2780 = vmatpush1.msra.mxu0 %v2779
        %2781 = vmatprep.subr.mxu0 0.0
        %v2782 = vand.u32 %v1983, 4294901760
        %2783 = vmatpush1.msra.mxu0 %v2782
        %2784 = vmatprep.subr.mxu0 0.0
        %v2785 = vand.u32 %v1982, 4294901760
        %2786 = vmatpush1.msra.mxu0 %v2785
        %2787 = vmatprep.subr.mxu0 0.0
        %v2788 = vand.u32 %v1981, 4294901760
        %2789 = vmatpush1.msra.mxu0 %v2788
        %2790 = vmatprep.subr.mxu0 0.0
        %v2791 = vand.u32 %v1980, 4294901760
        %2792 = vmatpush1.msra.mxu0 %v2791
        %2793 = vmatprep.subr.mxu0 0.0
        %v2794 = vand.u32 %v1979, 4294901760
        %2795 = vmatpush1.msra.mxu0 %v2794
        %2796 = vmatprep.subr.mxu0 0.0
        %v2797 = vand.u32 %v1978, 4294901760
        %2798 = vmatpush1.msra.mxu0 %v2797
        %2799 = vmatprep.subr.mxu0 0.0
        %v2800 = vand.u32 %v1977, 4294901760
        %2801 = vmatpush1.msra.mxu0 %v2800
        %2802 = vmatprep.subr.mxu0 0.0
        %v2803 = vand.u32 %v1976, 4294901760
        %2804 = vmatpush1.msra.mxu0 %v2803
        %2805 = vmatprep.subr.mxu0 0.0
        %v2806 = vand.u32 %v1975, 4294901760
        %2807 = vmatpush1.msra.mxu0 %v2806
        %2808 = vmatprep.subr.mxu0 0.0
        %v2809 = vand.u32 %v1974, 4294901760
        %2810 = vmatpush1.msra.mxu0 %v2809
        %2811 = vmatprep.subr.mxu0 0.0
        %v2812 = vand.u32 %v1973, 4294901760
        %2813 = vmatpush1.msra.mxu0 %v2812
        %2814 = vmatprep.subr.mxu0 0.0
        %v2815 = vand.u32 %v2004, 4294901760
        %2816 = vmatpush2.msra.mxu0 %v2815
        %2817 = vmatprep.subr.mxu0 0.0
        %v2818 = vand.u32 %v2003, 4294901760
        %2819 = vmatpush2.msra.mxu0 %v2818
        %2820 = vmatprep.subr.mxu0 0.0
        %v2821 = vand.u32 %v2002, 4294901760
        %2822 = vmatpush2.msra.mxu0 %v2821
        %2823 = vmatprep.subr.mxu0 0.0
        %v2824 = vand.u32 %v2001, 4294901760
        %2825 = vmatpush2.msra.mxu0 %v2824
        %2826 = vmatprep.subr.mxu0 0.0
        %v2827 = vand.u32 %v2000, 4294901760
        %2828 = vmatpush2.msra.mxu0 %v2827
        %2829 = vmatprep.subr.mxu0 0.0
        %v2830 = vand.u32 %v1999, 4294901760
        %2831 = vmatpush2.msra.mxu0 %v2830
        %2832 = vmatprep.subr.mxu0 0.0
        %v2833 = vand.u32 %v1998, 4294901760
        %2834 = vmatpush2.msra.mxu0 %v2833
        %2835 = vmatprep.subr.mxu0 0.0
        %v2836 = vand.u32 %v1997, 4294901760
        %2837 = vmatpush2.msra.mxu0 %v2836
        %2838 = vmatprep.subr.mxu0 0.0
        %v2839 = vand.u32 %v1996, 4294901760
        %2840 = vmatpush2.msra.mxu0 %v2839
        %2841 = vmatprep.subr.mxu0 0.0
        %v2842 = vand.u32 %v1995, 4294901760
        %2843 = vmatpush2.msra.mxu0 %v2842
        %2844 = vmatprep.subr.mxu0 0.0
        %v2845 = vand.u32 %v1994, 4294901760
        %2846 = vmatpush2.msra.mxu0 %v2845
        %2847 = vmatprep.subr.mxu0 0.0
        %v2848 = vand.u32 %v1993, 4294901760
        %2849 = vmatpush2.msra.mxu0 %v2848
        %2850 = vmatprep.subr.mxu0 0.0
        %v2851 = vand.u32 %v1992, 4294901760
        %2852 = vmatpush2.msra.mxu0 %v2851
        %2853 = vmatprep.subr.mxu0 0.0
        %v2854 = vand.u32 %v1991, 4294901760
        %2855 = vmatpush2.msra.mxu0 %v2854
        %2856 = vmatprep.subr.mxu0 0.0
        %v2857 = vand.u32 %v1990, 4294901760
        %2858 = vmatpush2.msra.mxu0 %v2857
        %2859 = vmatprep.subr.mxu0 0.0
        %v2860 = vand.u32 %v1989, 4294901760
        %2861 = vmatpush2.msra.mxu0 %v2860
        %v2862 = vand.u32 %v2006, 4294901760
        %2863 = vmatprep.mubr.f32.mxu0 %v2862
        %v2864 = vand.u32 %v1971, 4294901760
        %2865 = vmatmul.mubr.f32.gmra.mxu0 %v2864
        %v2866 = vpop.f32.mrf.mxu0
        %v2867 = vadd.f32 %v2763, %v2866
        %v2868 = vpop.f32.mrf.mxu0
        %2869 = vdwg.mxu0
        %s2870 = scalar_lea.vmem %s160, 8 [#allocation2]
        %2871 = vst.msk [vmem:[%s2870] sm:$0xf] %vm1068, %v2867
        %v2872 = vld [vmem:[%s169] sm:$0xff]
        %s2873 = scalar_lea.vmem %s1, 768
        %v2874 = vld [vmem:[%s2873] sm:$0xff]
        %v2875 = vld [vmem:[%s2873 + $0x8] sm:$0xff]
        %v2876 = vld [vmem:[%s2873 + $0x10] sm:$0xff]
        %v2877 = vld [vmem:[%s2873 + $0x18] sm:$0xff]
        %v2878 = vld [vmem:[%s2873 + $0x20] sm:$0xff]
        %v2879 = vld [vmem:[%s2873 + $0x28] sm:$0xff]
        %v2880 = vld [vmem:[%s2873 + $0x30] sm:$0xff]
        %v2881 = vld [vmem:[%s2873 + $0x38] sm:$0xff]
        %v2882 = vld [vmem:[%s2873 + $0x40] sm:$0xff]
        %v2883 = vld [vmem:[%s2873 + $0x48] sm:$0xff]
        %v2884 = vld [vmem:[%s2873 + $0x50] sm:$0xff]
        %v2885 = vld [vmem:[%s2873 + $0x58] sm:$0xff]
        %v2886 = vld [vmem:[%s2873 + $0x60] sm:$0xff]
        %v2887 = vld [vmem:[%s2873 + $0x68] sm:$0xff]
        %v2888 = vld [vmem:[%s2873 + $0x70] sm:$0xff]
        %v2889 = vld [vmem:[%s2873 + $0x78] sm:$0xff]
        %v2890 = vld [vmem:[%s2873 + $0x80] sm:$0xff]
        %v2891 = vld [vmem:[%s2873 + $0x88] sm:$0xff]
        %v2892 = vld [vmem:[%s2873 + $0x90] sm:$0xff]
        %v2893 = vld [vmem:[%s2873 + $0x98] sm:$0xff]
        %v2894 = vld [vmem:[%s2873 + $0xa0] sm:$0xff]
        %v2895 = vld [vmem:[%s2873 + $0xa8] sm:$0xff]
        %v2896 = vld [vmem:[%s2873 + $0xb0] sm:$0xff]
        %v2897 = vld [vmem:[%s2873 + $0xb8] sm:$0xff]
        %v2898 = vld [vmem:[%s2873 + $0xc0] sm:$0xff]
        %v2899 = vld [vmem:[%s2873 + $0xc8] sm:$0xff]
        %v2900 = vld [vmem:[%s2873 + $0xd0] sm:$0xff]
        %v2901 = vld [vmem:[%s2873 + $0xd8] sm:$0xff]
        %v2902 = vld [vmem:[%s2873 + $0xe0] sm:$0xff]
        %v2903 = vld [vmem:[%s2873 + $0xe8] sm:$0xff]
        %v2904 = vld [vmem:[%s2873 + $0xf0] sm:$0xff]
        %v2905 = vld [vmem:[%s2873 + $0xf8] sm:$0xff]
        %v2907 = vcombine.high %v2872, %v2872
        %2909 = vmatprep.subr.mxu0 0.0
        %v2910 = vand.u32 %v2889, 4294901760
        %2911 = vmatpush1.msra.mxu0 %v2910
        %2912 = vmatprep.subr.mxu0 0.0
        %v2913 = vand.u32 %v2888, 4294901760
        %2914 = vmatpush1.msra.mxu0 %v2913
        %2915 = vmatprep.subr.mxu0 0.0
        %v2916 = vand.u32 %v2887, 4294901760
        %2917 = vmatpush1.msra.mxu0 %v2916
        %2918 = vmatprep.subr.mxu0 0.0
        %v2919 = vand.u32 %v2886, 4294901760
        %2920 = vmatpush1.msra.mxu0 %v2919
        %2921 = vmatprep.subr.mxu0 0.0
        %v2922 = vand.u32 %v2885, 4294901760
        %2923 = vmatpush1.msra.mxu0 %v2922
        %2924 = vmatprep.subr.mxu0 0.0
        %v2925 = vand.u32 %v2884, 4294901760
        %2926 = vmatpush1.msra.mxu0 %v2925
        %2927 = vmatprep.subr.mxu0 0.0
        %v2928 = vand.u32 %v2883, 4294901760
        %2929 = vmatpush1.msra.mxu0 %v2928
        %2930 = vmatprep.subr.mxu0 0.0
        %v2931 = vand.u32 %v2882, 4294901760
        %2932 = vmatpush1.msra.mxu0 %v2931
        %2933 = vmatprep.subr.mxu0 0.0
        %v2934 = vand.u32 %v2881, 4294901760
        %2935 = vmatpush1.msra.mxu0 %v2934
        %2936 = vmatprep.subr.mxu0 0.0
        %v2937 = vand.u32 %v2880, 4294901760
        %2938 = vmatpush1.msra.mxu0 %v2937
        %2939 = vmatprep.subr.mxu0 0.0
        %v2940 = vand.u32 %v2879, 4294901760
        %2941 = vmatpush1.msra.mxu0 %v2940
        %2942 = vmatprep.subr.mxu0 0.0
        %v2943 = vand.u32 %v2878, 4294901760
        %2944 = vmatpush1.msra.mxu0 %v2943
        %2945 = vmatprep.subr.mxu0 0.0
        %v2946 = vand.u32 %v2877, 4294901760
        %2947 = vmatpush1.msra.mxu0 %v2946
        %2948 = vmatprep.subr.mxu0 0.0
        %v2949 = vand.u32 %v2876, 4294901760
        %2950 = vmatpush1.msra.mxu0 %v2949
        %2951 = vmatprep.subr.mxu0 0.0
        %v2952 = vand.u32 %v2875, 4294901760
        %2953 = vmatpush1.msra.mxu0 %v2952
        %2954 = vmatprep.subr.mxu0 0.0
        %v2955 = vand.u32 %v2874, 4294901760
        %2956 = vmatpush1.msra.mxu0 %v2955
        %2957 = vmatprep.subr.mxu0 0.0
        %v2958 = vand.u32 %v2905, 4294901760
        %2959 = vmatpush2.msra.mxu0 %v2958
        %2960 = vmatprep.subr.mxu0 0.0
        %v2961 = vand.u32 %v2904, 4294901760
        %2962 = vmatpush2.msra.mxu0 %v2961
        %2963 = vmatprep.subr.mxu0 0.0
        %v2964 = vand.u32 %v2903, 4294901760
        %2965 = vmatpush2.msra.mxu0 %v2964
        %2966 = vmatprep.subr.mxu0 0.0
        %v2967 = vand.u32 %v2902, 4294901760
        %2968 = vmatpush2.msra.mxu0 %v2967
        %2969 = vmatprep.subr.mxu0 0.0
        %v2970 = vand.u32 %v2901, 4294901760
        %2971 = vmatpush2.msra.mxu0 %v2970
        %2972 = vmatprep.subr.mxu0 0.0
        %v2973 = vand.u32 %v2900, 4294901760
        %2974 = vmatpush2.msra.mxu0 %v2973
        %2975 = vmatprep.subr.mxu0 0.0
        %v2976 = vand.u32 %v2899, 4294901760
        %2977 = vmatpush2.msra.mxu0 %v2976
        %2978 = vmatprep.subr.mxu0 0.0
        %v2979 = vand.u32 %v2898, 4294901760
        %2980 = vmatpush2.msra.mxu0 %v2979
        %2981 = vmatprep.subr.mxu0 0.0
        %v2982 = vand.u32 %v2897, 4294901760
        %2983 = vmatpush2.msra.mxu0 %v2982
        %2984 = vmatprep.subr.mxu0 0.0
        %v2985 = vand.u32 %v2896, 4294901760
        %2986 = vmatpush2.msra.mxu0 %v2985
        %2987 = vmatprep.subr.mxu0 0.0
        %v2988 = vand.u32 %v2895, 4294901760
        %2989 = vmatpush2.msra.mxu0 %v2988
        %2990 = vmatprep.subr.mxu0 0.0
        %v2991 = vand.u32 %v2894, 4294901760
        %2992 = vmatpush2.msra.mxu0 %v2991
        %2993 = vmatprep.subr.mxu0 0.0
        %v2994 = vand.u32 %v2893, 4294901760
        %2995 = vmatpush2.msra.mxu0 %v2994
        %2996 = vmatprep.subr.mxu0 0.0
        %v2997 = vand.u32 %v2892, 4294901760
        %2998 = vmatpush2.msra.mxu0 %v2997
        %2999 = vmatprep.subr.mxu0 0.0
        %v3000 = vand.u32 %v2891, 4294901760
        %3001 = vmatpush2.msra.mxu0 %v3000
        %3002 = vmatprep.subr.mxu0 0.0
        %v3003 = vand.u32 %v2890, 4294901760
        %3004 = vmatpush2.msra.mxu0 %v3003
        %v3005 = vand.u32 %v2907, 4294901760
        %v3006 = vsub.f32 %v2907, %v3005
        %v3007 = vand.u32 %v3006, 4294901760
        %v3008 = vsub.f32 %v3006, %v3007
        %v3009 = vand.u32 %v3008, 4294901760
        %3010 = vmatprep.mubr.f32.mxu0 %v3009
        %v3011 = vand.u32 %v2872, 4294901760
        %v3012 = vsub.f32 %v2872, %v3011
        %v3013 = vand.u32 %v3012, 4294901760
        %v3014 = vsub.f32 %v3012, %v3013
        %v3015 = vand.u32 %v3014, 4294901760
        %3016 = vmatmul.mubr.f32.gmra.mxu0 %v3015
        %v3017 = vpop.f32.mrf.mxu0
        %v3018 = vadd.f32 0.0, %v3017
        %v3019 = vpop.f32.mrf.mxu0
        %3020 = vdwg.mxu0
        %3021 = vmatprep.subr.mxu0 0.0
        %v3022 = vand.u32 %v2889, 4294901760
        %v3023 = vsub.f32 %v2889, %v3022
        %v3024 = vand.u32 %v3023, 4294901760
        %v3025 = vsub.f32 %v3023, %v3024
        %v3026 = vand.u32 %v3025, 4294901760
        %3027 = vmatpush1.msra.mxu0 %v3026
        %3028 = vmatprep.subr.mxu0 0.0
        %v3029 = vand.u32 %v2888, 4294901760
        %v3030 = vsub.f32 %v2888, %v3029
        %v3031 = vand.u32 %v3030, 4294901760
        %v3032 = vsub.f32 %v3030, %v3031
        %v3033 = vand.u32 %v3032, 4294901760
        %3034 = vmatpush1.msra.mxu0 %v3033
        %3035 = vmatprep.subr.mxu0 0.0
        %v3036 = vand.u32 %v2887, 4294901760
        %v3037 = vsub.f32 %v2887, %v3036
        %v3038 = vand.u32 %v3037, 4294901760
        %v3039 = vsub.f32 %v3037, %v3038
        %v3040 = vand.u32 %v3039, 4294901760
        %3041 = vmatpush1.msra.mxu0 %v3040
        %3042 = vmatprep.subr.mxu0 0.0
        %v3043 = vand.u32 %v2886, 4294901760
        %v3044 = vsub.f32 %v2886, %v3043
        %v3045 = vand.u32 %v3044, 4294901760
        %v3046 = vsub.f32 %v3044, %v3045
        %v3047 = vand.u32 %v3046, 4294901760
        %3048 = vmatpush1.msra.mxu0 %v3047
        %3049 = vmatprep.subr.mxu0 0.0
        %v3050 = vand.u32 %v2885, 4294901760
        %v3051 = vsub.f32 %v2885, %v3050
        %v3052 = vand.u32 %v3051, 4294901760
        %v3053 = vsub.f32 %v3051, %v3052
        %v3054 = vand.u32 %v3053, 4294901760
        %3055 = vmatpush1.msra.mxu0 %v3054
        %3056 = vmatprep.subr.mxu0 0.0
        %v3057 = vand.u32 %v2884, 4294901760
        %v3058 = vsub.f32 %v2884, %v3057
        %v3059 = vand.u32 %v3058, 4294901760
        %v3060 = vsub.f32 %v3058, %v3059
        %v3061 = vand.u32 %v3060, 4294901760
        %3062 = vmatpush1.msra.mxu0 %v3061
        %3063 = vmatprep.subr.mxu0 0.0
        %v3064 = vand.u32 %v2883, 4294901760
        %v3065 = vsub.f32 %v2883, %v3064
        %v3066 = vand.u32 %v3065, 4294901760
        %v3067 = vsub.f32 %v3065, %v3066
        %v3068 = vand.u32 %v3067, 4294901760
        %3069 = vmatpush1.msra.mxu0 %v3068
        %3070 = vmatprep.subr.mxu0 0.0
        %v3071 = vand.u32 %v2882, 4294901760
        %v3072 = vsub.f32 %v2882, %v3071
        %v3073 = vand.u32 %v3072, 4294901760
        %v3074 = vsub.f32 %v3072, %v3073
        %v3075 = vand.u32 %v3074, 4294901760
        %3076 = vmatpush1.msra.mxu0 %v3075
        %3077 = vmatprep.subr.mxu0 0.0
        %v3078 = vand.u32 %v2881, 4294901760
        %v3079 = vsub.f32 %v2881, %v3078
        %v3080 = vand.u32 %v3079, 4294901760
        %v3081 = vsub.f32 %v3079, %v3080
        %v3082 = vand.u32 %v3081, 4294901760
        %3083 = vmatpush1.msra.mxu0 %v3082
        %3084 = vmatprep.subr.mxu0 0.0
        %v3085 = vand.u32 %v2880, 4294901760
        %v3086 = vsub.f32 %v2880, %v3085
        %v3087 = vand.u32 %v3086, 4294901760
        %v3088 = vsub.f32 %v3086, %v3087
        %v3089 = vand.u32 %v3088, 4294901760
        %3090 = vmatpush1.msra.mxu0 %v3089
        %3091 = vmatprep.subr.mxu0 0.0
        %v3092 = vand.u32 %v2879, 4294901760
        %v3093 = vsub.f32 %v2879, %v3092
        %v3094 = vand.u32 %v3093, 4294901760
        %v3095 = vsub.f32 %v3093, %v3094
        %v3096 = vand.u32 %v3095, 4294901760
        %3097 = vmatpush1.msra.mxu0 %v3096
        %3098 = vmatprep.subr.mxu0 0.0
        %v3099 = vand.u32 %v2878, 4294901760
        %v3100 = vsub.f32 %v2878, %v3099
        %v3101 = vand.u32 %v3100, 4294901760
        %v3102 = vsub.f32 %v3100, %v3101
        %v3103 = vand.u32 %v3102, 4294901760
        %3104 = vmatpush1.msra.mxu0 %v3103
        %3105 = vmatprep.subr.mxu0 0.0
        %v3106 = vand.u32 %v2877, 4294901760
        %v3107 = vsub.f32 %v2877, %v3106
        %v3108 = vand.u32 %v3107, 4294901760
        %v3109 = vsub.f32 %v3107, %v3108
        %v3110 = vand.u32 %v3109, 4294901760
        %3111 = vmatpush1.msra.mxu0 %v3110
        %3112 = vmatprep.subr.mxu0 0.0
        %v3113 = vand.u32 %v2876, 4294901760
        %v3114 = vsub.f32 %v2876, %v3113
        %v3115 = vand.u32 %v3114, 4294901760
        %v3116 = vsub.f32 %v3114, %v3115
        %v3117 = vand.u32 %v3116, 4294901760
        %3118 = vmatpush1.msra.mxu0 %v3117
        %3119 = vmatprep.subr.mxu0 0.0
        %v3120 = vand.u32 %v2875, 4294901760
        %v3121 = vsub.f32 %v2875, %v3120
        %v3122 = vand.u32 %v3121, 4294901760
        %v3123 = vsub.f32 %v3121, %v3122
        %v3124 = vand.u32 %v3123, 4294901760
        %3125 = vmatpush1.msra.mxu0 %v3124
        %3126 = vmatprep.subr.mxu0 0.0
        %v3127 = vand.u32 %v2874, 4294901760
        %v3128 = vsub.f32 %v2874, %v3127
        %v3129 = vand.u32 %v3128, 4294901760
        %v3130 = vsub.f32 %v3128, %v3129
        %v3131 = vand.u32 %v3130, 4294901760
        %3132 = vmatpush1.msra.mxu0 %v3131
        %3133 = vmatprep.subr.mxu0 0.0
        %v3134 = vand.u32 %v2905, 4294901760
        %v3135 = vsub.f32 %v2905, %v3134
        %v3136 = vand.u32 %v3135, 4294901760
        %v3137 = vsub.f32 %v3135, %v3136
        %v3138 = vand.u32 %v3137, 4294901760
        %3139 = vmatpush2.msra.mxu0 %v3138
        %3140 = vmatprep.subr.mxu0 0.0
        %v3141 = vand.u32 %v2904, 4294901760
        %v3142 = vsub.f32 %v2904, %v3141
        %v3143 = vand.u32 %v3142, 4294901760
        %v3144 = vsub.f32 %v3142, %v3143
        %v3145 = vand.u32 %v3144, 4294901760
        %3146 = vmatpush2.msra.mxu0 %v3145
        %3147 = vmatprep.subr.mxu0 0.0
        %v3148 = vand.u32 %v2903, 4294901760
        %v3149 = vsub.f32 %v2903, %v3148
        %v3150 = vand.u32 %v3149, 4294901760
        %v3151 = vsub.f32 %v3149, %v3150
        %v3152 = vand.u32 %v3151, 4294901760
        %3153 = vmatpush2.msra.mxu0 %v3152
        %3154 = vmatprep.subr.mxu0 0.0
        %v3155 = vand.u32 %v2902, 4294901760
        %v3156 = vsub.f32 %v2902, %v3155
        %v3157 = vand.u32 %v3156, 4294901760
        %v3158 = vsub.f32 %v3156, %v3157
        %v3159 = vand.u32 %v3158, 4294901760
        %3160 = vmatpush2.msra.mxu0 %v3159
        %3161 = vmatprep.subr.mxu0 0.0
        %v3162 = vand.u32 %v2901, 4294901760
        %v3163 = vsub.f32 %v2901, %v3162
        %v3164 = vand.u32 %v3163, 4294901760
        %v3165 = vsub.f32 %v3163, %v3164
        %v3166 = vand.u32 %v3165, 4294901760
        %3167 = vmatpush2.msra.mxu0 %v3166
        %3168 = vmatprep.subr.mxu0 0.0
        %v3169 = vand.u32 %v2900, 4294901760
        %v3170 = vsub.f32 %v2900, %v3169
        %v3171 = vand.u32 %v3170, 4294901760
        %v3172 = vsub.f32 %v3170, %v3171
        %v3173 = vand.u32 %v3172, 4294901760
        %3174 = vmatpush2.msra.mxu0 %v3173
        %3175 = vmatprep.subr.mxu0 0.0
        %v3176 = vand.u32 %v2899, 4294901760
        %v3177 = vsub.f32 %v2899, %v3176
        %v3178 = vand.u32 %v3177, 4294901760
        %v3179 = vsub.f32 %v3177, %v3178
        %v3180 = vand.u32 %v3179, 4294901760
        %3181 = vmatpush2.msra.mxu0 %v3180
        %3182 = vmatprep.subr.mxu0 0.0
        %v3183 = vand.u32 %v2898, 4294901760
        %v3184 = vsub.f32 %v2898, %v3183
        %v3185 = vand.u32 %v3184, 4294901760
        %v3186 = vsub.f32 %v3184, %v3185
        %v3187 = vand.u32 %v3186, 4294901760
        %3188 = vmatpush2.msra.mxu0 %v3187
        %3189 = vmatprep.subr.mxu0 0.0
        %v3190 = vand.u32 %v2897, 4294901760
        %v3191 = vsub.f32 %v2897, %v3190
        %v3192 = vand.u32 %v3191, 4294901760
        %v3193 = vsub.f32 %v3191, %v3192
        %v3194 = vand.u32 %v3193, 4294901760
        %3195 = vmatpush2.msra.mxu0 %v3194
        %3196 = vmatprep.subr.mxu0 0.0
        %v3197 = vand.u32 %v2896, 4294901760
        %v3198 = vsub.f32 %v2896, %v3197
        %v3199 = vand.u32 %v3198, 4294901760
        %v3200 = vsub.f32 %v3198, %v3199
        %v3201 = vand.u32 %v3200, 4294901760
        %3202 = vmatpush2.msra.mxu0 %v3201
        %3203 = vmatprep.subr.mxu0 0.0
        %v3204 = vand.u32 %v2895, 4294901760
        %v3205 = vsub.f32 %v2895, %v3204
        %v3206 = vand.u32 %v3205, 4294901760
        %v3207 = vsub.f32 %v3205, %v3206
        %v3208 = vand.u32 %v3207, 4294901760
        %3209 = vmatpush2.msra.mxu0 %v3208
        %3210 = vmatprep.subr.mxu0 0.0
        %v3211 = vand.u32 %v2894, 4294901760
        %v3212 = vsub.f32 %v2894, %v3211
        %v3213 = vand.u32 %v3212, 4294901760
        %v3214 = vsub.f32 %v3212, %v3213
        %v3215 = vand.u32 %v3214, 4294901760
        %3216 = vmatpush2.msra.mxu0 %v3215
        %3217 = vmatprep.subr.mxu0 0.0
        %v3218 = vand.u32 %v2893, 4294901760
        %v3219 = vsub.f32 %v2893, %v3218
        %v3220 = vand.u32 %v3219, 4294901760
        %v3221 = vsub.f32 %v3219, %v3220
        %v3222 = vand.u32 %v3221, 4294901760
        %3223 = vmatpush2.msra.mxu0 %v3222
        %3224 = vmatprep.subr.mxu0 0.0
        %v3225 = vand.u32 %v2892, 4294901760
        %v3226 = vsub.f32 %v2892, %v3225
        %v3227 = vand.u32 %v3226, 4294901760
        %v3228 = vsub.f32 %v3226, %v3227
        %v3229 = vand.u32 %v3228, 4294901760
        %3230 = vmatpush2.msra.mxu0 %v3229
        %3231 = vmatprep.subr.mxu0 0.0
        %v3232 = vand.u32 %v2891, 4294901760
        %v3233 = vsub.f32 %v2891, %v3232
        %v3234 = vand.u32 %v3233, 4294901760
        %v3235 = vsub.f32 %v3233, %v3234
        %v3236 = vand.u32 %v3235, 4294901760
        %3237 = vmatpush2.msra.mxu0 %v3236
        %3238 = vmatprep.subr.mxu0 0.0
        %v3239 = vand.u32 %v2890, 4294901760
        %v3240 = vsub.f32 %v2890, %v3239
        %v3241 = vand.u32 %v3240, 4294901760
        %v3242 = vsub.f32 %v3240, %v3241
        %v3243 = vand.u32 %v3242, 4294901760
        %3244 = vmatpush2.msra.mxu0 %v3243
        %v3245 = vand.u32 %v2907, 4294901760
        %3246 = vmatprep.mubr.f32.mxu0 %v3245
        %v3247 = vand.u32 %v2872, 4294901760
        %3248 = vmatmul.mubr.f32.gmra.mxu0 %v3247
        %v3249 = vpop.f32.mrf.mxu0
        %v3250 = vadd.f32 %v3018, %v3249
        %v3251 = vpop.f32.mrf.mxu0
        %3252 = vdwg.mxu0
        %3253 = vmatprep.subr.mxu0 0.0
        %v3254 = vand.u32 %v2889, 4294901760
        %v3255 = vsub.f32 %v2889, %v3254
        %3256 = vmatpush1.msra.mxu0 %v3255
        %3257 = vmatprep.subr.mxu0 0.0
        %v3258 = vand.u32 %v2888, 4294901760
        %v3259 = vsub.f32 %v2888, %v3258
        %3260 = vmatpush1.msra.mxu0 %v3259
        %3261 = vmatprep.subr.mxu0 0.0
        %v3262 = vand.u32 %v2887, 4294901760
        %v3263 = vsub.f32 %v2887, %v3262
        %3264 = vmatpush1.msra.mxu0 %v3263
        %3265 = vmatprep.subr.mxu0 0.0
        %v3266 = vand.u32 %v2886, 4294901760
        %v3267 = vsub.f32 %v2886, %v3266
        %3268 = vmatpush1.msra.mxu0 %v3267
        %3269 = vmatprep.subr.mxu0 0.0
        %v3270 = vand.u32 %v2885, 4294901760
        %v3271 = vsub.f32 %v2885, %v3270
        %3272 = vmatpush1.msra.mxu0 %v3271
        %3273 = vmatprep.subr.mxu0 0.0
        %v3274 = vand.u32 %v2884, 4294901760
        %v3275 = vsub.f32 %v2884, %v3274
        %3276 = vmatpush1.msra.mxu0 %v3275
        %3277 = vmatprep.subr.mxu0 0.0
        %v3278 = vand.u32 %v2883, 4294901760
        %v3279 = vsub.f32 %v2883, %v3278
        %3280 = vmatpush1.msra.mxu0 %v3279
        %3281 = vmatprep.subr.mxu0 0.0
        %v3282 = vand.u32 %v2882, 4294901760
        %v3283 = vsub.f32 %v2882, %v3282
        %3284 = vmatpush1.msra.mxu0 %v3283
        %3285 = vmatprep.subr.mxu0 0.0
        %v3286 = vand.u32 %v2881, 4294901760
        %v3287 = vsub.f32 %v2881, %v3286
        %3288 = vmatpush1.msra.mxu0 %v3287
        %3289 = vmatprep.subr.mxu0 0.0
        %v3290 = vand.u32 %v2880, 4294901760
        %v3291 = vsub.f32 %v2880, %v3290
        %3292 = vmatpush1.msra.mxu0 %v3291
        %3293 = vmatprep.subr.mxu0 0.0
        %v3294 = vand.u32 %v2879, 4294901760
        %v3295 = vsub.f32 %v2879, %v3294
        %3296 = vmatpush1.msra.mxu0 %v3295
        %3297 = vmatprep.subr.mxu0 0.0
        %v3298 = vand.u32 %v2878, 4294901760
        %v3299 = vsub.f32 %v2878, %v3298
        %3300 = vmatpush1.msra.mxu0 %v3299
        %3301 = vmatprep.subr.mxu0 0.0
        %v3302 = vand.u32 %v2877, 4294901760
        %v3303 = vsub.f32 %v2877, %v3302
        %3304 = vmatpush1.msra.mxu0 %v3303
        %3305 = vmatprep.subr.mxu0 0.0
        %v3306 = vand.u32 %v2876, 4294901760
        %v3307 = vsub.f32 %v2876, %v3306
        %3308 = vmatpush1.msra.mxu0 %v3307
        %3309 = vmatprep.subr.mxu0 0.0
        %v3310 = vand.u32 %v2875, 4294901760
        %v3311 = vsub.f32 %v2875, %v3310
        %3312 = vmatpush1.msra.mxu0 %v3311
        %3313 = vmatprep.subr.mxu0 0.0
        %v3314 = vand.u32 %v2874, 4294901760
        %v3315 = vsub.f32 %v2874, %v3314
        %3316 = vmatpush1.msra.mxu0 %v3315
        %3317 = vmatprep.subr.mxu0 0.0
        %v3318 = vand.u32 %v2905, 4294901760
        %v3319 = vsub.f32 %v2905, %v3318
        %3320 = vmatpush2.msra.mxu0 %v3319
        %3321 = vmatprep.subr.mxu0 0.0
        %v3322 = vand.u32 %v2904, 4294901760
        %v3323 = vsub.f32 %v2904, %v3322
        %3324 = vmatpush2.msra.mxu0 %v3323
        %3325 = vmatprep.subr.mxu0 0.0
        %v3326 = vand.u32 %v2903, 4294901760
        %v3327 = vsub.f32 %v2903, %v3326
        %3328 = vmatpush2.msra.mxu0 %v3327
        %3329 = vmatprep.subr.mxu0 0.0
        %v3330 = vand.u32 %v2902, 4294901760
        %v3331 = vsub.f32 %v2902, %v3330
        %3332 = vmatpush2.msra.mxu0 %v3331
        %3333 = vmatprep.subr.mxu0 0.0
        %v3334 = vand.u32 %v2901, 4294901760
        %v3335 = vsub.f32 %v2901, %v3334
        %3336 = vmatpush2.msra.mxu0 %v3335
        %3337 = vmatprep.subr.mxu0 0.0
        %v3338 = vand.u32 %v2900, 4294901760
        %v3339 = vsub.f32 %v2900, %v3338
        %3340 = vmatpush2.msra.mxu0 %v3339
        %3341 = vmatprep.subr.mxu0 0.0
        %v3342 = vand.u32 %v2899, 4294901760
        %v3343 = vsub.f32 %v2899, %v3342
        %3344 = vmatpush2.msra.mxu0 %v3343
        %3345 = vmatprep.subr.mxu0 0.0
        %v3346 = vand.u32 %v2898, 4294901760
        %v3347 = vsub.f32 %v2898, %v3346
        %3348 = vmatpush2.msra.mxu0 %v3347
        %3349 = vmatprep.subr.mxu0 0.0
        %v3350 = vand.u32 %v2897, 4294901760
        %v3351 = vsub.f32 %v2897, %v3350
        %3352 = vmatpush2.msra.mxu0 %v3351
        %3353 = vmatprep.subr.mxu0 0.0
        %v3354 = vand.u32 %v2896, 4294901760
        %v3355 = vsub.f32 %v2896, %v3354
        %3356 = vmatpush2.msra.mxu0 %v3355
        %3357 = vmatprep.subr.mxu0 0.0
        %v3358 = vand.u32 %v2895, 4294901760
        %v3359 = vsub.f32 %v2895, %v3358
        %3360 = vmatpush2.msra.mxu0 %v3359
        %3361 = vmatprep.subr.mxu0 0.0
        %v3362 = vand.u32 %v2894, 4294901760
        %v3363 = vsub.f32 %v2894, %v3362
        %3364 = vmatpush2.msra.mxu0 %v3363
        %3365 = vmatprep.subr.mxu0 0.0
        %v3366 = vand.u32 %v2893, 4294901760
        %v3367 = vsub.f32 %v2893, %v3366
        %3368 = vmatpush2.msra.mxu0 %v3367
        %3369 = vmatprep.subr.mxu0 0.0
        %v3370 = vand.u32 %v2892, 4294901760
        %v3371 = vsub.f32 %v2892, %v3370
        %3372 = vmatpush2.msra.mxu0 %v3371
        %3373 = vmatprep.subr.mxu0 0.0
        %v3374 = vand.u32 %v2891, 4294901760
        %v3375 = vsub.f32 %v2891, %v3374
        %3376 = vmatpush2.msra.mxu0 %v3375
        %3377 = vmatprep.subr.mxu0 0.0
        %v3378 = vand.u32 %v2890, 4294901760
        %v3379 = vsub.f32 %v2890, %v3378
        %3380 = vmatpush2.msra.mxu0 %v3379
        %v3381 = vand.u32 %v2907, 4294901760
        %v3382 = vsub.f32 %v2907, %v3381
        %3383 = vmatprep.mubr.f32.mxu0 %v3382
        %v3384 = vand.u32 %v2872, 4294901760
        %v3385 = vsub.f32 %v2872, %v3384
        %3386 = vmatmul.mubr.f32.gmra.mxu0 %v3385
        %v3387 = vpop.f32.mrf.mxu0
        %v3388 = vadd.f32 %v3250, %v3387
        %v3389 = vpop.f32.mrf.mxu0
        %3390 = vdwg.mxu0
        %3391 = vmatprep.subr.mxu0 0.0
        %v3392 = vand.u32 %v2889, 4294901760
        %3393 = vmatpush1.msra.mxu0 %v3392
        %3394 = vmatprep.subr.mxu0 0.0
        %v3395 = vand.u32 %v2888, 4294901760
        %3396 = vmatpush1.msra.mxu0 %v3395
        %3397 = vmatprep.subr.mxu0 0.0
        %v3398 = vand.u32 %v2887, 4294901760
        %3399 = vmatpush1.msra.mxu0 %v3398
        %3400 = vmatprep.subr.mxu0 0.0
        %v3401 = vand.u32 %v2886, 4294901760
        %3402 = vmatpush1.msra.mxu0 %v3401
        %3403 = vmatprep.subr.mxu0 0.0
        %v3404 = vand.u32 %v2885, 4294901760
        %3405 = vmatpush1.msra.mxu0 %v3404
        %3406 = vmatprep.subr.mxu0 0.0
        %v3407 = vand.u32 %v2884, 4294901760
        %3408 = vmatpush1.msra.mxu0 %v3407
        %3409 = vmatprep.subr.mxu0 0.0
        %v3410 = vand.u32 %v2883, 4294901760
        %3411 = vmatpush1.msra.mxu0 %v3410
        %3412 = vmatprep.subr.mxu0 0.0
        %v3413 = vand.u32 %v2882, 4294901760
        %3414 = vmatpush1.msra.mxu0 %v3413
        %3415 = vmatprep.subr.mxu0 0.0
        %v3416 = vand.u32 %v2881, 4294901760
        %3417 = vmatpush1.msra.mxu0 %v3416
        %3418 = vmatprep.subr.mxu0 0.0
        %v3419 = vand.u32 %v2880, 4294901760
        %3420 = vmatpush1.msra.mxu0 %v3419
        %3421 = vmatprep.subr.mxu0 0.0
        %v3422 = vand.u32 %v2879, 4294901760
        %3423 = vmatpush1.msra.mxu0 %v3422
        %3424 = vmatprep.subr.mxu0 0.0
        %v3425 = vand.u32 %v2878, 4294901760
        %3426 = vmatpush1.msra.mxu0 %v3425
        %3427 = vmatprep.subr.mxu0 0.0
        %v3428 = vand.u32 %v2877, 4294901760
        %3429 = vmatpush1.msra.mxu0 %v3428
        %3430 = vmatprep.subr.mxu0 0.0
        %v3431 = vand.u32 %v2876, 4294901760
        %3432 = vmatpush1.msra.mxu0 %v3431
        %3433 = vmatprep.subr.mxu0 0.0
        %v3434 = vand.u32 %v2875, 4294901760
        %3435 = vmatpush1.msra.mxu0 %v3434
        %3436 = vmatprep.subr.mxu0 0.0
        %v3437 = vand.u32 %v2874, 4294901760
        %3438 = vmatpush1.msra.mxu0 %v3437
        %3439 = vmatprep.subr.mxu0 0.0
        %v3440 = vand.u32 %v2905, 4294901760
        %3441 = vmatpush2.msra.mxu0 %v3440
        %3442 = vmatprep.subr.mxu0 0.0
        %v3443 = vand.u32 %v2904, 4294901760
        %3444 = vmatpush2.msra.mxu0 %v3443
        %3445 = vmatprep.subr.mxu0 0.0
        %v3446 = vand.u32 %v2903, 4294901760
        %3447 = vmatpush2.msra.mxu0 %v3446
        %3448 = vmatprep.subr.mxu0 0.0
        %v3449 = vand.u32 %v2902, 4294901760
        %3450 = vmatpush2.msra.mxu0 %v3449
        %3451 = vmatprep.subr.mxu0 0.0
        %v3452 = vand.u32 %v2901, 4294901760
        %3453 = vmatpush2.msra.mxu0 %v3452
        %3454 = vmatprep.subr.mxu0 0.0
        %v3455 = vand.u32 %v2900, 4294901760
        %3456 = vmatpush2.msra.mxu0 %v3455
        %3457 = vmatprep.subr.mxu0 0.0
        %v3458 = vand.u32 %v2899, 4294901760
        %3459 = vmatpush2.msra.mxu0 %v3458
        %3460 = vmatprep.subr.mxu0 0.0
        %v3461 = vand.u32 %v2898, 4294901760
        %3462 = vmatpush2.msra.mxu0 %v3461
        %3463 = vmatprep.subr.mxu0 0.0
        %v3464 = vand.u32 %v2897, 4294901760
        %3465 = vmatpush2.msra.mxu0 %v3464
        %3466 = vmatprep.subr.mxu0 0.0
        %v3467 = vand.u32 %v2896, 4294901760
        %3468 = vmatpush2.msra.mxu0 %v3467
        %3469 = vmatprep.subr.mxu0 0.0
        %v3470 = vand.u32 %v2895, 4294901760
        %3471 = vmatpush2.msra.mxu0 %v3470
        %3472 = vmatprep.subr.mxu0 0.0
        %v3473 = vand.u32 %v2894, 4294901760
        %3474 = vmatpush2.msra.mxu0 %v3473
        %3475 = vmatprep.subr.mxu0 0.0
        %v3476 = vand.u32 %v2893, 4294901760
        %3477 = vmatpush2.msra.mxu0 %v3476
        %3478 = vmatprep.subr.mxu0 0.0
        %v3479 = vand.u32 %v2892, 4294901760
        %3480 = vmatpush2.msra.mxu0 %v3479
        %3481 = vmatprep.subr.mxu0 0.0
        %v3482 = vand.u32 %v2891, 4294901760
        %3483 = vmatpush2.msra.mxu0 %v3482
        %3484 = vmatprep.subr.mxu0 0.0
        %v3485 = vand.u32 %v2890, 4294901760
        %3486 = vmatpush2.msra.mxu0 %v3485
        %v3487 = vand.u32 %v2907, 4294901760
        %v3488 = vsub.f32 %v2907, %v3487
        %v3489 = vand.u32 %v3488, 4294901760
        %3490 = vmatprep.mubr.f32.mxu0 %v3489
        %v3491 = vand.u32 %v2872, 4294901760
        %v3492 = vsub.f32 %v2872, %v3491
        %v3493 = vand.u32 %v3492, 4294901760
        %3494 = vmatmul.mubr.f32.gmra.mxu0 %v3493
        %v3495 = vpop.f32.mrf.mxu0
        %v3496 = vadd.f32 %v3388, %v3495
        %v3497 = vpop.f32.mrf.mxu0
        %3498 = vdwg.mxu0
        %3499 = vmatprep.subr.mxu0 0.0
        %v3500 = vand.u32 %v2889, 4294901760
        %v3501 = vsub.f32 %v2889, %v3500
        %v3502 = vand.u32 %v3501, 4294901760
        %3503 = vmatpush1.msra.mxu0 %v3502
        %3504 = vmatprep.subr.mxu0 0.0
        %v3505 = vand.u32 %v2888, 4294901760
        %v3506 = vsub.f32 %v2888, %v3505
        %v3507 = vand.u32 %v3506, 4294901760
        %3508 = vmatpush1.msra.mxu0 %v3507
        %3509 = vmatprep.subr.mxu0 0.0
        %v3510 = vand.u32 %v2887, 4294901760
        %v3511 = vsub.f32 %v2887, %v3510
        %v3512 = vand.u32 %v3511, 4294901760
        %3513 = vmatpush1.msra.mxu0 %v3512
        %3514 = vmatprep.subr.mxu0 0.0
        %v3515 = vand.u32 %v2886, 4294901760
        %v3516 = vsub.f32 %v2886, %v3515
        %v3517 = vand.u32 %v3516, 4294901760
        %3518 = vmatpush1.msra.mxu0 %v3517
        %3519 = vmatprep.subr.mxu0 0.0
        %v3520 = vand.u32 %v2885, 4294901760
        %v3521 = vsub.f32 %v2885, %v3520
        %v3522 = vand.u32 %v3521, 4294901760
        %3523 = vmatpush1.msra.mxu0 %v3522
        %3524 = vmatprep.subr.mxu0 0.0
        %v3525 = vand.u32 %v2884, 4294901760
        %v3526 = vsub.f32 %v2884, %v3525
        %v3527 = vand.u32 %v3526, 4294901760
        %3528 = vmatpush1.msra.mxu0 %v3527
        %3529 = vmatprep.subr.mxu0 0.0
        %v3530 = vand.u32 %v2883, 4294901760
        %v3531 = vsub.f32 %v2883, %v3530
        %v3532 = vand.u32 %v3531, 4294901760
        %3533 = vmatpush1.msra.mxu0 %v3532
        %3534 = vmatprep.subr.mxu0 0.0
        %v3535 = vand.u32 %v2882, 4294901760
        %v3536 = vsub.f32 %v2882, %v3535
        %v3537 = vand.u32 %v3536, 4294901760
        %3538 = vmatpush1.msra.mxu0 %v3537
        %3539 = vmatprep.subr.mxu0 0.0
        %v3540 = vand.u32 %v2881, 4294901760
        %v3541 = vsub.f32 %v2881, %v3540
        %v3542 = vand.u32 %v3541, 4294901760
        %3543 = vmatpush1.msra.mxu0 %v3542
        %3544 = vmatprep.subr.mxu0 0.0
        %v3545 = vand.u32 %v2880, 4294901760
        %v3546 = vsub.f32 %v2880, %v3545
        %v3547 = vand.u32 %v3546, 4294901760
        %3548 = vmatpush1.msra.mxu0 %v3547
        %3549 = vmatprep.subr.mxu0 0.0
        %v3550 = vand.u32 %v2879, 4294901760
        %v3551 = vsub.f32 %v2879, %v3550
        %v3552 = vand.u32 %v3551, 4294901760
        %3553 = vmatpush1.msra.mxu0 %v3552
        %3554 = vmatprep.subr.mxu0 0.0
        %v3555 = vand.u32 %v2878, 4294901760
        %v3556 = vsub.f32 %v2878, %v3555
        %v3557 = vand.u32 %v3556, 4294901760
        %3558 = vmatpush1.msra.mxu0 %v3557
        %3559 = vmatprep.subr.mxu0 0.0
        %v3560 = vand.u32 %v2877, 4294901760
        %v3561 = vsub.f32 %v2877, %v3560
        %v3562 = vand.u32 %v3561, 4294901760
        %3563 = vmatpush1.msra.mxu0 %v3562
        %3564 = vmatprep.subr.mxu0 0.0
        %v3565 = vand.u32 %v2876, 4294901760
        %v3566 = vsub.f32 %v2876, %v3565
        %v3567 = vand.u32 %v3566, 4294901760
        %3568 = vmatpush1.msra.mxu0 %v3567
        %3569 = vmatprep.subr.mxu0 0.0
        %v3570 = vand.u32 %v2875, 4294901760
        %v3571 = vsub.f32 %v2875, %v3570
        %v3572 = vand.u32 %v3571, 4294901760
        %3573 = vmatpush1.msra.mxu0 %v3572
        %3574 = vmatprep.subr.mxu0 0.0
        %v3575 = vand.u32 %v2874, 4294901760
        %v3576 = vsub.f32 %v2874, %v3575
        %v3577 = vand.u32 %v3576, 4294901760
        %3578 = vmatpush1.msra.mxu0 %v3577
        %3579 = vmatprep.subr.mxu0 0.0
        %v3580 = vand.u32 %v2905, 4294901760
        %v3581 = vsub.f32 %v2905, %v3580
        %v3582 = vand.u32 %v3581, 4294901760
        %3583 = vmatpush2.msra.mxu0 %v3582
        %3584 = vmatprep.subr.mxu0 0.0
        %v3585 = vand.u32 %v2904, 4294901760
        %v3586 = vsub.f32 %v2904, %v3585
        %v3587 = vand.u32 %v3586, 4294901760
        %3588 = vmatpush2.msra.mxu0 %v3587
        %3589 = vmatprep.subr.mxu0 0.0
        %v3590 = vand.u32 %v2903, 4294901760
        %v3591 = vsub.f32 %v2903, %v3590
        %v3592 = vand.u32 %v3591, 4294901760
        %3593 = vmatpush2.msra.mxu0 %v3592
        %3594 = vmatprep.subr.mxu0 0.0
        %v3595 = vand.u32 %v2902, 4294901760
        %v3596 = vsub.f32 %v2902, %v3595
        %v3597 = vand.u32 %v3596, 4294901760
        %3598 = vmatpush2.msra.mxu0 %v3597
        %3599 = vmatprep.subr.mxu0 0.0
        %v3600 = vand.u32 %v2901, 4294901760
        %v3601 = vsub.f32 %v2901, %v3600
        %v3602 = vand.u32 %v3601, 4294901760
        %3603 = vmatpush2.msra.mxu0 %v3602
        %3604 = vmatprep.subr.mxu0 0.0
        %v3605 = vand.u32 %v2900, 4294901760
        %v3606 = vsub.f32 %v2900, %v3605
        %v3607 = vand.u32 %v3606, 4294901760
        %3608 = vmatpush2.msra.mxu0 %v3607
        %3609 = vmatprep.subr.mxu0 0.0
        %v3610 = vand.u32 %v2899, 4294901760
        %v3611 = vsub.f32 %v2899, %v3610
        %v3612 = vand.u32 %v3611, 4294901760
        %3613 = vmatpush2.msra.mxu0 %v3612
        %3614 = vmatprep.subr.mxu0 0.0
        %v3615 = vand.u32 %v2898, 4294901760
        %v3616 = vsub.f32 %v2898, %v3615
        %v3617 = vand.u32 %v3616, 4294901760
        %3618 = vmatpush2.msra.mxu0 %v3617
        %3619 = vmatprep.subr.mxu0 0.0
        %v3620 = vand.u32 %v2897, 4294901760
        %v3621 = vsub.f32 %v2897, %v3620
        %v3622 = vand.u32 %v3621, 4294901760
        %3623 = vmatpush2.msra.mxu0 %v3622
        %3624 = vmatprep.subr.mxu0 0.0
        %v3625 = vand.u32 %v2896, 4294901760
        %v3626 = vsub.f32 %v2896, %v3625
        %v3627 = vand.u32 %v3626, 4294901760
        %3628 = vmatpush2.msra.mxu0 %v3627
        %3629 = vmatprep.subr.mxu0 0.0
        %v3630 = vand.u32 %v2895, 4294901760
        %v3631 = vsub.f32 %v2895, %v3630
        %v3632 = vand.u32 %v3631, 4294901760
        %3633 = vmatpush2.msra.mxu0 %v3632
        %3634 = vmatprep.subr.mxu0 0.0
        %v3635 = vand.u32 %v2894, 4294901760
        %v3636 = vsub.f32 %v2894, %v3635
        %v3637 = vand.u32 %v3636, 4294901760
        %3638 = vmatpush2.msra.mxu0 %v3637
        %3639 = vmatprep.subr.mxu0 0.0
        %v3640 = vand.u32 %v2893, 4294901760
        %v3641 = vsub.f32 %v2893, %v3640
        %v3642 = vand.u32 %v3641, 4294901760
        %3643 = vmatpush2.msra.mxu0 %v3642
        %3644 = vmatprep.subr.mxu0 0.0
        %v3645 = vand.u32 %v2892, 4294901760
        %v3646 = vsub.f32 %v2892, %v3645
        %v3647 = vand.u32 %v3646, 4294901760
        %3648 = vmatpush2.msra.mxu0 %v3647
        %3649 = vmatprep.subr.mxu0 0.0
        %v3650 = vand.u32 %v2891, 4294901760
        %v3651 = vsub.f32 %v2891, %v3650
        %v3652 = vand.u32 %v3651, 4294901760
        %3653 = vmatpush2.msra.mxu0 %v3652
        %3654 = vmatprep.subr.mxu0 0.0
        %v3655 = vand.u32 %v2890, 4294901760
        %v3656 = vsub.f32 %v2890, %v3655
        %v3657 = vand.u32 %v3656, 4294901760
        %3658 = vmatpush2.msra.mxu0 %v3657
        %v3659 = vand.u32 %v2907, 4294901760
        %3660 = vmatprep.mubr.f32.mxu0 %v3659
        %v3661 = vand.u32 %v2872, 4294901760
        %3662 = vmatmul.mubr.f32.gmra.mxu0 %v3661
        %v3663 = vpop.f32.mrf.mxu0
        %v3664 = vadd.f32 %v3496, %v3663
        %v3665 = vpop.f32.mrf.mxu0
        %3666 = vdwg.mxu0
        %3667 = vmatprep.subr.mxu0 0.0
        %v3668 = vand.u32 %v2889, 4294901760
        %3669 = vmatpush1.msra.mxu0 %v3668
        %3670 = vmatprep.subr.mxu0 0.0
        %v3671 = vand.u32 %v2888, 4294901760
        %3672 = vmatpush1.msra.mxu0 %v3671
        %3673 = vmatprep.subr.mxu0 0.0
        %v3674 = vand.u32 %v2887, 4294901760
        %3675 = vmatpush1.msra.mxu0 %v3674
        %3676 = vmatprep.subr.mxu0 0.0
        %v3677 = vand.u32 %v2886, 4294901760
        %3678 = vmatpush1.msra.mxu0 %v3677
        %3679 = vmatprep.subr.mxu0 0.0
        %v3680 = vand.u32 %v2885, 4294901760
        %3681 = vmatpush1.msra.mxu0 %v3680
        %3682 = vmatprep.subr.mxu0 0.0
        %v3683 = vand.u32 %v2884, 4294901760
        %3684 = vmatpush1.msra.mxu0 %v3683
        %3685 = vmatprep.subr.mxu0 0.0
        %v3686 = vand.u32 %v2883, 4294901760
        %3687 = vmatpush1.msra.mxu0 %v3686
        %3688 = vmatprep.subr.mxu0 0.0
        %v3689 = vand.u32 %v2882, 4294901760
        %3690 = vmatpush1.msra.mxu0 %v3689
        %3691 = vmatprep.subr.mxu0 0.0
        %v3692 = vand.u32 %v2881, 4294901760
        %3693 = vmatpush1.msra.mxu0 %v3692
        %3694 = vmatprep.subr.mxu0 0.0
        %v3695 = vand.u32 %v2880, 4294901760
        %3696 = vmatpush1.msra.mxu0 %v3695
        %3697 = vmatprep.subr.mxu0 0.0
        %v3698 = vand.u32 %v2879, 4294901760
        %3699 = vmatpush1.msra.mxu0 %v3698
        %3700 = vmatprep.subr.mxu0 0.0
        %v3701 = vand.u32 %v2878, 4294901760
        %3702 = vmatpush1.msra.mxu0 %v3701
        %3703 = vmatprep.subr.mxu0 0.0
        %v3704 = vand.u32 %v2877, 4294901760
        %3705 = vmatpush1.msra.mxu0 %v3704
        %3706 = vmatprep.subr.mxu0 0.0
        %v3707 = vand.u32 %v2876, 4294901760
        %3708 = vmatpush1.msra.mxu0 %v3707
        %3709 = vmatprep.subr.mxu0 0.0
        %v3710 = vand.u32 %v2875, 4294901760
        %3711 = vmatpush1.msra.mxu0 %v3710
        %3712 = vmatprep.subr.mxu0 0.0
        %v3713 = vand.u32 %v2874, 4294901760
        %3714 = vmatpush1.msra.mxu0 %v3713
        %3715 = vmatprep.subr.mxu0 0.0
        %v3716 = vand.u32 %v2905, 4294901760
        %3717 = vmatpush2.msra.mxu0 %v3716
        %3718 = vmatprep.subr.mxu0 0.0
        %v3719 = vand.u32 %v2904, 4294901760
        %3720 = vmatpush2.msra.mxu0 %v3719
        %3721 = vmatprep.subr.mxu0 0.0
        %v3722 = vand.u32 %v2903, 4294901760
        %3723 = vmatpush2.msra.mxu0 %v3722
        %3724 = vmatprep.subr.mxu0 0.0
        %v3725 = vand.u32 %v2902, 4294901760
        %3726 = vmatpush2.msra.mxu0 %v3725
        %3727 = vmatprep.subr.mxu0 0.0
        %v3728 = vand.u32 %v2901, 4294901760
        %3729 = vmatpush2.msra.mxu0 %v3728
        %3730 = vmatprep.subr.mxu0 0.0
        %v3731 = vand.u32 %v2900, 4294901760
        %3732 = vmatpush2.msra.mxu0 %v3731
        %3733 = vmatprep.subr.mxu0 0.0
        %v3734 = vand.u32 %v2899, 4294901760
        %3735 = vmatpush2.msra.mxu0 %v3734
        %3736 = vmatprep.subr.mxu0 0.0
        %v3737 = vand.u32 %v2898, 4294901760
        %3738 = vmatpush2.msra.mxu0 %v3737
        %3739 = vmatprep.subr.mxu0 0.0
        %v3740 = vand.u32 %v2897, 4294901760
        %3741 = vmatpush2.msra.mxu0 %v3740
        %3742 = vmatprep.subr.mxu0 0.0
        %v3743 = vand.u32 %v2896, 4294901760
        %3744 = vmatpush2.msra.mxu0 %v3743
        %3745 = vmatprep.subr.mxu0 0.0
        %v3746 = vand.u32 %v2895, 4294901760
        %3747 = vmatpush2.msra.mxu0 %v3746
        %3748 = vmatprep.subr.mxu0 0.0
        %v3749 = vand.u32 %v2894, 4294901760
        %3750 = vmatpush2.msra.mxu0 %v3749
        %3751 = vmatprep.subr.mxu0 0.0
        %v3752 = vand.u32 %v2893, 4294901760
        %3753 = vmatpush2.msra.mxu0 %v3752
        %3754 = vmatprep.subr.mxu0 0.0
        %v3755 = vand.u32 %v2892, 4294901760
        %3756 = vmatpush2.msra.mxu0 %v3755
        %3757 = vmatprep.subr.mxu0 0.0
        %v3758 = vand.u32 %v2891, 4294901760
        %3759 = vmatpush2.msra.mxu0 %v3758
        %3760 = vmatprep.subr.mxu0 0.0
        %v3761 = vand.u32 %v2890, 4294901760
        %3762 = vmatpush2.msra.mxu0 %v3761
        %v3763 = vand.u32 %v2907, 4294901760
        %3764 = vmatprep.mubr.f32.mxu0 %v3763
        %v3765 = vand.u32 %v2872, 4294901760
        %3766 = vmatmul.mubr.f32.gmra.mxu0 %v3765
        %v3767 = vpop.f32.mrf.mxu0
        %v3768 = vadd.f32 %v3664, %v3767
        %v3769 = vpop.f32.mrf.mxu0
        %3770 = vdwg.mxu0
        %s3771 = scalar_lea.vmem %s160, 12 [#allocation2]
        %3772 = vst.msk [vmem:[%s3771] sm:$0xf] %vm1068, %v3768
        %s3773 = sand.u32 %s87, 1
        %s3774 = scalar_lea.sflag [#allocation3], %s3773
        %s3775 = sand.u32 %s87, 1
        %s3776 = smul.addr %s3775, 16
        %s3777 = scalar_lea.vmem [#allocation2], %s3776
        // Predicated region
        $region29: #{tpu_custom_call.1} parent=27 // pred_check
          %p3778 = pneg %p97
        $region30: #{tpu_custom_call.1} parent=27 // pred_check_branch
          %3780 = sbr.rel (%p3778) target = $region32
        $region31: #{tpu_custom_call.1} parent=27 // pred_region
          %s3782 = ssub.s32 256, 256
          %3783 = vsyncadd %s3774, %s3782
          %s3784 = smul.addr %s20, 4
          %s3785 = sadd.s32 %s21, %s3784
          %s3786 = smul.addr %s3785, 64
          %s3787 = scalar_lea.hbm %s2, %s3786
          %s3788 = sshll.u32 %s3777, 4
          %s3789 = int_to_ptr.vmem [resolvable:$true] %s3788
          %3794 = dma.vmem_to_hbm [thread:$0]  %s3789, 256, %s3787, %s3774, 64, 64, 4
        $region32: #{tpu_custom_call.1} parent=27 // pred_fallthru
          _
      $region28: #{tpu_custom_call.1} parent=5 // pred_fallthru
        _
      %p3795 = scmp.le.s32.totalorder 2, %s11
      // Predicated region
      $region33: #{tpu_custom_call.1} parent=5 // pred_check
        %p3796 = pneg %p3795
      $region34: #{tpu_custom_call.1} parent=5 // pred_check_branch
        %3798 = sbr.rel (%p3796) target = $region36
      $region35: #{tpu_custom_call.1} parent=5 // pred_region
        %s3799 = ssub.s32 %s11, 2
        // Predicated region
        $region37: #{tpu_custom_call.1} parent=35 // pred_check
          %p3800 = pneg %p103
        $region38: #{tpu_custom_call.1} parent=35 // pred_check_branch
          %3802 = sbr.rel (%p3800) target = $region40
        $region39: #{tpu_custom_call.1} parent=35 // pred_region
          %s3803 = sand.u32 %s88, 1
          %s3804 = scalar_lea.sflag [#allocation3], %s3803
          %s3805 = sand.u32 %s88, 1
          %s3806 = smul.addr %s3805, 16
          %s3807 = scalar_lea.vmem [#allocation2], %s3806
          %3808 = dma.done %s3804, 256
        $region40: #{tpu_custom_call.1} parent=35 // pred_fallthru
          _
      $region36: #{tpu_custom_call.1} parent=5 // pred_fallthru
        _
    $region6: #{tpu_custom_call.1} parent=1 // loop_footer
      %s15 = sadd.s32 1, %s11
    $region7: #{tpu_custom_call.1} parent=1 // loop_footer_branch
      %10 = sbr.rel target = $region3
    $region8: #{tpu_custom_call.1} parent=1 // loop_exit
      _
    %3809 = vsyncpa [#allocation3], 1
    %s3810 = scalar_lea.sflag [#allocation3], 1
    %3811 = vsyncpa %s3810, 1

</llo_original>
